<compile_context>
chip_gen: v7x
topology: tpu7x:2x2x1
jax: 0.10.0
libtpu: 0.0.40
codegen_flags: <defaults>
</compile_context>

<pallas_src>
import functools

import jax
import jax.numpy as jnp
from jax.experimental import pallas as pl
from jax.experimental.pallas import tpu as pltpu

_EPS = 1e-5
_ALPHA = 0.2
_LANE = 128
_SUB = 8
_ROW_TILE = 512            # conv/matmul row tile (multiple of 256 -> full MXU)
_ROW_TILE_AFFINE = 2048    # phase-2 (pure mem-bound) row tile upper bound
_SINGLE_BUF_W_BYTES = 4 * 1024 * 1024   # single-buffer weight blocks >= 4 MiB


def _round_up(x, m):
    return (x + m - 1) // m * m


@functools.lru_cache(maxsize=None)
def _vmem_limit_bytes():
    """Per-generation VMEM cap: 3/4 of physical, capped at 100 MiB.

    v7x (64 MiB physical) -> 48 MiB; v5e/v6e (128 MiB) -> 96 MiB.
    """
    phys = 128 * 1024 * 1024
    try:
        info = pltpu.get_tpu_info()
        phys = int(getattr(info, "vmem_capacity_bytes", phys) or phys)
    except Exception:
        pass
    return int(min(100 * 1024 * 1024, phys * 3 // 4))


def _compiler_params(semantics):
    return pltpu.CompilerParams(
        dimension_semantics=semantics,
        vmem_limit_bytes=_vmem_limit_bytes(),
    )


def _lrelu(y):
    # LeakyReLU(0.2) as a single maximum (alpha > 0 makes this exact).
    return jnp.maximum(y, _ALPHA * y)


def _weight_spec(K, cout_pad):
    kwargs = {}
    if K * cout_pad * 2 >= _SINGLE_BUF_W_BYTES:
        # Constant index_map -> the weight is DMA'd once; a single buffer
        # halves its resident VMEM for big-K layers (matters on v7x's 64 MiB).
        kwargs["pipeline_mode"] = pl.Buffered(1)
    return pl.BlockSpec((K, cout_pad), lambda i: (0, 0), **kwargs)


# --------------------------------------------------------------------------- #
# Pallas kernels
# --------------------------------------------------------------------------- #
def _matmul_act_kernel(p_ref, w_ref, o_ref, *, use_lrelu):
    """One row tile of conv-as-matmul: (TP,K)bf16 @ (K,Cout_pad)bf16 -> bf16."""
    y = jnp.dot(p_ref[...], w_ref[...], preferred_element_type=jnp.float32)
    if use_lrelu:
        y = _lrelu(y)
    o_ref[...] = y.astype(o_ref.dtype)


def _matmul_stats_kernel(p_ref, w_ref, y_ref, stats_ref):
    """Two-phase BN, phase 1: matmul tile + per-channel sum / sum-of-squares."""
    y = jnp.dot(p_ref[...], w_ref[...], preferred_element_type=jnp.float32)
    y_ref[...] = y.astype(y_ref.dtype)              # bf16 writeback
    # Rows 2..7 of the stats block are never read by the wrapper.
    stats_ref[0:1, :] = jnp.sum(y, axis=0, keepdims=True)
    stats_ref[1:2, :] = jnp.sum(y * y, axis=0, keepdims=True)


def _affine_lrelu_kernel(y_ref, a_ref, b_ref, o_ref):
    """Two-phase BN, phase 2: y*scale + shift then LeakyReLU(0.2), bf16 out."""
    z = y_ref[...].astype(jnp.float32) * a_ref[...] + b_ref[...]
    o_ref[...] = _lrelu(z).astype(o_ref.dtype)


def _fused_conv_bn_lrelu_kernel(p_ref, w_ref, g_ref, b_ref, o_ref,
                                y_scr, acc_scr, *, inv_rows, tp):
    """Fused conv + training-mode BN + LeakyReLU in one pallas_call.

    Grid axis = row tiles ('arbitrary'): y kept in VMEM scratch, channel
    sum/sumsq accumulated across tiles, scale/shift finalized and the
    activation written back once in the last iteration.
    """
    i = pl.program_id(0)

    @pl.when(i == 0)
    def _init():
        acc_scr[...] = jnp.zeros_like(acc_scr)

    y = jnp.dot(p_ref[...], w_ref[...], preferred_element_type=jnp.float32)
    row0 = pl.multiple_of(i * tp, tp)
    y_scr[pl.ds(row0, tp), :] = y
    acc_scr[0:1, :] += jnp.sum(y, axis=0, keepdims=True)
    acc_scr[1:2, :] += jnp.sum(y * y, axis=0, keepdims=True)

    @pl.when(i == pl.num_programs(0) - 1)
    def _finalize():
        mean = acc_scr[0:1, :] * inv_rows
        var = jnp.maximum(acc_scr[1:2, :] * inv_rows - mean * mean, 0.0)
        scale = g_ref[...] * jax.lax.rsqrt(var + _EPS)
        shift = b_ref[...] - mean * scale
        z = y_scr[...] * scale + shift
        o_ref[...] = _lrelu(z).astype(o_ref.dtype)


# --------------------------------------------------------------------------- #
# Glue (plain JAX): NHWC im2col via slicing + concat, column order (kh, kw, C)
# --------------------------------------------------------------------------- #
def _im2col_nhwc(x, kh, kw, stride, pad):
    if pad:
        x = jnp.pad(x, ((0, 0), (pad, pad), (pad, pad), (0, 0)))
    N, H, W, C = x.shape
    Ho = (H - kh) // stride + 1
    Wo = (W - kw) // stride + 1
    cols = []
    for i in range(kh):
        for j in range(kw):
            cols.append(x[:, i:i + stride * Ho:stride, j:j + stride * Wo:stride, :])
    patches = jnp.concatenate(cols, axis=-1)              # (N, Ho, Wo, kh*kw*C)
    return patches.reshape(N * Ho * Wo, kh * kw * C), N, Ho, Wo


def _row_tiling(P):
    if P >= _ROW_TILE:
        TP = _ROW_TILE
    else:
        TP = _round_up(P, 16)       # bf16 packs 2 rows/sublane -> (16,128) tile
    return TP, _round_up(P, TP)


def _affine_row_tile(P_pad):
    for cand in (_ROW_TILE_AFFINE, 1024, _ROW_TILE):
        if P_pad >= cand and P_pad % cand == 0:
            return cand
    return P_pad


def _fused_vmem_bytes(P_pad, TP, K, cout_pad):
    y_scr = P_pad * cout_pad * 4                 # f32 resident y scratch
    out_buf = 2 * P_pad * cout_pad * 2           # bf16 output block (x2 safety)
    patches = 2 * TP * K * 2                     # double-buffered bf16 patches
    weight = 2 * K * cout_pad * 2                # bf16 weight (x2 safety)
    return y_scr + out_buf + patches + weight + _SUB * cout_pad * 4


# --------------------------------------------------------------------------- #
# Layer wrappers
# --------------------------------------------------------------------------- #
def _conv_matmul_pallas(patches, layer, *, use_lrelu):
    w_mat = layer["w_mat"]
    P, K = patches.shape
    cout_pad = layer["cout_pad"]
    TP, P_pad = _row_tiling(P)
    if P_pad != P:
        patches = jnp.pad(patches, ((0, P_pad - P), (0, 0)))
    nt = P_pad // TP
    kernel = functools.partial(_matmul_act_kernel, use_lrelu=use_lrelu)
    return pl.pallas_call(
        kernel,
        out_shape=jax.ShapeDtypeStruct((P_pad, cout_pad), jnp.bfloat16),
        grid=(nt,),
        in_specs=[
            pl.BlockSpec((TP, K), lambda i: (i, 0)),
            _weight_spec(K, cout_pad),
        ],
        out_specs=pl.BlockSpec((TP, cout_pad), lambda i: (i, 0)),
        compiler_params=_compiler_params(("parallel",)),
    )(patches, w_mat)


def _conv_bn_lrelu_pallas(patches, layer):
    w_mat = layer["w_mat"]
    P, K = patches.shape
    cout_pad = layer["cout_pad"]
    TP, P_pad = _row_tiling(P)
    if P_pad != P:
        patches = jnp.pad(patches, ((0, P_pad - P), (0, 0)))
    nt = P_pad // TP
    gamma2d = layer["gamma"].reshape(1, cout_pad)
    beta2d = layer["beta"].reshape(1, cout_pad)

    # Fused single-call path whenever resident y + buffers fit the VMEM budget
    # (always on v5e/v6e at these shapes; v7x falls back for the big layers).
    if _fused_vmem_bytes(P_pad, TP, K, cout_pad) <= (_vmem_limit_bytes() * 3) // 5:
        kernel = functools.partial(
            _fused_conv_bn_lrelu_kernel, inv_rows=1.0 / P, tp=TP)
        return pl.pallas_call(
            kernel,
            out_shape=jax.ShapeDtypeStruct((P_pad, cout_pad), jnp.bfloat16),
            grid=(nt,),
            in_specs=[
                pl.BlockSpec((TP, K), lambda i: (i, 0)),
                _weight_spec(K, cout_pad),
                pl.BlockSpec((1, cout_pad), lambda i: (0, 0)),
                pl.BlockSpec((1, cout_pad), lambda i: (0, 0)),
            ],
            out_specs=pl.BlockSpec((P_pad, cout_pad), lambda i: (0, 0)),
            scratch_shapes=[
                pltpu.VMEM((P_pad, cout_pad), jnp.float32),
                pltpu.VMEM((_SUB, cout_pad), jnp.float32),
            ],
            compiler_params=_compiler_params(("arbitrary",)),
        )(patches, w_mat, gamma2d, beta2d)

    # Fallback: two-phase BN with a bf16 y round trip.
    # Phase 1: tiled matmul + per-tile channel sums (padded rows are zeros).
    y, part = pl.pallas_call(
        _matmul_stats_kernel,
        out_shape=(
            jax.ShapeDtypeStruct((P_pad, cout_pad), jnp.bfloat16),
            jax.ShapeDtypeStruct((nt * _SUB, cout_pad), jnp.float32),
        ),
        grid=(nt,),
        in_specs=[
            pl.BlockSpec((TP, K), lambda i: (i, 0)),
            _weight_spec(K, cout_pad),
        ],
        out_specs=(
            pl.BlockSpec((TP, cout_pad), lambda i: (i, 0)),
            pl.BlockSpec((_SUB, cout_pad), lambda i: (i, 0)),
        ),
        compiler_params=_compiler_params(("parallel",)),
    )(patches, w_mat)

    # Finalize training-mode BatchNorm statistics (tiny: nt x cout_pad).
    part = part.reshape(nt, _SUB, cout_pad)
    mean = part[:, 0, :].sum(axis=0) / P
    var = jnp.maximum(part[:, 1, :].sum(axis=0) / P - mean * mean, 0.0)
    scale = layer["gamma"] * jax.lax.rsqrt(var + _EPS)
    shift = layer["beta"] - mean * scale

    # Phase 2: big-tile elementwise y*scale + shift + LeakyReLU, in place.
    TP2 = _affine_row_tile(P_pad)
    nt2 = P_pad // TP2
    return pl.pallas_call(
        _affine_lrelu_kernel,
        out_shape=jax.ShapeDtypeStruct((P_pad, cout_pad), jnp.bfloat16),
        grid=(nt2,),
        in_specs=[
            pl.BlockSpec((TP2, cout_pad), lambda i: (i, 0)),
            pl.BlockSpec((1, cout_pad), lambda i: (0, 0)),
            pl.BlockSpec((1, cout_pad), lambda i: (0, 0)),
        ],
        out_specs=pl.BlockSpec((TP2, cout_pad), lambda i: (i, 0)),
        input_output_aliases={0: 0},        # activation overwrites y in place
        compiler_params=_compiler_params(("parallel",)),
    )(y, scale.reshape(1, cout_pad), shift.reshape(1, cout_pad))


def _conv_layer(x_nhwc, layer, *, stride, pad, use_bn, use_lrelu):
    """Conv(4x4, bias=False) [+ BatchNorm2d] [+ LeakyReLU(0.2)] on bf16 NHWC.

    x_nhwc channels are already padded to layer["cin8"] (padded channels are
    exact zeros).  Returns bf16 NHWC output with round_up(Cout, 8) channels.
    """
    patches, N, Ho, Wo = _im2col_nhwc(x_nhwc, 4, 4, stride, pad)
    assert patches.shape[1] == layer["w_mat"].shape[0]
    P = patches.shape[0]
    if use_bn:
        y = _conv_bn_lrelu_pallas(patches, layer)
    else:
        y = _conv_matmul_pallas(patches, layer, use_lrelu=use_lrelu)
    y = y[:P, :layer["cout8"]]
    return y.reshape(N, Ho, Wo, layer["cout8"])


# --------------------------------------------------------------------------- #
# Parameter prep (pre-transpose / pre-pad once at init)
# --------------------------------------------------------------------------- #
def _prep_conv_layer(w, gamma, beta):
    cout, cin, kh, kw = w.shape
    cin8 = _round_up(cin, _SUB)
    cout8 = _round_up(cout, _SUB)
    cout_pad = _round_up(cout, _LANE)
    w = jnp.pad(w, ((0, 0), (0, cin8 - cin), (0, 0), (0, 0)))
    # (Cout, Cin8, kh, kw) -> (kh, kw, Cin8, Cout) -> (kh*kw*Cin8, Cout_pad)
    w_mat = w.transpose(2, 3, 1, 0).reshape(kh * kw * cin8, cout)
    w_mat = jnp.pad(w_mat, ((0, 0), (0, cout_pad - cout))).astype(jnp.bfloat16)
    return {
        "w_mat": w_mat,
        "gamma": jnp.pad(gamma, (0, cout_pad - cout)),
        "beta": jnp.pad(beta, (0, cout_pad - cout)),
        "cin8": cin8,
        "cout": cout,
        "cout8": cout8,
        "cout_pad": cout_pad,
    }


def _prep_final_conv(w):
    cout, cin, kh, kw = w.shape                # cout == 1
    cin8 = _round_up(cin, _SUB)
    w = jnp.pad(w, ((0, 0), (0, cin8 - cin), (0, 0), (0, 0)))
    w_mat = w.transpose(2, 3, 1, 0).reshape(kh * kw * cin8, cout)
    return {"w_mat": w_mat.astype(jnp.float32), "cin8": cin8, "cout": cout}


def init_critic_params(key, in_channels, features_d):
    fd = features_d
    conv_shapes = [
        (fd, in_channels, 4, 4),       # conv1 (no BN)
        (fd * 2, fd, 4, 4),            # block 2 (BN)
        (fd * 4, fd * 2, 4, 4),        # block 3 (BN)
        (fd * 8, fd * 4, 4, 4),        # block 4 (BN)
        (1, fd * 8, 4, 4),             # final conv (no BN, no activation)
    ]
    params = []
    for idx, s in enumerate(conv_shapes):
        key, sub = jax.random.split(key)
        w = 0.02 * jax.random.normal(sub, s, dtype=jnp.float32)   # DCGAN-style init
        if idx == len(conv_shapes) - 1:
            params.append(_prep_final_conv(w))
        else:
            cout = s[0]
            params.append(_prep_conv_layer(
                w, jnp.ones((cout,), jnp.float32), jnp.zeros((cout,), jnp.float32)))
    return params


# --------------------------------------------------------------------------- #
# Forward pass (matches nn.Sequential in the PyTorch Critic)
# --------------------------------------------------------------------------- #
def critic_forward(params, x_nchw):
    # Module boundary: NCHW -> NHWC once; bf16 BEFORE im2col so the 16-way
    # patch concat (the largest glue array) is half the HBM traffic.
    x = jnp.transpose(x_nchw, (0, 2, 3, 1))
    cin8 = params[0]["cin8"]
    if x.shape[-1] != cin8:
        x = jnp.pad(x, ((0, 0), (0, 0), (0, 0), (0, cin8 - x.shape[-1])))
    x = x.astype(jnp.bfloat16)

    # Conv(4,2,1) + LeakyReLU(0.2)
    x = _conv_layer(x, params[0], stride=2, pad=1, use_bn=False, use_lrelu=True)
    # 3 x [Conv(4,2,1) + BatchNorm2d (training-mode batch stats) + LeakyReLU]
    for li in (1, 2, 3):
        x = _conv_layer(x, params[li], stride=2, pad=1, use_bn=True, use_lrelu=True)

    # Final Conv(4,1,0) -> (N, 1, 1, 1).  Tiny matmul (P = N rows, 1 output
    # channel): a dedicated pallas_call would be pure fixed overhead.
    patches, N, Ho, Wo = _im2col_nhwc(x, 4, 4, 1, 0)
    out = jnp.dot(patches, params[4]["w_mat"], preferred_element_type=jnp.float32)
    return out.reshape(N, Ho, Wo, 1).transpose(0, 3, 1, 2)


if __name__ == "__main__":
    key = jax.random.PRNGKey(0)
    k_params, k_x = jax.random.split(key)

    batch, in_channels, features_d = 2, 3, 4
    # 64x64 input is what the architecture implies (4 stride-2 convs + 4x4
    # valid conv down to 1x1).
    x = jax.random.normal(k_x, (batch, in_channels, 64, 64), dtype=jnp.float32)

    params = init_critic_params(k_params, in_channels, features_d)
    fwd = jax.jit(functools.partial(critic_forward, params))
    out = jax.block_until_ready(fwd(x))

    assert out.shape == (batch, 1, 1, 1), out.shape
    assert bool(jnp.all(jnp.isfinite(out)))
    print("KERNEL_OK")
</pallas_src>

<mosaic_0001>
module attributes {stable_mosaic.version = 11 : i64} {
  func.func @_matmul_act_kernel(%arg0: i32, %arg1: memref<512x128xbf16, #tpu.memory_space<vmem>>, %arg2: memref<128x128xbf16, #tpu.memory_space<vmem>>, %arg3: memref<512x128xbf16, #tpu.memory_space<vmem>>) attributes {dimension_semantics = [#tpu.dimension_semantics<parallel>], iteration_bounds = array<i64: 4>, scalar_prefetch = 0 : i64, scratch_operands = 0 : i64, tpu.core_type = #tpu.core_type<tc>, window_params = [{transform_indices = @transform_0, window_bounds = array<i64: 512, 128>}, {pipeline_mode = #tpu.pipeline_mode<synchronous>, transform_indices = @transform_1, window_bounds = array<i64: 128, 128>}, {transform_indices = @transform_2, window_bounds = array<i64: 512, 128>}]} {
    %c0 = arith.constant 0 : index
    %c0_0 = arith.constant 0 : index
    %0 = vector.load %arg1[%c0, %c0_0] : memref<512x128xbf16, #tpu.memory_space<vmem>>, vector<512x128xbf16>
    %c0_1 = arith.constant 0 : index
    %c0_2 = arith.constant 0 : index
    %1 = vector.load %arg2[%c0_1, %c0_2] : memref<128x128xbf16, #tpu.memory_space<vmem>>, vector<128x128xbf16>
    %cst = arith.constant dense<0.000000e+00> : vector<512x128xf32>
    %2 = tpu.matmul %0, %1, %cst {dimension_numbers = #tpu.dot_dimension_numbers<[1], [0], [0], [1], [0, 0, 1, 1], [], []>} : vector<512x128xbf16>, vector<128x128xbf16>, vector<512x128xf32> -> vector<512x128xf32>
    %cst_3 = arith.constant 2.000000e-01 : f32
    %3 = vector.broadcast %cst_3 : f32 to vector<512x128xf32>
    %4 = arith.mulf %3, %2 : vector<512x128xf32>
    %5 = arith.maximumf %2, %4 : vector<512x128xf32>
    %6 = arith.truncf %5 : vector<512x128xf32> to vector<512x128xbf16>
    %c0_4 = arith.constant 0 : index
    %c0_5 = arith.constant 0 : index
    %7 = vector.load %arg3[%c0_4, %c0_5] : memref<512x128xbf16, #tpu.memory_space<vmem>>, vector<512x128xbf16>
    tpu.vector_store %arg3[%c0_4, %c0_5], %6 {strides = array<i32>} : memref<512x128xbf16, #tpu.memory_space<vmem>>, vector<512x128xbf16>,
    return
  }
  func.func @transform_0(%arg0: i32) -> (i32, i32) {
    %c0_i32 = arith.constant 0 : i32
    %c0_i32_0 = arith.constant 0 : i32
    return %arg0, %c0_i32 : i32, i32
  }
  func.func @transform_1(%arg0: i32) -> (i32, i32) {
    %c0_i32 = arith.constant 0 : i32
    %c0_i32_0 = arith.constant 0 : i32
    %c0_i32_1 = arith.constant 0 : i32
    return %c0_i32, %c0_i32_0 : i32, i32
  }
  func.func @transform_2(%arg0: i32) -> (i32, i32) {
    %c0_i32 = arith.constant 0 : i32
    %c0_i32_0 = arith.constant 0 : i32
    return %arg0, %c0_i32 : i32, i32
  }
}

module attributes {stable_mosaic.version = 11 : i64} {
  func.func @_fused_conv_bn_lrelu_kernel(%arg0: i32, %arg1: memref<512x128xbf16, #tpu.memory_space<vmem>>, %arg2: memref<128x128xbf16, #tpu.memory_space<vmem>>, %arg3: memref<1x128xf32, #tpu.memory_space<vmem>>, %arg4: memref<1x128xf32, #tpu.memory_space<vmem>>, %arg5: memref<512x128xbf16, #tpu.memory_space<vmem>>, %arg6: memref<512x128xf32, #tpu.memory_space<vmem>>, %arg7: memref<8x128xf32, #tpu.memory_space<vmem>>) attributes {dimension_semantics = [#tpu.dimension_semantics<arbitrary>], iteration_bounds = array<i64: 1>, scalar_prefetch = 0 : i64, scratch_operands = 2 : i64, tpu.core_type = #tpu.core_type<tc>, window_params = [{transform_indices = @transform_0, window_bounds = array<i64: 512, 128>}, {pipeline_mode = #tpu.pipeline_mode<synchronous>, transform_indices = @transform_1, window_bounds = array<i64: 128, 128>}, {pipeline_mode = #tpu.pipeline_mode<synchronous>, transform_indices = @transform_2, window_bounds = array<i64: 1, 128>}, {pipeline_mode = #tpu.pipeline_mode<synchronous>, transform_indices = @transform_3, window_bounds = array<i64: 1, 128>}, {pipeline_mode = #tpu.pipeline_mode<synchronous>, transform_indices = @transform_4, window_bounds = array<i64: 512, 128>}]} {
    %c0_i32 = arith.constant 0 : i32
    %0 = arith.cmpi eq, %arg0, %c0_i32 : i32
    %1 = arith.extui %0 : i1 to i32
    %c0_i32_0 = arith.constant 0 : i32
    %2 = arith.cmpi ne, %1, %c0_i32_0 : i32
    scf.if %2 {
      %cst_16 = arith.constant 0.000000e+00 : f32
      %24 = vector.broadcast %cst_16 : f32 to vector<8x128xf32>
      %c0_17 = arith.constant 0 : index
      %c0_18 = arith.constant 0 : index
      %25 = vector.load %arg7[%c0_17, %c0_18] : memref<8x128xf32, #tpu.memory_space<vmem>>, vector<8x128xf32>
      tpu.vector_store %arg7[%c0_17, %c0_18], %24 {strides = array<i32>} : memref<8x128xf32, #tpu.memory_space<vmem>>, vector<8x128xf32>,
    } else {
    }
    %c0 = arith.constant 0 : index
    %c0_1 = arith.constant 0 : index
    %3 = vector.load %arg1[%c0, %c0_1] : memref<512x128xbf16, #tpu.memory_space<vmem>>, vector<512x128xbf16>
    %c0_2 = arith.constant 0 : index
    %c0_3 = arith.constant 0 : index
    %4 = vector.load %arg2[%c0_2, %c0_3] : memref<128x128xbf16, #tpu.memory_space<vmem>>, vector<128x128xbf16>
    %cst = arith.constant dense<0.000000e+00> : vector<512x128xf32>
    %5 = tpu.matmul %3, %4, %cst {dimension_numbers = #tpu.dot_dimension_numbers<[1], [0], [0], [1], [0, 0, 1, 1], [], []>} : vector<512x128xbf16>, vector<128x128xbf16>, vector<512x128xf32> -> vector<512x128xf32>
    %c512_i32 = arith.constant 512 : i32
    %6 = arith.muli %arg0, %c512_i32 : i32
    %7 = tpu.assume_multiple %6, 512 : i32
    %8 = arith.index_cast %7 : i32 to index
    %c0_4 = arith.constant 0 : index
    %9 = vector.load %arg6[%8, %c0_4] : memref<512x128xf32, #tpu.memory_space<vmem>>, vector<512x128xf32>
    tpu.vector_store %arg6[%8, %c0_4], %5 {strides = array<i32>} : memref<512x128xf32, #tpu.memory_space<vmem>>, vector<512x128xf32>,
    %c0_5 = arith.constant 0 : index
    %c0_6 = arith.constant 0 : index
    %10 = vector.load %arg7[%c0_5, %c0_6] : memref<8x128xf32, #tpu.memory_space<vmem>>, vector<1x128xf32>
    %cst_7 = arith.constant dense<0.000000e+00> : vector<128xf32>
    %11 = vector.multi_reduction <add>, %5, %cst_7 [0] : vector<512x128xf32> to vector<128xf32>
    %12 = vector.shape_cast %11 : vector<128xf32> to vector<1x128xf32>
    %13 = arith.addf %10, %12 : vector<1x128xf32>
    %c0_8 = arith.constant 0 : index
    %c0_9 = arith.constant 0 : index
    %14 = vector.load %arg7[%c0_8, %c0_9] : memref<8x128xf32, #tpu.memory_space<vmem>>, vector<1x128xf32>
    tpu.vector_store %arg7[%c0_8, %c0_9], %13 {strides = array<i32>} : memref<8x128xf32, #tpu.memory_space<vmem>>, vector<1x128xf32>,
    %c1 = arith.constant 1 : index
    %c0_10 = arith.constant 0 : index
    %15 = vector.load %arg7[%c1, %c0_10] : memref<8x128xf32, #tpu.memory_space<vmem>>, vector<1x128xf32>
    %16 = arith.mulf %5, %5 : vector<512x128xf32>
    %cst_11 = arith.constant dense<0.000000e+00> : vector<128xf32>
    %17 = vector.multi_reduction <add>, %16, %cst_11 [0] : vector<512x128xf32> to vector<128xf32>
    %18 = vector.shape_cast %17 : vector<128xf32> to vector<1x128xf32>
    %19 = arith.addf %15, %18 : vector<1x128xf32>
    %c1_12 = arith.constant 1 : index
    %c0_13 = arith.constant 0 : index
    %20 = vector.load %arg7[%c1_12, %c0_13] : memref<8x128xf32, #tpu.memory_space<vmem>>, vector<1x128xf32>
    tpu.vector_store %arg7[%c1_12, %c0_13], %19 {strides = array<i32>} : memref<8x128xf32, #tpu.memory_space<vmem>>, vector<1x128xf32>,
    %c0_i32_14 = arith.constant 0 : i32
    %21 = arith.cmpi eq, %arg0, %c0_i32_14 : i32
    %22 = arith.extui %21 : i1 to i32
    %c0_i32_15 = arith.constant 0 : i32
    %23 = arith.cmpi ne, %22, %c0_i32_15 : i32
    scf.if %23 {
      %c0_16 = arith.constant 0 : index
      %c0_17 = arith.constant 0 : index
      %24 = vector.load %arg7[%c0_16, %c0_17] : memref<8x128xf32, #tpu.memory_space<vmem>>, vector<1x128xf32>
      %cst_18 = arith.constant 0.001953125 : f32
      %25 = vector.broadcast %cst_18 : f32 to vector<1x128xf32>
      %26 = arith.mulf %24, %25 : vector<1x128xf32>
      %c1_19 = arith.constant 1 : index
      %c0_20 = arith.constant 0 : index
      %27 = vector.load %arg7[%c1_19, %c0_20] : memref<8x128xf32, #tpu.memory_space<vmem>>, vector<1x128xf32>
      %cst_21 = arith.constant 0.001953125 : f32
      %28 = vector.broadcast %cst_21 : f32 to vector<1x128xf32>
      %29 = arith.mulf %27, %28 : vector<1x128xf32>
      %30 = arith.mulf %26, %26 : vector<1x128xf32>
      %31 = arith.subf %29, %30 : vector<1x128xf32>
      %cst_22 = arith.constant 0.000000e+00 : f32
      %32 = vector.broadcast %cst_22 : f32 to vector<1x128xf32>
      %33 = arith.maximumf %31, %32 : vector<1x128xf32>
      %c0_23 = arith.constant 0 : index
      %c0_24 = arith.constant 0 : index
      %34 = vector.load %arg3[%c0_23, %c0_24] : memref<1x128xf32, #tpu.memory_space<vmem>>, vector<1x128xf32>
      %cst_25 = arith.constant 9.99999974E-6 : f32
      %35 = vector.broadcast %cst_25 : f32 to vector<1x128xf32>
      %36 = arith.addf %33, %35 : vector<1x128xf32>
      %37 = math.rsqrt %36 : vector<1x128xf32>
      %38 = arith.mulf %34, %37 : vector<1x128xf32>
      %c0_26 = arith.constant 0 : index
      %c0_27 = arith.constant 0 : index
      %39 = vector.load %arg4[%c0_26, %c0_27] : memref<1x128xf32, #tpu.memory_space<vmem>>, vector<1x128xf32>
      %40 = arith.mulf %26, %38 : vector<1x128xf32>
      %41 = arith.subf %39, %40 : vector<1x128xf32>
      %c0_28 = arith.constant 0 : index
      %c0_29 = arith.constant 0 : index
      %42 = vector.load %arg6[%c0_28, %c0_29] : memref<512x128xf32, #tpu.memory_space<vmem>>, vector<512x128xf32>
      %43 = vector.broadcast %38 : vector<1x128xf32> to vector<512x128xf32>
      %44 = arith.mulf %42, %43 : vector<512x128xf32>
      %45 = vector.broadcast %41 : vector<1x128xf32> to vector<512x128xf32>
      %46 = arith.addf %44, %45 : vector<512x128xf32>
      %cst_30 = arith.constant 2.000000e-01 : f32
      %47 = vector.broadcast %cst_30 : f32 to vector<512x128xf32>
      %48 = arith.mulf %47, %46 : vector<512x128xf32>
      %49 = arith.maximumf %46, %48 : vector<512x128xf32>
      %50 = arith.truncf %49 : vector<512x128xf32> to vector<512x128xbf16>
      %c0_31 = arith.constant 0 : index
      %c0_32 = arith.constant 0 : index
      %51 = vector.load %arg5[%c0_31, %c0_32] : memref<512x128xbf16, #tpu.memory_space<vmem>>, vector<512x128xbf16>
      tpu.vector_store %arg5[%c0_31, %c0_32], %50 {strides = array<i32>} : memref<512x128xbf16, #tpu.memory_space<vmem>>, vector<512x128xbf16>,
    } else {
    }
    return
  }
  func.func @transform_0(%arg0: i32) -> (i32, i32) {
    %c0_i32 = arith.constant 0 : i32
    %c0_i32_0 = arith.constant 0 : i32
    return %arg0, %c0_i32 : i32, i32
  }
  func.func @transform_1(%arg0: i32) -> (i32, i32) {
    %c0_i32 = arith.constant 0 : i32
    %c0_i32_0 = arith.constant 0 : i32
    %c0_i32_1 = arith.constant 0 : i32
    return %c0_i32, %c0_i32_0 : i32, i32
  }
  func.func @transform_2(%arg0: i32) -> (i32, i32) {
    %c0_i32 = arith.constant 0 : i32
    %c0_i32_0 = arith.constant 0 : i32
    %c0_i32_1 = arith.constant 0 : i32
    return %c0_i32, %c0_i32_0 : i32, i32
  }
  func.func @transform_3(%arg0: i32) -> (i32, i32) {
    %c0_i32 = arith.constant 0 : i32
    %c0_i32_0 = arith.constant 0 : i32
    %c0_i32_1 = arith.constant 0 : i32
    return %c0_i32, %c0_i32_0 : i32, i32
  }
  func.func @transform_4(%arg0: i32) -> (i32, i32) {
    %c0_i32 = arith.constant 0 : i32
    %c0_i32_0 = arith.constant 0 : i32
    %c0_i32_1 = arith.constant 0 : i32
    return %c0_i32, %c0_i32_0 : i32, i32
  }
}

module attributes {stable_mosaic.version = 11 : i64} {
  func.func @_fused_conv_bn_lrelu_kernel(%arg0: i32, %arg1: memref<128x128xbf16, #tpu.memory_space<vmem>>, %arg2: memref<128x128xbf16, #tpu.memory_space<vmem>>, %arg3: memref<1x128xf32, #tpu.memory_space<vmem>>, %arg4: memref<1x128xf32, #tpu.memory_space<vmem>>, %arg5: memref<128x128xbf16, #tpu.memory_space<vmem>>, %arg6: memref<128x128xf32, #tpu.memory_space<vmem>>, %arg7: memref<8x128xf32, #tpu.memory_space<vmem>>) attributes {dimension_semantics = [#tpu.dimension_semantics<arbitrary>], iteration_bounds = array<i64: 1>, scalar_prefetch = 0 : i64, scratch_operands = 2 : i64, tpu.core_type = #tpu.core_type<tc>, window_params = [{transform_indices = @transform_0, window_bounds = array<i64: 128, 128>}, {pipeline_mode = #tpu.pipeline_mode<synchronous>, transform_indices = @transform_1, window_bounds = array<i64: 128, 128>}, {pipeline_mode = #tpu.pipeline_mode<synchronous>, transform_indices = @transform_2, window_bounds = array<i64: 1, 128>}, {pipeline_mode = #tpu.pipeline_mode<synchronous>, transform_indices = @transform_3, window_bounds = array<i64: 1, 128>}, {pipeline_mode = #tpu.pipeline_mode<synchronous>, transform_indices = @transform_4, window_bounds = array<i64: 128, 128>}]} {
    %c0_i32 = arith.constant 0 : i32
    %0 = arith.cmpi eq, %arg0, %c0_i32 : i32
    %1 = arith.extui %0 : i1 to i32
    %c0_i32_0 = arith.constant 0 : i32
    %2 = arith.cmpi ne, %1, %c0_i32_0 : i32
    scf.if %2 {
      %cst_16 = arith.constant 0.000000e+00 : f32
      %24 = vector.broadcast %cst_16 : f32 to vector<8x128xf32>
      %c0_17 = arith.constant 0 : index
      %c0_18 = arith.constant 0 : index
      %25 = vector.load %arg7[%c0_17, %c0_18] : memref<8x128xf32, #tpu.memory_space<vmem>>, vector<8x128xf32>
      tpu.vector_store %arg7[%c0_17, %c0_18], %24 {strides = array<i32>} : memref<8x128xf32, #tpu.memory_space<vmem>>, vector<8x128xf32>,
    } else {
    }
    %c0 = arith.constant 0 : index
    %c0_1 = arith.constant 0 : index
    %3 = vector.load %arg1[%c0, %c0_1] : memref<128x128xbf16, #tpu.memory_space<vmem>>, vector<128x128xbf16>
    %c0_2 = arith.constant 0 : index
    %c0_3 = arith.constant 0 : index
    %4 = vector.load %arg2[%c0_2, %c0_3] : memref<128x128xbf16, #tpu.memory_space<vmem>>, vector<128x128xbf16>
    %cst = arith.constant dense<0.000000e+00> : vector<128x128xf32>
    %5 = tpu.matmul %3, %4, %cst {dimension_numbers = #tpu.dot_dimension_numbers<[1], [0], [0], [1], [0, 0, 1, 1], [], []>} : vector<128x128xbf16>, vector<128x128xbf16>, vector<128x128xf32> -> vector<128x128xf32>
    %c128_i32 = arith.constant 128 : i32
    %6 = arith.muli %arg0, %c128_i32 : i32
    %7 = tpu.assume_multiple %6, 128 : i32
    %8 = arith.index_cast %7 : i32 to index
    %c0_4 = arith.constant 0 : index
    %9 = vector.load %arg6[%8, %c0_4] : memref<128x128xf32, #tpu.memory_space<vmem>>, vector<128x128xf32>
    tpu.vector_store %arg6[%8, %c0_4], %5 {strides = array<i32>} : memref<128x128xf32, #tpu.memory_space<vmem>>, vector<128x128xf32>,
    %c0_5 = arith.constant 0 : index
    %c0_6 = arith.constant 0 : index
    %10 = vector.load %arg7[%c0_5, %c0_6] : memref<8x128xf32, #tpu.memory_space<vmem>>, vector<1x128xf32>
    %cst_7 = arith.constant dense<0.000000e+00> : vector<128xf32>
    %11 = vector.multi_reduction <add>, %5, %cst_7 [0] : vector<128x128xf32> to vector<128xf32>
    %12 = vector.shape_cast %11 : vector<128xf32> to vector<1x128xf32>
    %13 = arith.addf %10, %12 : vector<1x128xf32>
    %c0_8 = arith.constant 0 : index
    %c0_9 = arith.constant 0 : index
    %14 = vector.load %arg7[%c0_8, %c0_9] : memref<8x128xf32, #tpu.memory_space<vmem>>, vector<1x128xf32>
    tpu.vector_store %arg7[%c0_8, %c0_9], %13 {strides = array<i32>} : memref<8x128xf32, #tpu.memory_space<vmem>>, vector<1x128xf32>,
    %c1 = arith.constant 1 : index
    %c0_10 = arith.constant 0 : index
    %15 = vector.load %arg7[%c1, %c0_10] : memref<8x128xf32, #tpu.memory_space<vmem>>, vector<1x128xf32>
    %16 = arith.mulf %5, %5 : vector<128x128xf32>
    %cst_11 = arith.constant dense<0.000000e+00> : vector<128xf32>
    %17 = vector.multi_reduction <add>, %16, %cst_11 [0] : vector<128x128xf32> to vector<128xf32>
    %18 = vector.shape_cast %17 : vector<128xf32> to vector<1x128xf32>
    %19 = arith.addf %15, %18 : vector<1x128xf32>
    %c1_12 = arith.constant 1 : index
    %c0_13 = arith.constant 0 : index
    %20 = vector.load %arg7[%c1_12, %c0_13] : memref<8x128xf32, #tpu.memory_space<vmem>>, vector<1x128xf32>
    tpu.vector_store %arg7[%c1_12, %c0_13], %19 {strides = array<i32>} : memref<8x128xf32, #tpu.memory_space<vmem>>, vector<1x128xf32>,
    %c0_i32_14 = arith.constant 0 : i32
    %21 = arith.cmpi eq, %arg0, %c0_i32_14 : i32
    %22 = arith.extui %21 : i1 to i32
    %c0_i32_15 = arith.constant 0 : i32
    %23 = arith.cmpi ne, %22, %c0_i32_15 : i32
    scf.if %23 {
      %c0_16 = arith.constant 0 : index
      %c0_17 = arith.constant 0 : index
      %24 = vector.load %arg7[%c0_16, %c0_17] : memref<8x128xf32, #tpu.memory_space<vmem>>, vector<1x128xf32>
      %cst_18 = arith.constant 7.812500e-03 : f32
      %25 = vector.broadcast %cst_18 : f32 to vector<1x128xf32>
      %26 = arith.mulf %24, %25 : vector<1x128xf32>
      %c1_19 = arith.constant 1 : index
      %c0_20 = arith.constant 0 : index
      %27 = vector.load %arg7[%c1_19, %c0_20] : memref<8x128xf32, #tpu.memory_space<vmem>>, vector<1x128xf32>
      %cst_21 = arith.constant 7.812500e-03 : f32
      %28 = vector.broadcast %cst_21 : f32 to vector<1x128xf32>
      %29 = arith.mulf %27, %28 : vector<1x128xf32>
      %30 = arith.mulf %26, %26 : vector<1x128xf32>
      %31 = arith.subf %29, %30 : vector<1x128xf32>
      %cst_22 = arith.constant 0.000000e+00 : f32
      %32 = vector.broadcast %cst_22 : f32 to vector<1x128xf32>
      %33 = arith.maximumf %31, %32 : vector<1x128xf32>
      %c0_23 = arith.constant 0 : index
      %c0_24 = arith.constant 0 : index
      %34 = vector.load %arg3[%c0_23, %c0_24] : memref<1x128xf32, #tpu.memory_space<vmem>>, vector<1x128xf32>
      %cst_25 = arith.constant 9.99999974E-6 : f32
      %35 = vector.broadcast %cst_25 : f32 to vector<1x128xf32>
      %36 = arith.addf %33, %35 : vector<1x128xf32>
      %37 = math.rsqrt %36 : vector<1x128xf32>
      %38 = arith.mulf %34, %37 : vector<1x128xf32>
      %c0_26 = arith.constant 0 : index
      %c0_27 = arith.constant 0 : index
      %39 = vector.load %arg4[%c0_26, %c0_27] : memref<1x128xf32, #tpu.memory_space<vmem>>, vector<1x128xf32>
      %40 = arith.mulf %26, %38 : vector<1x128xf32>
      %41 = arith.subf %39, %40 : vector<1x128xf32>
      %c0_28 = arith.constant 0 : index
      %c0_29 = arith.constant 0 : index
      %42 = vector.load %arg6[%c0_28, %c0_29] : memref<128x128xf32, #tpu.memory_space<vmem>>, vector<128x128xf32>
      %43 = vector.broadcast %38 : vector<1x128xf32> to vector<128x128xf32>
      %44 = arith.mulf %42, %43 : vector<128x128xf32>
      %45 = vector.broadcast %41 : vector<1x128xf32> to vector<128x128xf32>
      %46 = arith.addf %44, %45 : vector<128x128xf32>
      %cst_30 = arith.constant 2.000000e-01 : f32
      %47 = vector.broadcast %cst_30 : f32 to vector<128x128xf32>
      %48 = arith.mulf %47, %46 : vector<128x128xf32>
      %49 = arith.maximumf %46, %48 : vector<128x128xf32>
      %50 = arith.truncf %49 : vector<128x128xf32> to vector<128x128xbf16>
      %c0_31 = arith.constant 0 : index
      %c0_32 = arith.constant 0 : index
      %51 = vector.load %arg5[%c0_31, %c0_32] : memref<128x128xbf16, #tpu.memory_space<vmem>>, vector<128x128xbf16>
      tpu.vector_store %arg5[%c0_31, %c0_32], %50 {strides = array<i32>} : memref<128x128xbf16, #tpu.memory_space<vmem>>, vector<128x128xbf16>,
    } else {
    }
    return
  }
  func.func @transform_0(%arg0: i32) -> (i32, i32) {
    %c0_i32 = arith.constant 0 : i32
    %c0_i32_0 = arith.constant 0 : i32
    return %arg0, %c0_i32 : i32, i32
  }
  func.func @transform_1(%arg0: i32) -> (i32, i32) {
    %c0_i32 = arith.constant 0 : i32
    %c0_i32_0 = arith.constant 0 : i32
    %c0_i32_1 = arith.constant 0 : i32
    return %c0_i32, %c0_i32_0 : i32, i32
  }
  func.func @transform_2(%arg0: i32) -> (i32, i32) {
    %c0_i32 = arith.constant 0 : i32
    %c0_i32_0 = arith.constant 0 : i32
    %c0_i32_1 = arith.constant 0 : i32
    return %c0_i32, %c0_i32_0 : i32, i32
  }
  func.func @transform_3(%arg0: i32) -> (i32, i32) {
    %c0_i32 = arith.constant 0 : i32
    %c0_i32_0 = arith.constant 0 : i32
    %c0_i32_1 = arith.constant 0 : i32
    return %c0_i32, %c0_i32_0 : i32, i32
  }
  func.func @transform_4(%arg0: i32) -> (i32, i32) {
    %c0_i32 = arith.constant 0 : i32
    %c0_i32_0 = arith.constant 0 : i32
    %c0_i32_1 = arith.constant 0 : i32
    return %c0_i32, %c0_i32_0 : i32, i32
  }
}

module attributes {stable_mosaic.version = 11 : i64} {
  func.func @_fused_conv_bn_lrelu_kernel(%arg0: i32, %arg1: memref<32x256xbf16, #tpu.memory_space<vmem>>, %arg2: memref<256x128xbf16, #tpu.memory_space<vmem>>, %arg3: memref<1x128xf32, #tpu.memory_space<vmem>>, %arg4: memref<1x128xf32, #tpu.memory_space<vmem>>, %arg5: memref<32x128xbf16, #tpu.memory_space<vmem>>, %arg6: memref<32x128xf32, #tpu.memory_space<vmem>>, %arg7: memref<8x128xf32, #tpu.memory_space<vmem>>) attributes {dimension_semantics = [#tpu.dimension_semantics<arbitrary>], iteration_bounds = array<i64: 1>, scalar_prefetch = 0 : i64, scratch_operands = 2 : i64, tpu.core_type = #tpu.core_type<tc>, window_params = [{transform_indices = @transform_0, window_bounds = array<i64: 32, 256>}, {pipeline_mode = #tpu.pipeline_mode<synchronous>, transform_indices = @transform_1, window_bounds = array<i64: 256, 128>}, {pipeline_mode = #tpu.pipeline_mode<synchronous>, transform_indices = @transform_2, window_bounds = array<i64: 1, 128>}, {pipeline_mode = #tpu.pipeline_mode<synchronous>, transform_indices = @transform_3, window_bounds = array<i64: 1, 128>}, {pipeline_mode = #tpu.pipeline_mode<synchronous>, transform_indices = @transform_4, window_bounds = array<i64: 32, 128>}]} {
    %c0_i32 = arith.constant 0 : i32
    %0 = arith.cmpi eq, %arg0, %c0_i32 : i32
    %1 = arith.extui %0 : i1 to i32
    %c0_i32_0 = arith.constant 0 : i32
    %2 = arith.cmpi ne, %1, %c0_i32_0 : i32
    scf.if %2 {
      %cst_16 = arith.constant 0.000000e+00 : f32
      %24 = vector.broadcast %cst_16 : f32 to vector<8x128xf32>
      %c0_17 = arith.constant 0 : index
      %c0_18 = arith.constant 0 : index
      %25 = vector.load %arg7[%c0_17, %c0_18] : memref<8x128xf32, #tpu.memory_space<vmem>>, vector<8x128xf32>
      tpu.vector_store %arg7[%c0_17, %c0_18], %24 {strides = array<i32>} : memref<8x128xf32, #tpu.memory_space<vmem>>, vector<8x128xf32>,
    } else {
    }
    %c0 = arith.constant 0 : index
    %c0_1 = arith.constant 0 : index
    %3 = vector.load %arg1[%c0, %c0_1] : memref<32x256xbf16, #tpu.memory_space<vmem>>, vector<32x256xbf16>
    %c0_2 = arith.constant 0 : index
    %c0_3 = arith.constant 0 : index
    %4 = vector.load %arg2[%c0_2, %c0_3] : memref<256x128xbf16, #tpu.memory_space<vmem>>, vector<256x128xbf16>
    %cst = arith.constant dense<0.000000e+00> : vector<32x128xf32>
    %5 = tpu.matmul %3, %4, %cst {dimension_numbers = #tpu.dot_dimension_numbers<[1], [0], [0], [1], [0, 0, 1, 1], [], []>} : vector<32x256xbf16>, vector<256x128xbf16>, vector<32x128xf32> -> vector<32x128xf32>
    %c32_i32 = arith.constant 32 : i32
    %6 = arith.muli %arg0, %c32_i32 : i32
    %7 = tpu.assume_multiple %6, 32 : i32
    %8 = arith.index_cast %7 : i32 to index
    %c0_4 = arith.constant 0 : index
    %9 = vector.load %arg6[%8, %c0_4] : memref<32x128xf32, #tpu.memory_space<vmem>>, vector<32x128xf32>
    tpu.vector_store %arg6[%8, %c0_4], %5 {strides = array<i32>} : memref<32x128xf32, #tpu.memory_space<vmem>>, vector<32x128xf32>,
    %c0_5 = arith.constant 0 : index
    %c0_6 = arith.constant 0 : index
    %10 = vector.load %arg7[%c0_5, %c0_6] : memref<8x128xf32, #tpu.memory_space<vmem>>, vector<1x128xf32>
    %cst_7 = arith.constant dense<0.000000e+00> : vector<128xf32>
    %11 = vector.multi_reduction <add>, %5, %cst_7 [0] : vector<32x128xf32> to vector<128xf32>
    %12 = vector.shape_cast %11 : vector<128xf32> to vector<1x128xf32>
    %13 = arith.addf %10, %12 : vector<1x128xf32>
    %c0_8 = arith.constant 0 : index
    %c0_9 = arith.constant 0 : index
    %14 = vector.load %arg7[%c0_8, %c0_9] : memref<8x128xf32, #tpu.memory_space<vmem>>, vector<1x128xf32>
    tpu.vector_store %arg7[%c0_8, %c0_9], %13 {strides = array<i32>} : memref<8x128xf32, #tpu.memory_space<vmem>>, vector<1x128xf32>,
    %c1 = arith.constant 1 : index
    %c0_10 = arith.constant 0 : index
    %15 = vector.load %arg7[%c1, %c0_10] : memref<8x128xf32, #tpu.memory_space<vmem>>, vector<1x128xf32>
    %16 = arith.mulf %5, %5 : vector<32x128xf32>
    %cst_11 = arith.constant dense<0.000000e+00> : vector<128xf32>
    %17 = vector.multi_reduction <add>, %16, %cst_11 [0] : vector<32x128xf32> to vector<128xf32>
    %18 = vector.shape_cast %17 : vector<128xf32> to vector<1x128xf32>
    %19 = arith.addf %15, %18 : vector<1x128xf32>
    %c1_12 = arith.constant 1 : index
    %c0_13 = arith.constant 0 : index
    %20 = vector.load %arg7[%c1_12, %c0_13] : memref<8x128xf32, #tpu.memory_space<vmem>>, vector<1x128xf32>
    tpu.vector_store %arg7[%c1_12, %c0_13], %19 {strides = array<i32>} : memref<8x128xf32, #tpu.memory_space<vmem>>, vector<1x128xf32>,
    %c0_i32_14 = arith.constant 0 : i32
    %21 = arith.cmpi eq, %arg0, %c0_i32_14 : i32
    %22 = arith.extui %21 : i1 to i32
    %c0_i32_15 = arith.constant 0 : i32
    %23 = arith.cmpi ne, %22, %c0_i32_15 : i32
    scf.if %23 {
      %c0_16 = arith.constant 0 : index
      %c0_17 = arith.constant 0 : index
      %24 = vector.load %arg7[%c0_16, %c0_17] : memref<8x128xf32, #tpu.memory_space<vmem>>, vector<1x128xf32>
      %cst_18 = arith.constant 3.125000e-02 : f32
      %25 = vector.broadcast %cst_18 : f32 to vector<1x128xf32>
      %26 = arith.mulf %24, %25 : vector<1x128xf32>
      %c1_19 = arith.constant 1 : index
      %c0_20 = arith.constant 0 : index
      %27 = vector.load %arg7[%c1_19, %c0_20] : memref<8x128xf32, #tpu.memory_space<vmem>>, vector<1x128xf32>
      %cst_21 = arith.constant 3.125000e-02 : f32
      %28 = vector.broadcast %cst_21 : f32 to vector<1x128xf32>
      %29 = arith.mulf %27, %28 : vector<1x128xf32>
      %30 = arith.mulf %26, %26 : vector<1x128xf32>
      %31 = arith.subf %29, %30 : vector<1x128xf32>
      %cst_22 = arith.constant 0.000000e+00 : f32
      %32 = vector.broadcast %cst_22 : f32 to vector<1x128xf32>
      %33 = arith.maximumf %31, %32 : vector<1x128xf32>
      %c0_23 = arith.constant 0 : index
      %c0_24 = arith.constant 0 : index
      %34 = vector.load %arg3[%c0_23, %c0_24] : memref<1x128xf32, #tpu.memory_space<vmem>>, vector<1x128xf32>
      %cst_25 = arith.constant 9.99999974E-6 : f32
      %35 = vector.broadcast %cst_25 : f32 to vector<1x128xf32>
      %36 = arith.addf %33, %35 : vector<1x128xf32>
      %37 = math.rsqrt %36 : vector<1x128xf32>
      %38 = arith.mulf %34, %37 : vector<1x128xf32>
      %c0_26 = arith.constant 0 : index
      %c0_27 = arith.constant 0 : index
      %39 = vector.load %arg4[%c0_26, %c0_27] : memref<1x128xf32, #tpu.memory_space<vmem>>, vector<1x128xf32>
      %40 = arith.mulf %26, %38 : vector<1x128xf32>
      %41 = arith.subf %39, %40 : vector<1x128xf32>
      %c0_28 = arith.constant 0 : index
      %c0_29 = arith.constant 0 : index
      %42 = vector.load %arg6[%c0_28, %c0_29] : memref<32x128xf32, #tpu.memory_space<vmem>>, vector<32x128xf32>
      %43 = vector.broadcast %38 : vector<1x128xf32> to vector<32x128xf32>
      %44 = arith.mulf %42, %43 : vector<32x128xf32>
      %45 = vector.broadcast %41 : vector<1x128xf32> to vector<32x128xf32>
      %46 = arith.addf %44, %45 : vector<32x128xf32>
      %cst_30 = arith.constant 2.000000e-01 : f32
      %47 = vector.broadcast %cst_30 : f32 to vector<32x128xf32>
      %48 = arith.mulf %47, %46 : vector<32x128xf32>
      %49 = arith.maximumf %46, %48 : vector<32x128xf32>
      %50 = arith.truncf %49 : vector<32x128xf32> to vector<32x128xbf16>
      %c0_31 = arith.constant 0 : index
      %c0_32 = arith.constant 0 : index
      %51 = vector.load %arg5[%c0_31, %c0_32] : memref<32x128xbf16, #tpu.memory_space<vmem>>, vector<32x128xbf16>
      tpu.vector_store %arg5[%c0_31, %c0_32], %50 {strides = array<i32>} : memref<32x128xbf16, #tpu.memory_space<vmem>>, vector<32x128xbf16>,
    } else {
    }
    return
  }
  func.func @transform_0(%arg0: i32) -> (i32, i32) {
    %c0_i32 = arith.constant 0 : i32
    %c0_i32_0 = arith.constant 0 : i32
    return %arg0, %c0_i32 : i32, i32
  }
  func.func @transform_1(%arg0: i32) -> (i32, i32) {
    %c0_i32 = arith.constant 0 : i32
    %c0_i32_0 = arith.constant 0 : i32
    %c0_i32_1 = arith.constant 0 : i32
    return %c0_i32, %c0_i32_0 : i32, i32
  }
  func.func @transform_2(%arg0: i32) -> (i32, i32) {
    %c0_i32 = arith.constant 0 : i32
    %c0_i32_0 = arith.constant 0 : i32
    %c0_i32_1 = arith.constant 0 : i32
    return %c0_i32, %c0_i32_0 : i32, i32
  }
  func.func @transform_3(%arg0: i32) -> (i32, i32) {
    %c0_i32 = arith.constant 0 : i32
    %c0_i32_0 = arith.constant 0 : i32
    %c0_i32_1 = arith.constant 0 : i32
    return %c0_i32, %c0_i32_0 : i32, i32
  }
  func.func @transform_4(%arg0: i32) -> (i32, i32) {
    %c0_i32 = arith.constant 0 : i32
    %c0_i32_0 = arith.constant 0 : i32
    %c0_i32_1 = arith.constant 0 : i32
    return %c0_i32, %c0_i32_0 : i32, i32
  }
}

</mosaic_0001>

<llo_original>
// kernel: critic_forward.4
$region0: #{critic_forward.4}
  #allocation0 [shape = 'u32[]', space=smem, size = 0x4, offset = 0x4, fixed_abs, tag = 'smem constant byte address 0x4 - core index']
  #allocation1 [shape = 'u32[144,128]{1,0:T(1,128)}', space=vmem, size = 0x12000, scoped, tag = 'internal scratch']
  %s0 = inlined_call_operand.hbm [shape: bf16[2048,128], index: 0, kind: input, shape index: {}]
  %s1 = inlined_call_operand.hbm [shape: bf16[128,128], index: 1, kind: input, shape index: {}]
  %s2 = inlined_call_operand.hbm [shape: bf16[2048,128], index: 2, kind: output, shape index: {}]
  %s3 = sld [smem:[#allocation0]]
  $region49: #{critic_forward.4} parent=0
    _
  %s5 = ssub.s32 1, %s3
  %s6 = scalar_select 0, %s5, %s3
  $region1: #{critic_forward.4} parent=0
    #allocation2 [shape = 'u8[262144]{0}', space=vmem, size = 0x40000, scoped, tag = 'input window, operand 0']
    #allocation3 [shape = 's32[2]{0}', space=sflag, size = 0x8, scoped, tag = 'scoped memory for critic_forward.4']
    #allocation4 [shape = 's32[2]{0}', space=sflag, size = 0x8, scoped, tag = 'scoped memory for critic_forward.4']
    #allocation5 [shape = 'u8[32768]{0}', space=vmem, size = 0x8000, scoped, tag = 'input window, operand 1, single buffered']
    #allocation6 [shape = 's32[1]{0}', space=sflag, size = 0x4, scoped, tag = 'scoped memory for critic_forward.4']
    #allocation7 [shape = 'u8[262144]{0}', space=vmem, size = 0x40000, scoped, tag = 'output window, operand 0']
    %7 = vsyncpa [#allocation3], 0
    %s8 = scalar_lea.sflag [#allocation3], 1
    %9 = vsyncpa %s8, 0
    %10 = vsyncpa [#allocation6], 0
    %11 = vsyncpa [#allocation4], 0
    %s12 = scalar_lea.sflag [#allocation4], 1
    %13 = vsyncpa %s12, 0
    loop: start=0, step=1, limit=6
    $region2: #{critic_forward.4} parent=1 // loop_pre_header
      _
    $region3: #{critic_forward.4} parent=1 // loop_header
      %s15 = sphi 0, %s19
      %p16 = scmp.ge.s32.totalorder %s15, 6
      %s25 = sphi 0, %s27
      %s28 = sphi 0, %s25
      %s29 = sphi 0, %s28
      %s45 = sphi 0, %s29
      %s49 = sphi 0, %s49
      %s51 = sphi 0, %s49
      %s52 = sphi 0, %s51
      %s66 = sphi 0, %s52
      %s72 = sphi 0, %s74
      %s75 = sphi 0, %s72
      %s76 = sphi 0, %s75
      %s92 = sphi 0, %s76
    $region4: #{critic_forward.4} parent=1 // loop_header_branch
      %18 = sbr.rel (%p16) target = $region8
    $region5: #{critic_forward.4} parent=1 // loop_body
      %s20 = ssub.s32 %s15, 1
      %s21 = ssub.s32 %s15, 2
      %s22 = sadd.s32 %s15, 1
      %s23 = ssub.s32 %s15, %s22
      %p24 = scmp.eq.s32.totalorder %s23, 0
      %s26 = sadd.s32 %s25, 1
      %s27 = scalar_select %p24, %s25, %s26
      %p30 = pneg %p24
      %p31 = scmp.eq.s32.totalorder %s15, 3
      %p32 = por %p30, %p31
      %p33 = scmp.ne.s32.totalorder %s25, %s28
      %p34 = scmp.eq.s32.totalorder %s15, 0
      %p35 = por %p33, %p34
      %p36 = scmp.ne.s32.totalorder %s25, %s28
      %p37 = scmp.eq.s32.totalorder %s20, 3
      %p38 = por %p36, %p37
      %p39 = scmp.ne.s32.totalorder %s28, %s29
      %p40 = scmp.eq.s32.totalorder %s20, 0
      %p41 = por %p39, %p40
      %p42 = scmp.ne.s32.totalorder %s28, %s29
      %p43 = scmp.eq.s32.totalorder %s21, 3
      %p44 = por %p42, %p43
      %p46 = scmp.ne.s32.totalorder %s29, %s45
      %p47 = scmp.eq.s32.totalorder %s21, 0
      %p48 = por %p46, %p47
      %s50 = sadd.s32 %s49, 1
      %p53 = scmp.eq.s32.totalorder %s15, 3
      %p54 = scmp.ne.s32.totalorder %s49, %s51
      %p55 = scmp.eq.s32.totalorder %s15, 0
      %p56 = por %p54, %p55
      %p57 = scmp.ne.s32.totalorder %s49, %s51
      %p58 = scmp.eq.s32.totalorder %s20, 3
      %p59 = por %p57, %p58
      %p60 = scmp.ne.s32.totalorder %s51, %s52
      %p61 = scmp.eq.s32.totalorder %s20, 0
      %p62 = por %p60, %p61
      %p63 = scmp.ne.s32.totalorder %s51, %s52
      %p64 = scmp.eq.s32.totalorder %s21, 3
      %p65 = por %p63, %p64
      %p67 = scmp.ne.s32.totalorder %s52, %s66
      %p68 = scmp.eq.s32.totalorder %s21, 0
      %p69 = por %p67, %p68
      %s70 = ssub.s32 %s15, %s22
      %p71 = scmp.eq.s32.totalorder %s70, 0
      %s73 = sadd.s32 %s72, 1
      %s74 = scalar_select %p71, %s72, %s73
      %p77 = pneg %p71
      %p78 = scmp.eq.s32.totalorder %s15, 3
      %p79 = por %p77, %p78
      %p80 = scmp.ne.s32.totalorder %s72, %s75
      %p81 = scmp.eq.s32.totalorder %s15, 0
      %p82 = por %p80, %p81
      %p83 = scmp.ne.s32.totalorder %s72, %s75
      %p84 = scmp.eq.s32.totalorder %s20, 3
      %p85 = por %p83, %p84
      %p86 = scmp.ne.s32.totalorder %s75, %s76
      %p87 = scmp.eq.s32.totalorder %s20, 0
      %p88 = por %p86, %p87
      %p89 = scmp.ne.s32.totalorder %s75, %s76
      %p90 = scmp.eq.s32.totalorder %s21, 3
      %p91 = por %p89, %p90
      %p93 = scmp.ne.s32.totalorder %s76, %s92
      %p94 = scmp.eq.s32.totalorder %s21, 0
      %p95 = por %p93, %p94
      %p96 = scmp.le.s32.totalorder 1, %s15
      %p97 = scmp.lt.s32.totalorder %s15, 5
      %p98 = pnand %p96, %p97
      %p99 = pneg %p98
      // Predicated region
      $region9: #{critic_forward.4} parent=5 // pred_check
        _
      $region10: #{critic_forward.4} parent=5 // pred_check_branch
        %101 = sbr.rel (%p98) target = $region12
      $region11: #{critic_forward.4} parent=5 // pred_region
        %s102 = ssub.s32 %s15, 1
        // Predicated region
        $region13: #{critic_forward.4} parent=11 // pred_check
          %p103 = pneg %p62
        $region14: #{critic_forward.4} parent=11 // pred_check_branch
          %105 = sbr.rel (%p103) target = $region16
        $region15: #{critic_forward.4} parent=11 // pred_region
          %s107 = ssub.s32 1024, 1024
          %108 = vsyncadd [#allocation6], %s107
          %s109 = sshll.u32 [#allocation5], 4
          %s110 = int_to_ptr.vmem [resolvable:$true] %s109
          %115 = dma.hbm_to_vmem [thread:$0]  %s1, 1024, %s110, [#allocation6], 64, 64, 4
        $region16: #{critic_forward.4} parent=11 // pred_fallthru
          _
      $region12: #{critic_forward.4} parent=5 // pred_fallthru
        _
      %p116 = scmp.lt.s32.totalorder %s15, 4
      // Predicated region
      $region17: #{critic_forward.4} parent=5 // pred_check
        %p117 = pneg %p116
      $region18: #{critic_forward.4} parent=5 // pred_check_branch
        %119 = sbr.rel (%p117) target = $region20
      $region19: #{critic_forward.4} parent=5 // pred_region
        // Predicated region
        $region21: #{critic_forward.4} parent=19 // pred_check
          %p120 = pneg %p35
        $region22: #{critic_forward.4} parent=19 // pred_check_branch
          %122 = sbr.rel (%p120) target = $region24
        $region23: #{critic_forward.4} parent=19 // pred_region
          %s123 = sand.u32 %s25, 1
          %s124 = scalar_lea.sflag [#allocation3], %s123
          %s125 = sand.u32 %s25, 1
          %s126 = smul.addr %s125, 256
          %s127 = scalar_lea.vmem [#allocation2], %s126
          %s128 = smul.u32 64, %s15
          %s130 = ssub.s32 4096, 4096
          %131 = vsyncadd %s124, %s130
          %s132 = smul.addr %s128, 64
          %s133 = scalar_lea.hbm %s0, %s132
          %s134 = sshll.u32 %s127, 4
          %s135 = int_to_ptr.vmem [resolvable:$true] %s134
          %140 = dma.hbm_to_vmem [thread:$0]  %s133, 4096, %s135, %s124, 64, 64, 4
        $region24: #{critic_forward.4} parent=19 // pred_fallthru
          _
      $region20: #{critic_forward.4} parent=5 // pred_fallthru
        _
      %p141 = scmp.le.s32.totalorder 1, %s15
      %p142 = scmp.lt.s32.totalorder %s15, 5
      %p143 = pnand %p141, %p142
      %p144 = pneg %p143
      // Predicated region
      $region25: #{critic_forward.4} parent=5 // pred_check
        _
      $region26: #{critic_forward.4} parent=5 // pred_check_branch
        %146 = sbr.rel (%p143) target = $region28
      $region27: #{critic_forward.4} parent=5 // pred_region
        %s147 = ssub.s32 %s15, 1
        %s148 = sand.u32 %s28, 1
        %s149 = scalar_lea.sflag [#allocation3], %s148
        %s150 = sand.u32 %s28, 1
        %s151 = smul.addr %s150, 256
        %s152 = scalar_lea.vmem [#allocation2], %s151
        // Predicated region
        $region29: #{critic_forward.4} parent=27 // pred_check
          %p153 = pneg %p41
        $region30: #{critic_forward.4} parent=27 // pred_check_branch
          %155 = sbr.rel (%p153) target = $region32
        $region31: #{critic_forward.4} parent=27 // pred_region
          %156 = dma.done %s149, 4096
        $region32: #{critic_forward.4} parent=27 // pred_fallthru
          _
        // Predicated region
        $region33: #{critic_forward.4} parent=27 // pred_check
          %p157 = pneg %p62
        $region34: #{critic_forward.4} parent=27 // pred_check_branch
          %159 = sbr.rel (%p157) target = $region36
        $region35: #{critic_forward.4} parent=27 // pred_region
          %160 = dma.done [#allocation6], 1024
        $region36: #{critic_forward.4} parent=27 // pred_fallthru
          _
        %s161 = sand.u32 %s28, 1
        %s162 = scalar_lea.sflag [#allocation3], %s161
        %s163 = sand.u32 %s28, 1
        %s164 = smul.addr %s163, 256
        %s165 = scalar_lea.vmem [#allocation2], %s164
        %p166 = pneg %p41
        %p167 = pneg %p38
        %p168 = pneg %p62
        %p169 = pneg %p59
        %p170 = pneg %p88
        %p171 = pneg %p85
        %s172 = sand.u32 %s75, 1
        %s173 = scalar_lea.sflag [#allocation4], %s172
        %s174 = sand.u32 %s75, 1
        %s175 = smul.addr %s174, 256
        %s176 = scalar_lea.vmem [#allocation7], %s175
        %s177 = smul.u32 64, %s20
        %s178 = smul.u32 64, %s20
        %v180 = vld [vmem:[%s152] sm:$0xf]
        %v181 = vld [vmem:[%s152 + $0x4] sm:$0xf]
        %v182 = vld [vmem:[%s152 + $0x8] sm:$0xf]
        %v183 = vld [vmem:[%s152 + $0xc] sm:$0xf]
        %v184 = vld [vmem:[%s152 + $0x10] sm:$0xf]
        %v185 = vld [vmem:[%s152 + $0x14] sm:$0xf]
        %v186 = vld [vmem:[%s152 + $0x18] sm:$0xf]
        %v187 = vld [vmem:[%s152 + $0x1c] sm:$0xf]
        %v188 = vld [vmem:[%s152 + $0x20] sm:$0xf]
        %v189 = vld [vmem:[%s152 + $0x24] sm:$0xf]
        %v190 = vld [vmem:[%s152 + $0x28] sm:$0xf]
        %v191 = vld [vmem:[%s152 + $0x2c] sm:$0xf]
        %v192 = vld [vmem:[%s152 + $0x30] sm:$0xf]
        %v193 = vld [vmem:[%s152 + $0x34] sm:$0xf]
        %v194 = vld [vmem:[%s152 + $0x38] sm:$0xf]
        %v195 = vld [vmem:[%s152 + $0x3c] sm:$0xf]
        %v196 = vld [vmem:[%s152 + $0x40] sm:$0xf]
        %v197 = vld [vmem:[%s152 + $0x44] sm:$0xf]
        %v198 = vld [vmem:[%s152 + $0x48] sm:$0xf]
        %v199 = vld [vmem:[%s152 + $0x4c] sm:$0xf]
        %v200 = vld [vmem:[%s152 + $0x50] sm:$0xf]
        %v201 = vld [vmem:[%s152 + $0x54] sm:$0xf]
        %v202 = vld [vmem:[%s152 + $0x58] sm:$0xf]
        %v203 = vld [vmem:[%s152 + $0x5c] sm:$0xf]
        %v204 = vld [vmem:[%s152 + $0x60] sm:$0xf]
        %v205 = vld [vmem:[%s152 + $0x64] sm:$0xf]
        %v206 = vld [vmem:[%s152 + $0x68] sm:$0xf]
        %v207 = vld [vmem:[%s152 + $0x6c] sm:$0xf]
        %v208 = vld [vmem:[%s152 + $0x70] sm:$0xf]
        %v209 = vld [vmem:[%s152 + $0x74] sm:$0xf]
        %v210 = vld [vmem:[%s152 + $0x78] sm:$0xf]
        %v211 = vld [vmem:[%s152 + $0x7c] sm:$0xf]
        %v212 = vld [vmem:[%s152 + $0x80] sm:$0xf]
        %v213 = vld [vmem:[%s152 + $0x84] sm:$0xf]
        %v214 = vld [vmem:[%s152 + $0x88] sm:$0xf]
        %v215 = vld [vmem:[%s152 + $0x8c] sm:$0xf]
        %v216 = vld [vmem:[%s152 + $0x90] sm:$0xf]
        %v217 = vld [vmem:[%s152 + $0x94] sm:$0xf]
        %v218 = vld [vmem:[%s152 + $0x98] sm:$0xf]
        %v219 = vld [vmem:[%s152 + $0x9c] sm:$0xf]
        %v220 = vld [vmem:[%s152 + $0xa0] sm:$0xf]
        %v221 = vld [vmem:[%s152 + $0xa4] sm:$0xf]
        %v222 = vld [vmem:[%s152 + $0xa8] sm:$0xf]
        %v223 = vld [vmem:[%s152 + $0xac] sm:$0xf]
        %v224 = vld [vmem:[%s152 + $0xb0] sm:$0xf]
        %v225 = vld [vmem:[%s152 + $0xb4] sm:$0xf]
        %v226 = vld [vmem:[%s152 + $0xb8] sm:$0xf]
        %v227 = vld [vmem:[%s152 + $0xbc] sm:$0xf]
        %v228 = vld [vmem:[%s152 + $0xc0] sm:$0xf]
        %v229 = vld [vmem:[%s152 + $0xc4] sm:$0xf]
        %v230 = vld [vmem:[%s152 + $0xc8] sm:$0xf]
        %v231 = vld [vmem:[%s152 + $0xcc] sm:$0xf]
        %v232 = vld [vmem:[%s152 + $0xd0] sm:$0xf]
        %v233 = vld [vmem:[%s152 + $0xd4] sm:$0xf]
        %v234 = vld [vmem:[%s152 + $0xd8] sm:$0xf]
        %v235 = vld [vmem:[%s152 + $0xdc] sm:$0xf]
        %v236 = vld [vmem:[%s152 + $0xe0] sm:$0xf]
        %v237 = vld [vmem:[%s152 + $0xe4] sm:$0xf]
        %v238 = vld [vmem:[%s152 + $0xe8] sm:$0xf]
        %v239 = vld [vmem:[%s152 + $0xec] sm:$0xf]
        %v240 = vld [vmem:[%s152 + $0xf0] sm:$0xf]
        %v241 = vld [vmem:[%s152 + $0xf4] sm:$0xf]
        %v242 = vld [vmem:[%s152 + $0xf8] sm:$0xf]
        %v243 = vld [vmem:[%s152 + $0xfc] sm:$0xf]
        %v244 = vld [vmem:[#allocation5] sm:$0xf]
        %v245 = vld [vmem:[#allocation5 + $0x4] sm:$0xf]
        %v246 = vld [vmem:[#allocation5 + $0x8] sm:$0xf]
        %v247 = vld [vmem:[#allocation5 + $0xc] sm:$0xf]
        %v248 = vld [vmem:[#allocation5 + $0x10] sm:$0xf]
        %v249 = vld [vmem:[#allocation5 + $0x14] sm:$0xf]
        %v250 = vld [vmem:[#allocation5 + $0x18] sm:$0xf]
        %v251 = vld [vmem:[#allocation5 + $0x1c] sm:$0xf]
        %v252 = vld [vmem:[#allocation5 + $0x20] sm:$0xf]
        %v253 = vld [vmem:[#allocation5 + $0x24] sm:$0xf]
        %v254 = vld [vmem:[#allocation5 + $0x28] sm:$0xf]
        %v255 = vld [vmem:[#allocation5 + $0x2c] sm:$0xf]
        %v256 = vld [vmem:[#allocation5 + $0x30] sm:$0xf]
        %v257 = vld [vmem:[#allocation5 + $0x34] sm:$0xf]
        %v258 = vld [vmem:[#allocation5 + $0x38] sm:$0xf]
        %v259 = vld [vmem:[#allocation5 + $0x3c] sm:$0xf]
        %v324 = vunpack.c.l.b16 %v180
        %v325 = vunpack.c.l.b16 %v181
        %v326 = vunpack.c.l.b16 %v182
        %v327 = vunpack.c.l.b16 %v183
        %v328 = vunpack.c.l.b16 %v184
        %v329 = vunpack.c.l.b16 %v185
        %v330 = vunpack.c.l.b16 %v186
        %v331 = vunpack.c.l.b16 %v187
        %v332 = vunpack.c.l.b16 %v188
        %v333 = vunpack.c.l.b16 %v189
        %v334 = vunpack.c.l.b16 %v190
        %v335 = vunpack.c.l.b16 %v191
        %v336 = vunpack.c.l.b16 %v192
        %v337 = vunpack.c.l.b16 %v193
        %v338 = vunpack.c.l.b16 %v194
        %v339 = vunpack.c.l.b16 %v195
        %v340 = vunpack.c.l.b16 %v196
        %v341 = vunpack.c.l.b16 %v197
        %v342 = vunpack.c.l.b16 %v198
        %v343 = vunpack.c.l.b16 %v199
        %v344 = vunpack.c.l.b16 %v200
        %v345 = vunpack.c.l.b16 %v201
        %v346 = vunpack.c.l.b16 %v202
        %v347 = vunpack.c.l.b16 %v203
        %v348 = vunpack.c.l.b16 %v204
        %v349 = vunpack.c.l.b16 %v205
        %v350 = vunpack.c.l.b16 %v206
        %v351 = vunpack.c.l.b16 %v207
        %v352 = vunpack.c.l.b16 %v208
        %v353 = vunpack.c.l.b16 %v209
        %v354 = vunpack.c.l.b16 %v210
        %v355 = vunpack.c.l.b16 %v211
        %v356 = vunpack.c.l.b16 %v212
        %v357 = vunpack.c.l.b16 %v213
        %v358 = vunpack.c.l.b16 %v214
        %v359 = vunpack.c.l.b16 %v215
        %v360 = vunpack.c.l.b16 %v216
        %v361 = vunpack.c.l.b16 %v217
        %v362 = vunpack.c.l.b16 %v218
        %v363 = vunpack.c.l.b16 %v219
        %v364 = vunpack.c.l.b16 %v220
        %v365 = vunpack.c.l.b16 %v221
        %v366 = vunpack.c.l.b16 %v222
        %v367 = vunpack.c.l.b16 %v223
        %v368 = vunpack.c.l.b16 %v224
        %v369 = vunpack.c.l.b16 %v225
        %v370 = vunpack.c.l.b16 %v226
        %v371 = vunpack.c.l.b16 %v227
        %v372 = vunpack.c.l.b16 %v228
        %v373 = vunpack.c.l.b16 %v229
        %v374 = vunpack.c.l.b16 %v230
        %v375 = vunpack.c.l.b16 %v231
        %v376 = vunpack.c.l.b16 %v232
        %v377 = vunpack.c.l.b16 %v233
        %v378 = vunpack.c.l.b16 %v234
        %v379 = vunpack.c.l.b16 %v235
        %v380 = vunpack.c.l.b16 %v236
        %v381 = vunpack.c.l.b16 %v237
        %v382 = vunpack.c.l.b16 %v238
        %v383 = vunpack.c.l.b16 %v239
        %v384 = vunpack.c.l.b16 %v240
        %v385 = vunpack.c.l.b16 %v241
        %v386 = vunpack.c.l.b16 %v242
        %v387 = vunpack.c.l.b16 %v243
        %v388 = vpack.c.b16 %v325, %v324
        %v389 = vpack.c.b16 %v327, %v326
        %v390 = vpack.c.b16 %v329, %v328
        %v391 = vpack.c.b16 %v331, %v330
        %v392 = vpack.c.b16 %v333, %v332
        %v393 = vpack.c.b16 %v335, %v334
        %v394 = vpack.c.b16 %v337, %v336
        %v395 = vpack.c.b16 %v339, %v338
        %v396 = vpack.c.b16 %v341, %v340
        %v397 = vpack.c.b16 %v343, %v342
        %v398 = vpack.c.b16 %v345, %v344
        %v399 = vpack.c.b16 %v347, %v346
        %v400 = vpack.c.b16 %v349, %v348
        %v401 = vpack.c.b16 %v351, %v350
        %v402 = vpack.c.b16 %v353, %v352
        %v403 = vpack.c.b16 %v355, %v354
        %v404 = vpack.c.b16 %v357, %v356
        %v405 = vpack.c.b16 %v359, %v358
        %v406 = vpack.c.b16 %v361, %v360
        %v407 = vpack.c.b16 %v363, %v362
        %v408 = vpack.c.b16 %v365, %v364
        %v409 = vpack.c.b16 %v367, %v366
        %v410 = vpack.c.b16 %v369, %v368
        %v411 = vpack.c.b16 %v371, %v370
        %v412 = vpack.c.b16 %v373, %v372
        %v413 = vpack.c.b16 %v375, %v374
        %v414 = vpack.c.b16 %v377, %v376
        %v415 = vpack.c.b16 %v379, %v378
        %v416 = vpack.c.b16 %v381, %v380
        %v417 = vpack.c.b16 %v383, %v382
        %v418 = vpack.c.b16 %v385, %v384
        %v419 = vpack.c.b16 %v387, %v386
        %v468 = vunpack.c.l.b16 %v244
        %v469 = vunpack.c.l.b16 %v245
        %v470 = vunpack.c.l.b16 %v246
        %v471 = vunpack.c.l.b16 %v247
        %v472 = vunpack.c.l.b16 %v248
        %v473 = vunpack.c.l.b16 %v249
        %v474 = vunpack.c.l.b16 %v250
        %v475 = vunpack.c.l.b16 %v251
        %v476 = vunpack.c.l.b16 %v252
        %v477 = vunpack.c.l.b16 %v253
        %v478 = vunpack.c.l.b16 %v254
        %v479 = vunpack.c.l.b16 %v255
        %v480 = vunpack.c.l.b16 %v256
        %v481 = vunpack.c.l.b16 %v257
        %v482 = vunpack.c.l.b16 %v258
        %v483 = vunpack.c.l.b16 %v259
        %v484 = vpack.c.b16 %v469, %v468
        %v485 = vpack.c.b16 %v471, %v470
        %v486 = vpack.c.b16 %v473, %v472
        %v487 = vpack.c.b16 %v475, %v474
        %v488 = vpack.c.b16 %v477, %v476
        %v489 = vpack.c.b16 %v479, %v478
        %v490 = vpack.c.b16 %v481, %v480
        %v491 = vpack.c.b16 %v483, %v482
        %500 = vmatprep.subr.bf16.mxu0 0
        %501 = vmatpush1.bf16.msra.mxu0 %v484
        %502 = vmatprep.subr.bf16.mxu0 0
        %503 = vmatpush1.bf16.msra.mxu0 %v485
        %504 = vmatprep.subr.bf16.mxu0 0
        %505 = vmatpush1.bf16.msra.mxu0 %v486
        %506 = vmatprep.subr.bf16.mxu0 0
        %507 = vmatpush1.bf16.msra.mxu0 %v487
        %508 = vmatprep.subr.bf16.mxu0 0
        %509 = vmatpush1.bf16.msra.mxu0 %v488
        %510 = vmatprep.subr.bf16.mxu0 0
        %511 = vmatpush1.bf16.msra.mxu0 %v489
        %512 = vmatprep.subr.bf16.mxu0 0
        %513 = vmatpush1.bf16.msra.mxu0 %v490
        %514 = vmatprep.subr.bf16.mxu0 0
        %515 = vmatpush1.bf16.msra.mxu0 %v491
        %516 = vmatprep.subr.bf16.mxu0 0
        %517 = vmatpush1.bf16.msra.mxu0 0
        %518 = vmatprep.subr.bf16.mxu0 0
        %519 = vmatpush1.bf16.msra.mxu0 0
        %520 = vmatprep.subr.bf16.mxu0 0
        %521 = vmatpush1.bf16.msra.mxu0 0
        %522 = vmatprep.subr.bf16.mxu0 0
        %523 = vmatpush1.bf16.msra.mxu0 0
        %524 = vmatprep.subr.bf16.mxu0 0
        %525 = vmatpush1.bf16.msra.mxu0 0
        %526 = vmatprep.subr.bf16.mxu0 0
        %527 = vmatpush1.bf16.msra.mxu0 0
        %528 = vmatprep.subr.bf16.mxu0 0
        %529 = vmatpush1.bf16.msra.mxu0 0
        %530 = vmatprep.subr.bf16.mxu0 0
        %531 = vmatpush1.bf16.msra.mxu0 0
        %532 = vmatprep.mubr.bf16.mxu0 0
        %533 = vmatmul.mubr.bf16.gmra.mrb[0].mxu0 %v388
        %v534 = vpop.f32.mrb[0].mxu0
        %v535 = vadd.f32 0.0, %v534
        %v536 = vpop.f32.mrb[0].mxu0
        %v537 = vpop.f32.mrb[0].mxu0
        %v538 = vadd.f32 0.0, %v537
        %v539 = vpop.f32.mrb[0].mxu0
        %540 = vmatprep.mubr.bf16.mxu0 0
        %541 = vmatmul.mubr.bf16.gmra.mrb[0].mxu0 %v389
        %v542 = vpop.f32.mrb[0].mxu0
        %v543 = vadd.f32 0.0, %v542
        %v544 = vpop.f32.mrb[0].mxu0
        %v545 = vpop.f32.mrb[0].mxu0
        %v546 = vadd.f32 0.0, %v545
        %v547 = vpop.f32.mrb[0].mxu0
        %548 = vmatprep.mubr.bf16.mxu0 0
        %549 = vmatmul.mubr.bf16.gmra.mrb[0].mxu0 %v390
        %v550 = vpop.f32.mrb[0].mxu0
        %v551 = vadd.f32 0.0, %v550
        %v552 = vpop.f32.mrb[0].mxu0
        %v553 = vpop.f32.mrb[0].mxu0
        %v554 = vadd.f32 0.0, %v553
        %v555 = vpop.f32.mrb[0].mxu0
        %556 = vmatprep.mubr.bf16.mxu0 0
        %557 = vmatmul.mubr.bf16.gmra.mrb[0].mxu0 %v391
        %v558 = vpop.f32.mrb[0].mxu0
        %v559 = vadd.f32 0.0, %v558
        %v560 = vpop.f32.mrb[0].mxu0
        %v561 = vpop.f32.mrb[0].mxu0
        %v562 = vadd.f32 0.0, %v561
        %v563 = vpop.f32.mrb[0].mxu0
        %564 = vmatprep.mubr.bf16.mxu0 0
        %565 = vmatmul.mubr.bf16.gmra.mrb[0].mxu0 %v392
        %v566 = vpop.f32.mrb[0].mxu0
        %v567 = vadd.f32 0.0, %v566
        %v568 = vpop.f32.mrb[0].mxu0
        %v569 = vpop.f32.mrb[0].mxu0
        %v570 = vadd.f32 0.0, %v569
        %v571 = vpop.f32.mrb[0].mxu0
        %572 = vmatprep.mubr.bf16.mxu0 0
        %573 = vmatmul.mubr.bf16.gmra.mrb[0].mxu0 %v393
        %v574 = vpop.f32.mrb[0].mxu0
        %v575 = vadd.f32 0.0, %v574
        %v576 = vpop.f32.mrb[0].mxu0
        %v577 = vpop.f32.mrb[0].mxu0
        %v578 = vadd.f32 0.0, %v577
        %v579 = vpop.f32.mrb[0].mxu0
        %580 = vmatprep.mubr.bf16.mxu0 0
        %581 = vmatmul.mubr.bf16.gmra.mrb[0].mxu0 %v394
        %v582 = vpop.f32.mrb[0].mxu0
        %v583 = vadd.f32 0.0, %v582
        %v584 = vpop.f32.mrb[0].mxu0
        %v585 = vpop.f32.mrb[0].mxu0
        %v586 = vadd.f32 0.0, %v585
        %v587 = vpop.f32.mrb[0].mxu0
        %588 = vmatprep.mubr.bf16.mxu0 0
        %589 = vmatmul.mubr.bf16.gmra.mrb[0].mxu0 %v395
        %v590 = vpop.f32.mrb[0].mxu0
        %v591 = vadd.f32 0.0, %v590
        %v592 = vpop.f32.mrb[0].mxu0
        %v593 = vpop.f32.mrb[0].mxu0
        %v594 = vadd.f32 0.0, %v593
        %v595 = vpop.f32.mrb[0].mxu0
        %596 = vmatprep.mubr.bf16.mxu0 0
        %597 = vmatmul.mubr.bf16.gmra.mrb[0].mxu0 %v396
        %v598 = vpop.f32.mrb[0].mxu0
        %v599 = vadd.f32 0.0, %v598
        %v600 = vpop.f32.mrb[0].mxu0
        %v601 = vpop.f32.mrb[0].mxu0
        %v602 = vadd.f32 0.0, %v601
        %v603 = vpop.f32.mrb[0].mxu0
        %604 = vmatprep.mubr.bf16.mxu0 0
        %605 = vmatmul.mubr.bf16.gmra.mrb[0].mxu0 %v397
        %v606 = vpop.f32.mrb[0].mxu0
        %v607 = vadd.f32 0.0, %v606
        %v608 = vpop.f32.mrb[0].mxu0
        %v609 = vpop.f32.mrb[0].mxu0
        %v610 = vadd.f32 0.0, %v609
        %v611 = vpop.f32.mrb[0].mxu0
        %612 = vmatprep.mubr.bf16.mxu0 0
        %613 = vmatmul.mubr.bf16.gmra.mrb[0].mxu0 %v398
        %v614 = vpop.f32.mrb[0].mxu0
        %v615 = vadd.f32 0.0, %v614
        %v616 = vpop.f32.mrb[0].mxu0
        %v617 = vpop.f32.mrb[0].mxu0
        %v618 = vadd.f32 0.0, %v617
        %v619 = vpop.f32.mrb[0].mxu0
        %620 = vmatprep.mubr.bf16.mxu0 0
        %621 = vmatmul.mubr.bf16.gmra.mrb[0].mxu0 %v399
        %v622 = vpop.f32.mrb[0].mxu0
        %v623 = vadd.f32 0.0, %v622
        %v624 = vpop.f32.mrb[0].mxu0
        %v625 = vpop.f32.mrb[0].mxu0
        %v626 = vadd.f32 0.0, %v625
        %v627 = vpop.f32.mrb[0].mxu0
        %628 = vmatprep.mubr.bf16.mxu0 0
        %629 = vmatmul.mubr.bf16.gmra.mrb[0].mxu0 %v400
        %v630 = vpop.f32.mrb[0].mxu0
        %v631 = vadd.f32 0.0, %v630
        %v632 = vpop.f32.mrb[0].mxu0
        %v633 = vpop.f32.mrb[0].mxu0
        %v634 = vadd.f32 0.0, %v633
        %v635 = vpop.f32.mrb[0].mxu0
        %636 = vmatprep.mubr.bf16.mxu0 0
        %637 = vmatmul.mubr.bf16.gmra.mrb[0].mxu0 %v401
        %v638 = vpop.f32.mrb[0].mxu0
        %v639 = vadd.f32 0.0, %v638
        %v640 = vpop.f32.mrb[0].mxu0
        %v641 = vpop.f32.mrb[0].mxu0
        %v642 = vadd.f32 0.0, %v641
        %v643 = vpop.f32.mrb[0].mxu0
        %644 = vmatprep.mubr.bf16.mxu0 0
        %645 = vmatmul.mubr.bf16.gmra.mrb[0].mxu0 %v402
        %v646 = vpop.f32.mrb[0].mxu0
        %v647 = vadd.f32 0.0, %v646
        %v648 = vpop.f32.mrb[0].mxu0
        %v649 = vpop.f32.mrb[0].mxu0
        %v650 = vadd.f32 0.0, %v649
        %v651 = vpop.f32.mrb[0].mxu0
        %652 = vmatprep.mubr.bf16.mxu0 0
        %653 = vmatmul.mubr.bf16.gmra.mrb[0].mxu0 %v403
        %v654 = vpop.f32.mrb[0].mxu0
        %v655 = vadd.f32 0.0, %v654
        %v656 = vpop.f32.mrb[0].mxu0
        %v657 = vpop.f32.mrb[0].mxu0
        %v658 = vadd.f32 0.0, %v657
        %v659 = vpop.f32.mrb[0].mxu0
        %660 = vmatprep.mubr.bf16.mxu0 0
        %661 = vmatmul.mubr.bf16.gmra.mrb[0].mxu0 %v404
        %v662 = vpop.f32.mrb[0].mxu0
        %v663 = vadd.f32 0.0, %v662
        %v664 = vpop.f32.mrb[0].mxu0
        %v665 = vpop.f32.mrb[0].mxu0
        %v666 = vadd.f32 0.0, %v665
        %v667 = vpop.f32.mrb[0].mxu0
        %668 = vmatprep.mubr.bf16.mxu0 0
        %669 = vmatmul.mubr.bf16.gmra.mrb[0].mxu0 %v405
        %v670 = vpop.f32.mrb[0].mxu0
        %v671 = vadd.f32 0.0, %v670
        %v672 = vpop.f32.mrb[0].mxu0
        %v673 = vpop.f32.mrb[0].mxu0
        %v674 = vadd.f32 0.0, %v673
        %v675 = vpop.f32.mrb[0].mxu0
        %676 = vmatprep.mubr.bf16.mxu0 0
        %677 = vmatmul.mubr.bf16.gmra.mrb[0].mxu0 %v406
        %v678 = vpop.f32.mrb[0].mxu0
        %v679 = vadd.f32 0.0, %v678
        %v680 = vpop.f32.mrb[0].mxu0
        %v681 = vpop.f32.mrb[0].mxu0
        %v682 = vadd.f32 0.0, %v681
        %v683 = vpop.f32.mrb[0].mxu0
        %684 = vmatprep.mubr.bf16.mxu0 0
        %685 = vmatmul.mubr.bf16.gmra.mrb[0].mxu0 %v407
        %v686 = vpop.f32.mrb[0].mxu0
        %v687 = vadd.f32 0.0, %v686
        %v688 = vpop.f32.mrb[0].mxu0
        %v689 = vpop.f32.mrb[0].mxu0
        %v690 = vadd.f32 0.0, %v689
        %v691 = vpop.f32.mrb[0].mxu0
        %692 = vmatprep.mubr.bf16.mxu0 0
        %693 = vmatmul.mubr.bf16.gmra.mrb[0].mxu0 %v408
        %v694 = vpop.f32.mrb[0].mxu0
        %v695 = vadd.f32 0.0, %v694
        %v696 = vpop.f32.mrb[0].mxu0
        %v697 = vpop.f32.mrb[0].mxu0
        %v698 = vadd.f32 0.0, %v697
        %v699 = vpop.f32.mrb[0].mxu0
        %700 = vmatprep.mubr.bf16.mxu0 0
        %701 = vmatmul.mubr.bf16.gmra.mrb[0].mxu0 %v409
        %v702 = vpop.f32.mrb[0].mxu0
        %v703 = vadd.f32 0.0, %v702
        %v704 = vpop.f32.mrb[0].mxu0
        %v705 = vpop.f32.mrb[0].mxu0
        %v706 = vadd.f32 0.0, %v705
        %v707 = vpop.f32.mrb[0].mxu0
        %708 = vmatprep.mubr.bf16.mxu0 0
        %709 = vmatmul.mubr.bf16.gmra.mrb[0].mxu0 %v410
        %v710 = vpop.f32.mrb[0].mxu0
        %v711 = vadd.f32 0.0, %v710
        %v712 = vpop.f32.mrb[0].mxu0
        %v713 = vpop.f32.mrb[0].mxu0
        %v714 = vadd.f32 0.0, %v713
        %v715 = vpop.f32.mrb[0].mxu0
        %716 = vmatprep.mubr.bf16.mxu0 0
        %717 = vmatmul.mubr.bf16.gmra.mrb[0].mxu0 %v411
        %v718 = vpop.f32.mrb[0].mxu0
        %v719 = vadd.f32 0.0, %v718
        %v720 = vpop.f32.mrb[0].mxu0
        %v721 = vpop.f32.mrb[0].mxu0
        %v722 = vadd.f32 0.0, %v721
        %v723 = vpop.f32.mrb[0].mxu0
        %724 = vmatprep.mubr.bf16.mxu0 0
        %725 = vmatmul.mubr.bf16.gmra.mrb[0].mxu0 %v412
        %v726 = vpop.f32.mrb[0].mxu0
        %v727 = vadd.f32 0.0, %v726
        %v728 = vpop.f32.mrb[0].mxu0
        %v729 = vpop.f32.mrb[0].mxu0
        %v730 = vadd.f32 0.0, %v729
        %v731 = vpop.f32.mrb[0].mxu0
        %732 = vmatprep.mubr.bf16.mxu0 0
        %733 = vmatmul.mubr.bf16.gmra.mrb[0].mxu0 %v413
        %v734 = vpop.f32.mrb[0].mxu0
        %v735 = vadd.f32 0.0, %v734
        %v736 = vpop.f32.mrb[0].mxu0
        %v737 = vpop.f32.mrb[0].mxu0
        %v738 = vadd.f32 0.0, %v737
        %v739 = vpop.f32.mrb[0].mxu0
        %740 = vmatprep.mubr.bf16.mxu0 0
        %741 = vmatmul.mubr.bf16.gmra.mrb[0].mxu0 %v414
        %v742 = vpop.f32.mrb[0].mxu0
        %v743 = vadd.f32 0.0, %v742
        %v744 = vpop.f32.mrb[0].mxu0
        %v745 = vpop.f32.mrb[0].mxu0
        %v746 = vadd.f32 0.0, %v745
        %v747 = vpop.f32.mrb[0].mxu0
        %748 = vmatprep.mubr.bf16.mxu0 0
        %749 = vmatmul.mubr.bf16.gmra.mrb[0].mxu0 %v415
        %v750 = vpop.f32.mrb[0].mxu0
        %v751 = vadd.f32 0.0, %v750
        %v752 = vpop.f32.mrb[0].mxu0
        %v753 = vpop.f32.mrb[0].mxu0
        %v754 = vadd.f32 0.0, %v753
        %v755 = vpop.f32.mrb[0].mxu0
        %756 = vmatprep.mubr.bf16.mxu0 0
        %757 = vmatmul.mubr.bf16.gmra.mrb[0].mxu0 %v416
        %v758 = vpop.f32.mrb[0].mxu0
        %v759 = vadd.f32 0.0, %v758
        %v760 = vpop.f32.mrb[0].mxu0
        %v761 = vpop.f32.mrb[0].mxu0
        %v762 = vadd.f32 0.0, %v761
        %v763 = vpop.f32.mrb[0].mxu0
        %764 = vmatprep.mubr.bf16.mxu0 0
        %765 = vmatmul.mubr.bf16.gmra.mrb[0].mxu0 %v417
        %v766 = vpop.f32.mrb[0].mxu0
        %v767 = vadd.f32 0.0, %v766
        %v768 = vpop.f32.mrb[0].mxu0
        %v769 = vpop.f32.mrb[0].mxu0
        %v770 = vadd.f32 0.0, %v769
        %v771 = vpop.f32.mrb[0].mxu0
        %772 = vmatprep.mubr.bf16.mxu0 0
        %773 = vmatmul.mubr.bf16.gmra.mrb[0].mxu0 %v418
        %v774 = vpop.f32.mrb[0].mxu0
        %v775 = vadd.f32 0.0, %v774
        %v776 = vpop.f32.mrb[0].mxu0
        %v777 = vpop.f32.mrb[0].mxu0
        %v778 = vadd.f32 0.0, %v777
        %v779 = vpop.f32.mrb[0].mxu0
        %780 = vmatprep.mubr.bf16.mxu0 0
        %781 = vmatmul.mubr.bf16.gmra.mrb[0].mxu0 %v419
        %v782 = vpop.f32.mrb[0].mxu0
        %v783 = vadd.f32 0.0, %v782
        %v784 = vpop.f32.mrb[0].mxu0
        %v785 = vpop.f32.mrb[0].mxu0
        %v786 = vadd.f32 0.0, %v785
        %v787 = vpop.f32.mrb[0].mxu0
        %788 = vdwg.mxu0
        %v789 = vmul.f32 %v535, 0.2
        %v790 = vmul.f32 %v538, 0.2
        %v791 = vmul.f32 %v543, 0.2
        %v792 = vmul.f32 %v546, 0.2
        %v793 = vmul.f32 %v551, 0.2
        %v794 = vmul.f32 %v554, 0.2
        %v795 = vmul.f32 %v559, 0.2
        %v796 = vmul.f32 %v562, 0.2
        %v797 = vmul.f32 %v567, 0.2
        %v798 = vmul.f32 %v570, 0.2
        %v799 = vmul.f32 %v575, 0.2
        %v800 = vmul.f32 %v578, 0.2
        %v801 = vmul.f32 %v583, 0.2
        %v802 = vmul.f32 %v586, 0.2
        %v803 = vmul.f32 %v591, 0.2
        %v804 = vmul.f32 %v594, 0.2
        %v805 = vmul.f32 %v599, 0.2
        %v806 = vmul.f32 %v602, 0.2
        %v807 = vmul.f32 %v607, 0.2
        %v808 = vmul.f32 %v610, 0.2
        %v809 = vmul.f32 %v615, 0.2
        %v810 = vmul.f32 %v618, 0.2
        %v811 = vmul.f32 %v623, 0.2
        %v812 = vmul.f32 %v626, 0.2
        %v813 = vmul.f32 %v631, 0.2
        %v814 = vmul.f32 %v634, 0.2
        %v815 = vmul.f32 %v639, 0.2
        %v816 = vmul.f32 %v642, 0.2
        %v817 = vmul.f32 %v647, 0.2
        %v818 = vmul.f32 %v650, 0.2
        %v819 = vmul.f32 %v655, 0.2
        %v820 = vmul.f32 %v658, 0.2
        %v821 = vmul.f32 %v663, 0.2
        %v822 = vmul.f32 %v666, 0.2
        %v823 = vmul.f32 %v671, 0.2
        %v824 = vmul.f32 %v674, 0.2
        %v825 = vmul.f32 %v679, 0.2
        %v826 = vmul.f32 %v682, 0.2
        %v827 = vmul.f32 %v687, 0.2
        %v828 = vmul.f32 %v690, 0.2
        %v829 = vmul.f32 %v695, 0.2
        %v830 = vmul.f32 %v698, 0.2
        %v831 = vmul.f32 %v703, 0.2
        %v832 = vmul.f32 %v706, 0.2
        %v833 = vmul.f32 %v711, 0.2
        %v834 = vmul.f32 %v714, 0.2
        %v835 = vmul.f32 %v719, 0.2
        %v836 = vmul.f32 %v722, 0.2
        %v837 = vmul.f32 %v727, 0.2
        %v838 = vmul.f32 %v730, 0.2
        %v839 = vmul.f32 %v735, 0.2
        %v840 = vmul.f32 %v738, 0.2
        %v841 = vmul.f32 %v743, 0.2
        %v842 = vmul.f32 %v746, 0.2
        %v843 = vmul.f32 %v751, 0.2
        %v844 = vmul.f32 %v754, 0.2
        %v845 = vmul.f32 %v759, 0.2
        %v846 = vmul.f32 %v762, 0.2
        %v847 = vmul.f32 %v767, 0.2
        %v848 = vmul.f32 %v770, 0.2
        %v849 = vmul.f32 %v775, 0.2
        %v850 = vmul.f32 %v778, 0.2
        %v851 = vmul.f32 %v783, 0.2
        %v852 = vmul.f32 %v786, 0.2
        %v853 = vmax.f32 %v535, %v789
        %v854 = vmax.f32 %v538, %v790
        %v855 = vmax.f32 %v543, %v791
        %v856 = vmax.f32 %v546, %v792
        %v857 = vmax.f32 %v551, %v793
        %v858 = vmax.f32 %v554, %v794
        %v859 = vmax.f32 %v559, %v795
        %v860 = vmax.f32 %v562, %v796
        %v861 = vmax.f32 %v567, %v797
        %v862 = vmax.f32 %v570, %v798
        %v863 = vmax.f32 %v575, %v799
        %v864 = vmax.f32 %v578, %v800
        %v865 = vmax.f32 %v583, %v801
        %v866 = vmax.f32 %v586, %v802
        %v867 = vmax.f32 %v591, %v803
        %v868 = vmax.f32 %v594, %v804
        %v869 = vmax.f32 %v599, %v805
        %v870 = vmax.f32 %v602, %v806
        %v871 = vmax.f32 %v607, %v807
        %v872 = vmax.f32 %v610, %v808
        %v873 = vmax.f32 %v615, %v809
        %v874 = vmax.f32 %v618, %v810
        %v875 = vmax.f32 %v623, %v811
        %v876 = vmax.f32 %v626, %v812
        %v877 = vmax.f32 %v631, %v813
        %v878 = vmax.f32 %v634, %v814
        %v879 = vmax.f32 %v639, %v815
        %v880 = vmax.f32 %v642, %v816
        %v881 = vmax.f32 %v647, %v817
        %v882 = vmax.f32 %v650, %v818
        %v883 = vmax.f32 %v655, %v819
        %v884 = vmax.f32 %v658, %v820
        %v885 = vmax.f32 %v663, %v821
        %v886 = vmax.f32 %v666, %v822
        %v887 = vmax.f32 %v671, %v823
        %v888 = vmax.f32 %v674, %v824
        %v889 = vmax.f32 %v679, %v825
        %v890 = vmax.f32 %v682, %v826
        %v891 = vmax.f32 %v687, %v827
        %v892 = vmax.f32 %v690, %v828
        %v893 = vmax.f32 %v695, %v829
        %v894 = vmax.f32 %v698, %v830
        %v895 = vmax.f32 %v703, %v831
        %v896 = vmax.f32 %v706, %v832
        %v897 = vmax.f32 %v711, %v833
        %v898 = vmax.f32 %v714, %v834
        %v899 = vmax.f32 %v719, %v835
        %v900 = vmax.f32 %v722, %v836
        %v901 = vmax.f32 %v727, %v837
        %v902 = vmax.f32 %v730, %v838
        %v903 = vmax.f32 %v735, %v839
        %v904 = vmax.f32 %v738, %v840
        %v905 = vmax.f32 %v743, %v841
        %v906 = vmax.f32 %v746, %v842
        %v907 = vmax.f32 %v751, %v843
        %v908 = vmax.f32 %v754, %v844
        %v909 = vmax.f32 %v759, %v845
        %v910 = vmax.f32 %v762, %v846
        %v911 = vmax.f32 %v767, %v847
        %v912 = vmax.f32 %v770, %v848
        %v913 = vmax.f32 %v775, %v849
        %v914 = vmax.f32 %v778, %v850
        %v915 = vmax.f32 %v783, %v851
        %v916 = vmax.f32 %v786, %v852
        %v917 = vpack.c.bf16 %v854, %v853
        %v918 = vpack.c.bf16 %v856, %v855
        %v919 = vpack.c.bf16 %v858, %v857
        %v920 = vpack.c.bf16 %v860, %v859
        %v921 = vpack.c.bf16 %v862, %v861
        %v922 = vpack.c.bf16 %v864, %v863
        %v923 = vpack.c.bf16 %v866, %v865
        %v924 = vpack.c.bf16 %v868, %v867
        %v925 = vpack.c.bf16 %v870, %v869
        %v926 = vpack.c.bf16 %v872, %v871
        %v927 = vpack.c.bf16 %v874, %v873
        %v928 = vpack.c.bf16 %v876, %v875
        %v929 = vpack.c.bf16 %v878, %v877
        %v930 = vpack.c.bf16 %v880, %v879
        %v931 = vpack.c.bf16 %v882, %v881
        %v932 = vpack.c.bf16 %v884, %v883
        %v933 = vpack.c.bf16 %v886, %v885
        %v934 = vpack.c.bf16 %v888, %v887
        %v935 = vpack.c.bf16 %v890, %v889
        %v936 = vpack.c.bf16 %v892, %v891
        %v937 = vpack.c.bf16 %v894, %v893
        %v938 = vpack.c.bf16 %v896, %v895
        %v939 = vpack.c.bf16 %v898, %v897
        %v940 = vpack.c.bf16 %v900, %v899
        %v941 = vpack.c.bf16 %v902, %v901
        %v942 = vpack.c.bf16 %v904, %v903
        %v943 = vpack.c.bf16 %v906, %v905
        %v944 = vpack.c.bf16 %v908, %v907
        %v945 = vpack.c.bf16 %v910, %v909
        %v946 = vpack.c.bf16 %v912, %v911
        %v947 = vpack.c.bf16 %v914, %v913
        %v948 = vpack.c.bf16 %v916, %v915
        %v981 = vunpack.c.l.b16 %v917
        %v982 = vunpack.c.h.b16 %v917
        %v983 = vunpack.c.l.b16 %v918
        %v984 = vunpack.c.h.b16 %v918
        %v985 = vunpack.c.l.b16 %v919
        %v986 = vunpack.c.h.b16 %v919
        %v987 = vunpack.c.l.b16 %v920
        %v988 = vunpack.c.h.b16 %v920
        %v989 = vunpack.c.l.b16 %v921
        %v990 = vunpack.c.h.b16 %v921
        %v991 = vunpack.c.l.b16 %v922
        %v992 = vunpack.c.h.b16 %v922
        %v993 = vunpack.c.l.b16 %v923
        %v994 = vunpack.c.h.b16 %v923
        %v995 = vunpack.c.l.b16 %v924
        %v996 = vunpack.c.h.b16 %v924
        %v997 = vunpack.c.l.b16 %v925
        %v998 = vunpack.c.h.b16 %v925
        %v999 = vunpack.c.l.b16 %v926
        %v1000 = vunpack.c.h.b16 %v926
        %v1001 = vunpack.c.l.b16 %v927
        %v1002 = vunpack.c.h.b16 %v927
        %v1003 = vunpack.c.l.b16 %v928
        %v1004 = vunpack.c.h.b16 %v928
        %v1005 = vunpack.c.l.b16 %v929
        %v1006 = vunpack.c.h.b16 %v929
        %v1007 = vunpack.c.l.b16 %v930
        %v1008 = vunpack.c.h.b16 %v930
        %v1009 = vunpack.c.l.b16 %v931
        %v1010 = vunpack.c.h.b16 %v931
        %v1011 = vunpack.c.l.b16 %v932
        %v1012 = vunpack.c.h.b16 %v932
        %v1013 = vunpack.c.l.b16 %v933
        %v1014 = vunpack.c.h.b16 %v933
        %v1015 = vunpack.c.l.b16 %v934
        %v1016 = vunpack.c.h.b16 %v934
        %v1017 = vunpack.c.l.b16 %v935
        %v1018 = vunpack.c.h.b16 %v935
        %v1019 = vunpack.c.l.b16 %v936
        %v1020 = vunpack.c.h.b16 %v936
        %v1021 = vunpack.c.l.b16 %v937
        %v1022 = vunpack.c.h.b16 %v937
        %v1023 = vunpack.c.l.b16 %v938
        %v1024 = vunpack.c.h.b16 %v938
        %v1025 = vunpack.c.l.b16 %v939
        %v1026 = vunpack.c.h.b16 %v939
        %v1027 = vunpack.c.l.b16 %v940
        %v1028 = vunpack.c.h.b16 %v940
        %v1029 = vunpack.c.l.b16 %v941
        %v1030 = vunpack.c.h.b16 %v941
        %v1031 = vunpack.c.l.b16 %v942
        %v1032 = vunpack.c.h.b16 %v942
        %v1033 = vunpack.c.l.b16 %v943
        %v1034 = vunpack.c.h.b16 %v943
        %v1035 = vunpack.c.l.b16 %v944
        %v1036 = vunpack.c.h.b16 %v944
        %v1037 = vunpack.c.l.b16 %v945
        %v1038 = vunpack.c.h.b16 %v945
        %v1039 = vunpack.c.l.b16 %v946
        %v1040 = vunpack.c.h.b16 %v946
        %v1041 = vunpack.c.l.b16 %v947
        %v1042 = vunpack.c.h.b16 %v947
        %v1043 = vunpack.c.l.b16 %v948
        %v1044 = vunpack.c.h.b16 %v948
        %v1045 = vpack.c.b16 %v981, %v981
        %v1046 = vpack.c.b16 %v982, %v982
        %v1047 = vpack.c.b16 %v983, %v983
        %v1048 = vpack.c.b16 %v984, %v984
        %v1049 = vpack.c.b16 %v985, %v985
        %v1050 = vpack.c.b16 %v986, %v986
        %v1051 = vpack.c.b16 %v987, %v987
        %v1052 = vpack.c.b16 %v988, %v988
        %v1053 = vpack.c.b16 %v989, %v989
        %v1054 = vpack.c.b16 %v990, %v990
        %v1055 = vpack.c.b16 %v991, %v991
        %v1056 = vpack.c.b16 %v992, %v992
        %v1057 = vpack.c.b16 %v993, %v993
        %v1058 = vpack.c.b16 %v994, %v994
        %v1059 = vpack.c.b16 %v995, %v995
        %v1060 = vpack.c.b16 %v996, %v996
        %v1061 = vpack.c.b16 %v997, %v997
        %v1062 = vpack.c.b16 %v998, %v998
        %v1063 = vpack.c.b16 %v999, %v999
        %v1064 = vpack.c.b16 %v1000, %v1000
        %v1065 = vpack.c.b16 %v1001, %v1001
        %v1066 = vpack.c.b16 %v1002, %v1002
        %v1067 = vpack.c.b16 %v1003, %v1003
        %v1068 = vpack.c.b16 %v1004, %v1004
        %v1069 = vpack.c.b16 %v1005, %v1005
        %v1070 = vpack.c.b16 %v1006, %v1006
        %v1071 = vpack.c.b16 %v1007, %v1007
        %v1072 = vpack.c.b16 %v1008, %v1008
        %v1073 = vpack.c.b16 %v1009, %v1009
        %v1074 = vpack.c.b16 %v1010, %v1010
        %v1075 = vpack.c.b16 %v1011, %v1011
        %v1076 = vpack.c.b16 %v1012, %v1012
        %v1077 = vpack.c.b16 %v1013, %v1013
        %v1078 = vpack.c.b16 %v1014, %v1014
        %v1079 = vpack.c.b16 %v1015, %v1015
        %v1080 = vpack.c.b16 %v1016, %v1016
        %v1081 = vpack.c.b16 %v1017, %v1017
        %v1082 = vpack.c.b16 %v1018, %v1018
        %v1083 = vpack.c.b16 %v1019, %v1019
        %v1084 = vpack.c.b16 %v1020, %v1020
        %v1085 = vpack.c.b16 %v1021, %v1021
        %v1086 = vpack.c.b16 %v1022, %v1022
        %v1087 = vpack.c.b16 %v1023, %v1023
        %v1088 = vpack.c.b16 %v1024, %v1024
        %v1089 = vpack.c.b16 %v1025, %v1025
        %v1090 = vpack.c.b16 %v1026, %v1026
        %v1091 = vpack.c.b16 %v1027, %v1027
        %v1092 = vpack.c.b16 %v1028, %v1028
        %v1093 = vpack.c.b16 %v1029, %v1029
        %v1094 = vpack.c.b16 %v1030, %v1030
        %v1095 = vpack.c.b16 %v1031, %v1031
        %v1096 = vpack.c.b16 %v1032, %v1032
        %v1097 = vpack.c.b16 %v1033, %v1033
        %v1098 = vpack.c.b16 %v1034, %v1034
        %v1099 = vpack.c.b16 %v1035, %v1035
        %v1100 = vpack.c.b16 %v1036, %v1036
        %v1101 = vpack.c.b16 %v1037, %v1037
        %v1102 = vpack.c.b16 %v1038, %v1038
        %v1103 = vpack.c.b16 %v1039, %v1039
        %v1104 = vpack.c.b16 %v1040, %v1040
        %v1105 = vpack.c.b16 %v1041, %v1041
        %v1106 = vpack.c.b16 %v1042, %v1042
        %v1107 = vpack.c.b16 %v1043, %v1043
        %v1108 = vpack.c.b16 %v1044, %v1044
        %1173 = vst [vmem:[%s176] sm:$0xf] %v1045
        %1174 = vst [vmem:[%s176 + $0x4] sm:$0xf] %v1046
        %1175 = vst [vmem:[%s176 + $0x8] sm:$0xf] %v1047
        %1176 = vst [vmem:[%s176 + $0xc] sm:$0xf] %v1048
        %1177 = vst [vmem:[%s176 + $0x10] sm:$0xf] %v1049
        %1178 = vst [vmem:[%s176 + $0x14] sm:$0xf] %v1050
        %1179 = vst [vmem:[%s176 + $0x18] sm:$0xf] %v1051
        %1180 = vst [vmem:[%s176 + $0x1c] sm:$0xf] %v1052
        %1181 = vst [vmem:[%s176 + $0x20] sm:$0xf] %v1053
        %1182 = vst [vmem:[%s176 + $0x24] sm:$0xf] %v1054
        %1183 = vst [vmem:[%s176 + $0x28] sm:$0xf] %v1055
        %1184 = vst [vmem:[%s176 + $0x2c] sm:$0xf] %v1056
        %1185 = vst [vmem:[%s176 + $0x30] sm:$0xf] %v1057
        %1186 = vst [vmem:[%s176 + $0x34] sm:$0xf] %v1058
        %1187 = vst [vmem:[%s176 + $0x38] sm:$0xf] %v1059
        %1188 = vst [vmem:[%s176 + $0x3c] sm:$0xf] %v1060
        %1189 = vst [vmem:[%s176 + $0x40] sm:$0xf] %v1061
        %1190 = vst [vmem:[%s176 + $0x44] sm:$0xf] %v1062
        %1191 = vst [vmem:[%s176 + $0x48] sm:$0xf] %v1063
        %1192 = vst [vmem:[%s176 + $0x4c] sm:$0xf] %v1064
        %1193 = vst [vmem:[%s176 + $0x50] sm:$0xf] %v1065
        %1194 = vst [vmem:[%s176 + $0x54] sm:$0xf] %v1066
        %1195 = vst [vmem:[%s176 + $0x58] sm:$0xf] %v1067
        %1196 = vst [vmem:[%s176 + $0x5c] sm:$0xf] %v1068
        %1197 = vst [vmem:[%s176 + $0x60] sm:$0xf] %v1069
        %1198 = vst [vmem:[%s176 + $0x64] sm:$0xf] %v1070
        %1199 = vst [vmem:[%s176 + $0x68] sm:$0xf] %v1071
        %1200 = vst [vmem:[%s176 + $0x6c] sm:$0xf] %v1072
        %1201 = vst [vmem:[%s176 + $0x70] sm:$0xf] %v1073
        %1202 = vst [vmem:[%s176 + $0x74] sm:$0xf] %v1074
        %1203 = vst [vmem:[%s176 + $0x78] sm:$0xf] %v1075
        %1204 = vst [vmem:[%s176 + $0x7c] sm:$0xf] %v1076
        %1205 = vst [vmem:[%s176 + $0x80] sm:$0xf] %v1077
        %1206 = vst [vmem:[%s176 + $0x84] sm:$0xf] %v1078
        %1207 = vst [vmem:[%s176 + $0x88] sm:$0xf] %v1079
        %1208 = vst [vmem:[%s176 + $0x8c] sm:$0xf] %v1080
        %1209 = vst [vmem:[%s176 + $0x90] sm:$0xf] %v1081
        %1210 = vst [vmem:[%s176 + $0x94] sm:$0xf] %v1082
        %1211 = vst [vmem:[%s176 + $0x98] sm:$0xf] %v1083
        %1212 = vst [vmem:[%s176 + $0x9c] sm:$0xf] %v1084
        %1213 = vst [vmem:[%s176 + $0xa0] sm:$0xf] %v1085
        %1214 = vst [vmem:[%s176 + $0xa4] sm:$0xf] %v1086
        %1215 = vst [vmem:[%s176 + $0xa8] sm:$0xf] %v1087
        %1216 = vst [vmem:[%s176 + $0xac] sm:$0xf] %v1088
        %1217 = vst [vmem:[%s176 + $0xb0] sm:$0xf] %v1089
        %1218 = vst [vmem:[%s176 + $0xb4] sm:$0xf] %v1090
        %1219 = vst [vmem:[%s176 + $0xb8] sm:$0xf] %v1091
        %1220 = vst [vmem:[%s176 + $0xbc] sm:$0xf] %v1092
        %1221 = vst [vmem:[%s176 + $0xc0] sm:$0xf] %v1093
        %1222 = vst [vmem:[%s176 + $0xc4] sm:$0xf] %v1094
        %1223 = vst [vmem:[%s176 + $0xc8] sm:$0xf] %v1095
        %1224 = vst [vmem:[%s176 + $0xcc] sm:$0xf] %v1096
        %1225 = vst [vmem:[%s176 + $0xd0] sm:$0xf] %v1097
        %1226 = vst [vmem:[%s176 + $0xd4] sm:$0xf] %v1098
        %1227 = vst [vmem:[%s176 + $0xd8] sm:$0xf] %v1099
        %1228 = vst [vmem:[%s176 + $0xdc] sm:$0xf] %v1100
        %1229 = vst [vmem:[%s176 + $0xe0] sm:$0xf] %v1101
        %1230 = vst [vmem:[%s176 + $0xe4] sm:$0xf] %v1102
        %1231 = vst [vmem:[%s176 + $0xe8] sm:$0xf] %v1103
        %1232 = vst [vmem:[%s176 + $0xec] sm:$0xf] %v1104
        %1233 = vst [vmem:[%s176 + $0xf0] sm:$0xf] %v1105
        %1234 = vst [vmem:[%s176 + $0xf4] sm:$0xf] %v1106
        %1235 = vst [vmem:[%s176 + $0xf8] sm:$0xf] %v1107
        %1236 = vst [vmem:[%s176 + $0xfc] sm:$0xf] %v1108
        %s1237 = sand.u32 %s75, 1
        %s1238 = scalar_lea.sflag [#allocation4], %s1237
        %s1239 = sand.u32 %s75, 1
        %s1240 = smul.addr %s1239, 256
        %s1241 = scalar_lea.vmem [#allocation7], %s1240
        // Predicated region
        $region37: #{critic_forward.4} parent=27 // pred_check
          %p1242 = pneg %p85
        $region38: #{critic_forward.4} parent=27 // pred_check_branch
          %1244 = sbr.rel (%p1242) target = $region40
        $region39: #{critic_forward.4} parent=27 // pred_region
          %s1245 = smul.u32 64, %s20
          %s1247 = ssub.s32 4096, 4096
          %1248 = vsyncadd %s1238, %s1247
          %s1249 = smul.addr %s1245, 64
          %s1250 = scalar_lea.hbm %s2, %s1249
          %s1251 = sshll.u32 %s1241, 4
          %s1252 = int_to_ptr.vmem [resolvable:$true] %s1251
          %1257 = dma.vmem_to_hbm [thread:$0]  %s1252, 4096, %s1250, %s1238, 64, 64, 4
        $region40: #{critic_forward.4} parent=27 // pred_fallthru
          _
      $region28: #{critic_forward.4} parent=5 // pred_fallthru
        _
      %p1258 = scmp.le.s32.totalorder 2, %s15
      // Predicated region
      $region41: #{critic_forward.4} parent=5 // pred_check
        %p1259 = pneg %p1258
      $region42: #{critic_forward.4} parent=5 // pred_check_branch
        %1261 = sbr.rel (%p1259) target = $region44
      $region43: #{critic_forward.4} parent=5 // pred_region
        %s1262 = ssub.s32 %s15, 2
        // Predicated region
        $region45: #{critic_forward.4} parent=43 // pred_check
          %p1263 = pneg %p91
        $region46: #{critic_forward.4} parent=43 // pred_check_branch
          %1265 = sbr.rel (%p1263) target = $region48
        $region47: #{critic_forward.4} parent=43 // pred_region
          %s1266 = sand.u32 %s76, 1
          %s1267 = scalar_lea.sflag [#allocation4], %s1266
          %s1268 = sand.u32 %s76, 1
          %s1269 = smul.addr %s1268, 256
          %s1270 = scalar_lea.vmem [#allocation7], %s1269
          %1271 = dma.done %s1267, 4096
        $region48: #{critic_forward.4} parent=43 // pred_fallthru
          _
      $region44: #{critic_forward.4} parent=5 // pred_fallthru
        _
    $region6: #{critic_forward.4} parent=1 // loop_footer
      %s19 = sadd.s32 1, %s15
    $region7: #{critic_forward.4} parent=1 // loop_footer_branch
      %14 = sbr.rel target = $region3
    $region8: #{critic_forward.4} parent=1 // loop_exit
      _
    %1272 = vsyncpa [#allocation3], 1
    %s1273 = scalar_lea.sflag [#allocation3], 1
    %1274 = vsyncpa %s1273, 1
    %1275 = vsyncpa [#allocation6], 1
    %1276 = vsyncpa [#allocation4], 1
    %s1277 = scalar_lea.sflag [#allocation4], 1
    %1278 = vsyncpa %s1277, 1

// kernel: critic_forward.5
$region0: #{critic_forward.5}
  #allocation0 [shape = 'u32[]', space=smem, size = 0x4, offset = 0x4, fixed_abs, tag = 'smem constant byte address 0x4 - core index']
  #allocation1 [shape = 'u32[144,128]{1,0:T(1,128)}', space=vmem, size = 0x12000, scoped, tag = 'internal scratch']
  #allocation2 [shape = 'f32[512,128]{1,0:T(8,128)}', space=vmem, size = 0x40000, scoped, tag = 'scratch operand']
  #allocation3 [shape = 'f32[8,128]{1,0:T(8,128)}', space=vmem, size = 0x1000, scoped, tag = 'scratch operand']
  %s0 = inlined_call_operand.hbm [shape: bf16[512,128], index: 0, kind: input, shape index: {}]
  %s1 = inlined_call_operand.hbm [shape: bf16[128,128], index: 1, kind: input, shape index: {}]
  %s2 = inlined_call_operand.hbm [shape: f32[1,128], index: 2, kind: input, shape index: {}]
  %s3 = inlined_call_operand.hbm [shape: f32[1,128], index: 3, kind: input, shape index: {}]
  %s4 = inlined_call_operand.hbm [shape: bf16[512,128], index: 4, kind: output, shape index: {}]
  %s5 = sld [smem:[#allocation0]]
  $region50: #{critic_forward.5} parent=0
    _
  %s7 = ssub.s32 1, %s5
  %s8 = scalar_select 0, %s7, %s5
  $region1: #{critic_forward.5} parent=0
    #allocation4 [shape = 'u8[131072]{0}', space=vmem, size = 0x20000, scoped, tag = 'input window, operand 0, single buffered']
    #allocation5 [shape = 's32[1]{0}', space=sflag, size = 0x4, scoped, tag = 'scoped memory for critic_forward.5']
    #allocation6 [shape = 's32[1]{0}', space=sflag, size = 0x4, scoped, tag = 'scoped memory for critic_forward.5']
    #allocation7 [shape = 'u8[32768]{0}', space=vmem, size = 0x8000, scoped, tag = 'input window, operand 1, single buffered']
    #allocation8 [shape = 's32[1]{0}', space=sflag, size = 0x4, scoped, tag = 'scoped memory for critic_forward.5']
    #allocation9 [shape = 'u8[512]{0}', space=vmem, size = 0x400, scoped, tag = 'input window, operand 2, single buffered']
    #allocation10 [shape = 'u8[512]{0}', space=vmem, size = 0x400, scoped, tag = 'input window, operand 3, single buffered']
    #allocation11 [shape = 's32[1]{0}', space=sflag, size = 0x4, scoped, tag = 'scoped memory for critic_forward.5']
    #allocation12 [shape = 'u8[131072]{0}', space=vmem, size = 0x20000, scoped, tag = 'output window, operand 0, single buffered']
    %9 = vsyncpa [#allocation5], 0
    %10 = vsyncpa [#allocation8], 0
    %11 = vsyncpa [#allocation11], 0
    %12 = vsyncpa [#allocation6], 0
    // Predicated region
    $region2: #{critic_forward.5} parent=1 // pred_check
      _
    $region3: #{critic_forward.5} parent=1 // pred_check_branch
      %14 = sbr.rel (0) target = $region5
    $region4: #{critic_forward.5} parent=1 // pred_region
      %s16 = ssub.s32 4096, 4096
      %17 = vsyncadd [#allocation5], %s16
      %s18 = sshll.u32 [#allocation4], 4
      %s19 = int_to_ptr.vmem [resolvable:$true] %s18
      %24 = dma.hbm_to_vmem [thread:$0]  %s0, 4096, %s19, [#allocation5], 64, 64, 4
    $region5: #{critic_forward.5} parent=1 // pred_fallthru
      _
    // Predicated region
    $region6: #{critic_forward.5} parent=1 // pred_check
      _
    $region7: #{critic_forward.5} parent=1 // pred_check_branch
      %26 = sbr.rel (0) target = $region9
    $region8: #{critic_forward.5} parent=1 // pred_region
      %s28 = ssub.s32 1024, 1024
      %29 = vsyncadd [#allocation8], %s28
      %s30 = sshll.u32 [#allocation7], 4
      %s31 = int_to_ptr.vmem [resolvable:$true] %s30
      %36 = dma.hbm_to_vmem [thread:$0]  %s1, 1024, %s31, [#allocation8], 64, 64, 4
    $region9: #{critic_forward.5} parent=1 // pred_fallthru
      _
    // Predicated region
    $region10: #{critic_forward.5} parent=1 // pred_check
      _
    $region11: #{critic_forward.5} parent=1 // pred_check_branch
      %38 = sbr.rel (0) target = $region13
    $region12: #{critic_forward.5} parent=1 // pred_region
      %s40 = ssub.s32 16, 16
      %41 = vsyncadd [#allocation8], %s40
      %s43 = sshll.u32 [#allocation9], 4
      %s44 = int_to_ptr.vmem [resolvable:$true] %s43
      %46 = dma.hbm_to_vmem [thread:$0]  %s2, 16, %s44, [#allocation8]
    $region13: #{critic_forward.5} parent=1 // pred_fallthru
      _
    // Predicated region
    $region14: #{critic_forward.5} parent=1 // pred_check
      _
    $region15: #{critic_forward.5} parent=1 // pred_check_branch
      %48 = sbr.rel (0) target = $region17
    $region16: #{critic_forward.5} parent=1 // pred_region
      %s50 = ssub.s32 16, 16
      %51 = vsyncadd [#allocation11], %s50
      %s53 = sshll.u32 [#allocation10], 4
      %s54 = int_to_ptr.vmem [resolvable:$true] %s53
      %56 = dma.hbm_to_vmem [thread:$0]  %s3, 16, %s54, [#allocation11]
    $region17: #{critic_forward.5} parent=1 // pred_fallthru
      _
    // Predicated region
    $region18: #{critic_forward.5} parent=1 // pred_check
      _
    $region19: #{critic_forward.5} parent=1 // pred_check_branch
      %58 = sbr.rel (0) target = $region21
    $region20: #{critic_forward.5} parent=1 // pred_region
      %59 = dma.done [#allocation5], 4096
    $region21: #{critic_forward.5} parent=1 // pred_fallthru
      _
    // Predicated region
    $region22: #{critic_forward.5} parent=1 // pred_check
      _
    $region23: #{critic_forward.5} parent=1 // pred_check_branch
      %61 = sbr.rel (0) target = $region25
    $region24: #{critic_forward.5} parent=1 // pred_region
      %62 = dma.done [#allocation8], 1024
    $region25: #{critic_forward.5} parent=1 // pred_fallthru
      _
    // Predicated region
    $region26: #{critic_forward.5} parent=1 // pred_check
      _
    $region27: #{critic_forward.5} parent=1 // pred_check_branch
      %64 = sbr.rel (0) target = $region29
    $region28: #{critic_forward.5} parent=1 // pred_region
      %65 = dma.done [#allocation8], 16
    $region29: #{critic_forward.5} parent=1 // pred_fallthru
      _
    // Predicated region
    $region30: #{critic_forward.5} parent=1 // pred_check
      _
    $region31: #{critic_forward.5} parent=1 // pred_check_branch
      %67 = sbr.rel (0) target = $region33
    $region32: #{critic_forward.5} parent=1 // pred_region
      %68 = dma.done [#allocation11], 16
    $region33: #{critic_forward.5} parent=1 // pred_fallthru
      _
    %p70 = scmp.eq.s32.totalorder 0, 0
    // Predicated region
    $region34: #{critic_forward.5} parent=1 // pred_check
      %p71 = pneg %p70
    $region35: #{critic_forward.5} parent=1 // pred_check_branch
      %73 = sbr.rel (%p71) target = $region37
    $region36: #{critic_forward.5} parent=1 // pred_region
      %74 = vst [vmem:[#allocation3] sm:$0xff] 0.0
    $region37: #{critic_forward.5} parent=1 // pred_fallthru
      _
    %v75 = vld [vmem:[#allocation4] sm:$0xf]
    %v76 = vld [vmem:[#allocation4 + $0x4] sm:$0xf]
    %v77 = vld [vmem:[#allocation4 + $0x8] sm:$0xf]
    %v78 = vld [vmem:[#allocation4 + $0xc] sm:$0xf]
    %v79 = vld [vmem:[#allocation4 + $0x10] sm:$0xf]
    %v80 = vld [vmem:[#allocation4 + $0x14] sm:$0xf]
    %v81 = vld [vmem:[#allocation4 + $0x18] sm:$0xf]
    %v82 = vld [vmem:[#allocation4 + $0x1c] sm:$0xf]
    %v83 = vld [vmem:[#allocation4 + $0x20] sm:$0xf]
    %v84 = vld [vmem:[#allocation4 + $0x24] sm:$0xf]
    %v85 = vld [vmem:[#allocation4 + $0x28] sm:$0xf]
    %v86 = vld [vmem:[#allocation4 + $0x2c] sm:$0xf]
    %v87 = vld [vmem:[#allocation4 + $0x30] sm:$0xf]
    %v88 = vld [vmem:[#allocation4 + $0x34] sm:$0xf]
    %v89 = vld [vmem:[#allocation4 + $0x38] sm:$0xf]
    %v90 = vld [vmem:[#allocation4 + $0x3c] sm:$0xf]
    %v91 = vld [vmem:[#allocation4 + $0x40] sm:$0xf]
    %v92 = vld [vmem:[#allocation4 + $0x44] sm:$0xf]
    %v93 = vld [vmem:[#allocation4 + $0x48] sm:$0xf]
    %v94 = vld [vmem:[#allocation4 + $0x4c] sm:$0xf]
    %v95 = vld [vmem:[#allocation4 + $0x50] sm:$0xf]
    %v96 = vld [vmem:[#allocation4 + $0x54] sm:$0xf]
    %v97 = vld [vmem:[#allocation4 + $0x58] sm:$0xf]
    %v98 = vld [vmem:[#allocation4 + $0x5c] sm:$0xf]
    %v99 = vld [vmem:[#allocation4 + $0x60] sm:$0xf]
    %v100 = vld [vmem:[#allocation4 + $0x64] sm:$0xf]
    %v101 = vld [vmem:[#allocation4 + $0x68] sm:$0xf]
    %v102 = vld [vmem:[#allocation4 + $0x6c] sm:$0xf]
    %v103 = vld [vmem:[#allocation4 + $0x70] sm:$0xf]
    %v104 = vld [vmem:[#allocation4 + $0x74] sm:$0xf]
    %v105 = vld [vmem:[#allocation4 + $0x78] sm:$0xf]
    %v106 = vld [vmem:[#allocation4 + $0x7c] sm:$0xf]
    %v107 = vld [vmem:[#allocation4 + $0x80] sm:$0xf]
    %v108 = vld [vmem:[#allocation4 + $0x84] sm:$0xf]
    %v109 = vld [vmem:[#allocation4 + $0x88] sm:$0xf]
    %v110 = vld [vmem:[#allocation4 + $0x8c] sm:$0xf]
    %v111 = vld [vmem:[#allocation4 + $0x90] sm:$0xf]
    %v112 = vld [vmem:[#allocation4 + $0x94] sm:$0xf]
    %v113 = vld [vmem:[#allocation4 + $0x98] sm:$0xf]
    %v114 = vld [vmem:[#allocation4 + $0x9c] sm:$0xf]
    %v115 = vld [vmem:[#allocation4 + $0xa0] sm:$0xf]
    %v116 = vld [vmem:[#allocation4 + $0xa4] sm:$0xf]
    %v117 = vld [vmem:[#allocation4 + $0xa8] sm:$0xf]
    %v118 = vld [vmem:[#allocation4 + $0xac] sm:$0xf]
    %v119 = vld [vmem:[#allocation4 + $0xb0] sm:$0xf]
    %v120 = vld [vmem:[#allocation4 + $0xb4] sm:$0xf]
    %v121 = vld [vmem:[#allocation4 + $0xb8] sm:$0xf]
    %v122 = vld [vmem:[#allocation4 + $0xbc] sm:$0xf]
    %v123 = vld [vmem:[#allocation4 + $0xc0] sm:$0xf]
    %v124 = vld [vmem:[#allocation4 + $0xc4] sm:$0xf]
    %v125 = vld [vmem:[#allocation4 + $0xc8] sm:$0xf]
    %v126 = vld [vmem:[#allocation4 + $0xcc] sm:$0xf]
    %v127 = vld [vmem:[#allocation4 + $0xd0] sm:$0xf]
    %v128 = vld [vmem:[#allocation4 + $0xd4] sm:$0xf]
    %v129 = vld [vmem:[#allocation4 + $0xd8] sm:$0xf]
    %v130 = vld [vmem:[#allocation4 + $0xdc] sm:$0xf]
    %v131 = vld [vmem:[#allocation4 + $0xe0] sm:$0xf]
    %v132 = vld [vmem:[#allocation4 + $0xe4] sm:$0xf]
    %v133 = vld [vmem:[#allocation4 + $0xe8] sm:$0xf]
    %v134 = vld [vmem:[#allocation4 + $0xec] sm:$0xf]
    %v135 = vld [vmem:[#allocation4 + $0xf0] sm:$0xf]
    %v136 = vld [vmem:[#allocation4 + $0xf4] sm:$0xf]
    %v137 = vld [vmem:[#allocation4 + $0xf8] sm:$0xf]
    %v138 = vld [vmem:[#allocation4 + $0xfc] sm:$0xf]
    %v139 = vld [vmem:[#allocation7] sm:$0xf]
    %v140 = vld [vmem:[#allocation7 + $0x4] sm:$0xf]
    %v141 = vld [vmem:[#allocation7 + $0x8] sm:$0xf]
    %v142 = vld [vmem:[#allocation7 + $0xc] sm:$0xf]
    %v143 = vld [vmem:[#allocation7 + $0x10] sm:$0xf]
    %v144 = vld [vmem:[#allocation7 + $0x14] sm:$0xf]
    %v145 = vld [vmem:[#allocation7 + $0x18] sm:$0xf]
    %v146 = vld [vmem:[#allocation7 + $0x1c] sm:$0xf]
    %v147 = vld [vmem:[#allocation7 + $0x20] sm:$0xf]
    %v148 = vld [vmem:[#allocation7 + $0x24] sm:$0xf]
    %v149 = vld [vmem:[#allocation7 + $0x28] sm:$0xf]
    %v150 = vld [vmem:[#allocation7 + $0x2c] sm:$0xf]
    %v151 = vld [vmem:[#allocation7 + $0x30] sm:$0xf]
    %v152 = vld [vmem:[#allocation7 + $0x34] sm:$0xf]
    %v153 = vld [vmem:[#allocation7 + $0x38] sm:$0xf]
    %v154 = vld [vmem:[#allocation7 + $0x3c] sm:$0xf]
    %v219 = vunpack.c.l.b16 %v75
    %v220 = vunpack.c.l.b16 %v76
    %v221 = vunpack.c.l.b16 %v77
    %v222 = vunpack.c.l.b16 %v78
    %v223 = vunpack.c.l.b16 %v79
    %v224 = vunpack.c.l.b16 %v80
    %v225 = vunpack.c.l.b16 %v81
    %v226 = vunpack.c.l.b16 %v82
    %v227 = vunpack.c.l.b16 %v83
    %v228 = vunpack.c.l.b16 %v84
    %v229 = vunpack.c.l.b16 %v85
    %v230 = vunpack.c.l.b16 %v86
    %v231 = vunpack.c.l.b16 %v87
    %v232 = vunpack.c.l.b16 %v88
    %v233 = vunpack.c.l.b16 %v89
    %v234 = vunpack.c.l.b16 %v90
    %v235 = vunpack.c.l.b16 %v91
    %v236 = vunpack.c.l.b16 %v92
    %v237 = vunpack.c.l.b16 %v93
    %v238 = vunpack.c.l.b16 %v94
    %v239 = vunpack.c.l.b16 %v95
    %v240 = vunpack.c.l.b16 %v96
    %v241 = vunpack.c.l.b16 %v97
    %v242 = vunpack.c.l.b16 %v98
    %v243 = vunpack.c.l.b16 %v99
    %v244 = vunpack.c.l.b16 %v100
    %v245 = vunpack.c.l.b16 %v101
    %v246 = vunpack.c.l.b16 %v102
    %v247 = vunpack.c.l.b16 %v103
    %v248 = vunpack.c.l.b16 %v104
    %v249 = vunpack.c.l.b16 %v105
    %v250 = vunpack.c.l.b16 %v106
    %v251 = vunpack.c.l.b16 %v107
    %v252 = vunpack.c.l.b16 %v108
    %v253 = vunpack.c.l.b16 %v109
    %v254 = vunpack.c.l.b16 %v110
    %v255 = vunpack.c.l.b16 %v111
    %v256 = vunpack.c.l.b16 %v112
    %v257 = vunpack.c.l.b16 %v113
    %v258 = vunpack.c.l.b16 %v114
    %v259 = vunpack.c.l.b16 %v115
    %v260 = vunpack.c.l.b16 %v116
    %v261 = vunpack.c.l.b16 %v117
    %v262 = vunpack.c.l.b16 %v118
    %v263 = vunpack.c.l.b16 %v119
    %v264 = vunpack.c.l.b16 %v120
    %v265 = vunpack.c.l.b16 %v121
    %v266 = vunpack.c.l.b16 %v122
    %v267 = vunpack.c.l.b16 %v123
    %v268 = vunpack.c.l.b16 %v124
    %v269 = vunpack.c.l.b16 %v125
    %v270 = vunpack.c.l.b16 %v126
    %v271 = vunpack.c.l.b16 %v127
    %v272 = vunpack.c.l.b16 %v128
    %v273 = vunpack.c.l.b16 %v129
    %v274 = vunpack.c.l.b16 %v130
    %v275 = vunpack.c.l.b16 %v131
    %v276 = vunpack.c.l.b16 %v132
    %v277 = vunpack.c.l.b16 %v133
    %v278 = vunpack.c.l.b16 %v134
    %v279 = vunpack.c.l.b16 %v135
    %v280 = vunpack.c.l.b16 %v136
    %v281 = vunpack.c.l.b16 %v137
    %v282 = vunpack.c.l.b16 %v138
    %v283 = vpack.c.b16 %v220, %v219
    %v284 = vpack.c.b16 %v222, %v221
    %v285 = vpack.c.b16 %v224, %v223
    %v286 = vpack.c.b16 %v226, %v225
    %v287 = vpack.c.b16 %v228, %v227
    %v288 = vpack.c.b16 %v230, %v229
    %v289 = vpack.c.b16 %v232, %v231
    %v290 = vpack.c.b16 %v234, %v233
    %v291 = vpack.c.b16 %v236, %v235
    %v292 = vpack.c.b16 %v238, %v237
    %v293 = vpack.c.b16 %v240, %v239
    %v294 = vpack.c.b16 %v242, %v241
    %v295 = vpack.c.b16 %v244, %v243
    %v296 = vpack.c.b16 %v246, %v245
    %v297 = vpack.c.b16 %v248, %v247
    %v298 = vpack.c.b16 %v250, %v249
    %v299 = vpack.c.b16 %v252, %v251
    %v300 = vpack.c.b16 %v254, %v253
    %v301 = vpack.c.b16 %v256, %v255
    %v302 = vpack.c.b16 %v258, %v257
    %v303 = vpack.c.b16 %v260, %v259
    %v304 = vpack.c.b16 %v262, %v261
    %v305 = vpack.c.b16 %v264, %v263
    %v306 = vpack.c.b16 %v266, %v265
    %v307 = vpack.c.b16 %v268, %v267
    %v308 = vpack.c.b16 %v270, %v269
    %v309 = vpack.c.b16 %v272, %v271
    %v310 = vpack.c.b16 %v274, %v273
    %v311 = vpack.c.b16 %v276, %v275
    %v312 = vpack.c.b16 %v278, %v277
    %v313 = vpack.c.b16 %v280, %v279
    %v314 = vpack.c.b16 %v282, %v281
    %v363 = vunpack.c.l.b16 %v139
    %v364 = vunpack.c.l.b16 %v140
    %v365 = vunpack.c.l.b16 %v141
    %v366 = vunpack.c.l.b16 %v142
    %v367 = vunpack.c.l.b16 %v143
    %v368 = vunpack.c.l.b16 %v144
    %v369 = vunpack.c.l.b16 %v145
    %v370 = vunpack.c.l.b16 %v146
    %v371 = vunpack.c.l.b16 %v147
    %v372 = vunpack.c.l.b16 %v148
    %v373 = vunpack.c.l.b16 %v149
    %v374 = vunpack.c.l.b16 %v150
    %v375 = vunpack.c.l.b16 %v151
    %v376 = vunpack.c.l.b16 %v152
    %v377 = vunpack.c.l.b16 %v153
    %v378 = vunpack.c.l.b16 %v154
    %v379 = vpack.c.b16 %v364, %v363
    %v380 = vpack.c.b16 %v366, %v365
    %v381 = vpack.c.b16 %v368, %v367
    %v382 = vpack.c.b16 %v370, %v369
    %v383 = vpack.c.b16 %v372, %v371
    %v384 = vpack.c.b16 %v374, %v373
    %v385 = vpack.c.b16 %v376, %v375
    %v386 = vpack.c.b16 %v378, %v377
    %395 = vmatprep.subr.bf16.mxu0 0
    %396 = vmatpush1.bf16.msra.mxu0 %v379
    %397 = vmatprep.subr.bf16.mxu0 0
    %398 = vmatpush1.bf16.msra.mxu0 %v380
    %399 = vmatprep.subr.bf16.mxu0 0
    %400 = vmatpush1.bf16.msra.mxu0 %v381
    %401 = vmatprep.subr.bf16.mxu0 0
    %402 = vmatpush1.bf16.msra.mxu0 %v382
    %403 = vmatprep.subr.bf16.mxu0 0
    %404 = vmatpush1.bf16.msra.mxu0 %v383
    %405 = vmatprep.subr.bf16.mxu0 0
    %406 = vmatpush1.bf16.msra.mxu0 %v384
    %407 = vmatprep.subr.bf16.mxu0 0
    %408 = vmatpush1.bf16.msra.mxu0 %v385
    %409 = vmatprep.subr.bf16.mxu0 0
    %410 = vmatpush1.bf16.msra.mxu0 %v386
    %411 = vmatprep.subr.bf16.mxu0 0
    %412 = vmatpush1.bf16.msra.mxu0 0
    %413 = vmatprep.subr.bf16.mxu0 0
    %414 = vmatpush1.bf16.msra.mxu0 0
    %415 = vmatprep.subr.bf16.mxu0 0
    %416 = vmatpush1.bf16.msra.mxu0 0
    %417 = vmatprep.subr.bf16.mxu0 0
    %418 = vmatpush1.bf16.msra.mxu0 0
    %419 = vmatprep.subr.bf16.mxu0 0
    %420 = vmatpush1.bf16.msra.mxu0 0
    %421 = vmatprep.subr.bf16.mxu0 0
    %422 = vmatpush1.bf16.msra.mxu0 0
    %423 = vmatprep.subr.bf16.mxu0 0
    %424 = vmatpush1.bf16.msra.mxu0 0
    %425 = vmatprep.subr.bf16.mxu0 0
    %426 = vmatpush1.bf16.msra.mxu0 0
    %427 = vmatprep.mubr.bf16.mxu0 0
    %428 = vmatmul.mubr.bf16.gmra.mrb[0].mxu0 %v283
    %v429 = vpop.f32.mrb[0].mxu0
    %v430 = vadd.f32 0.0, %v429
    %v431 = vpop.f32.mrb[0].mxu0
    %v432 = vpop.f32.mrb[0].mxu0
    %v433 = vadd.f32 0.0, %v432
    %v434 = vpop.f32.mrb[0].mxu0
    %435 = vmatprep.mubr.bf16.mxu0 0
    %436 = vmatmul.mubr.bf16.gmra.mrb[0].mxu0 %v284
    %v437 = vpop.f32.mrb[0].mxu0
    %v438 = vadd.f32 0.0, %v437
    %v439 = vpop.f32.mrb[0].mxu0
    %v440 = vpop.f32.mrb[0].mxu0
    %v441 = vadd.f32 0.0, %v440
    %v442 = vpop.f32.mrb[0].mxu0
    %443 = vmatprep.mubr.bf16.mxu0 0
    %444 = vmatmul.mubr.bf16.gmra.mrb[0].mxu0 %v285
    %v445 = vpop.f32.mrb[0].mxu0
    %v446 = vadd.f32 0.0, %v445
    %v447 = vpop.f32.mrb[0].mxu0
    %v448 = vpop.f32.mrb[0].mxu0
    %v449 = vadd.f32 0.0, %v448
    %v450 = vpop.f32.mrb[0].mxu0
    %451 = vmatprep.mubr.bf16.mxu0 0
    %452 = vmatmul.mubr.bf16.gmra.mrb[0].mxu0 %v286
    %v453 = vpop.f32.mrb[0].mxu0
    %v454 = vadd.f32 0.0, %v453
    %v455 = vpop.f32.mrb[0].mxu0
    %v456 = vpop.f32.mrb[0].mxu0
    %v457 = vadd.f32 0.0, %v456
    %v458 = vpop.f32.mrb[0].mxu0
    %459 = vmatprep.mubr.bf16.mxu0 0
    %460 = vmatmul.mubr.bf16.gmra.mrb[0].mxu0 %v287
    %v461 = vpop.f32.mrb[0].mxu0
    %v462 = vadd.f32 0.0, %v461
    %v463 = vpop.f32.mrb[0].mxu0
    %v464 = vpop.f32.mrb[0].mxu0
    %v465 = vadd.f32 0.0, %v464
    %v466 = vpop.f32.mrb[0].mxu0
    %467 = vmatprep.mubr.bf16.mxu0 0
    %468 = vmatmul.mubr.bf16.gmra.mrb[0].mxu0 %v288
    %v469 = vpop.f32.mrb[0].mxu0
    %v470 = vadd.f32 0.0, %v469
    %v471 = vpop.f32.mrb[0].mxu0
    %v472 = vpop.f32.mrb[0].mxu0
    %v473 = vadd.f32 0.0, %v472
    %v474 = vpop.f32.mrb[0].mxu0
    %475 = vmatprep.mubr.bf16.mxu0 0
    %476 = vmatmul.mubr.bf16.gmra.mrb[0].mxu0 %v289
    %v477 = vpop.f32.mrb[0].mxu0
    %v478 = vadd.f32 0.0, %v477
    %v479 = vpop.f32.mrb[0].mxu0
    %v480 = vpop.f32.mrb[0].mxu0
    %v481 = vadd.f32 0.0, %v480
    %v482 = vpop.f32.mrb[0].mxu0
    %483 = vmatprep.mubr.bf16.mxu0 0
    %484 = vmatmul.mubr.bf16.gmra.mrb[0].mxu0 %v290
    %v485 = vpop.f32.mrb[0].mxu0
    %v486 = vadd.f32 0.0, %v485
    %v487 = vpop.f32.mrb[0].mxu0
    %v488 = vpop.f32.mrb[0].mxu0
    %v489 = vadd.f32 0.0, %v488
    %v490 = vpop.f32.mrb[0].mxu0
    %491 = vmatprep.mubr.bf16.mxu0 0
    %492 = vmatmul.mubr.bf16.gmra.mrb[0].mxu0 %v291
    %v493 = vpop.f32.mrb[0].mxu0
    %v494 = vadd.f32 0.0, %v493
    %v495 = vpop.f32.mrb[0].mxu0
    %v496 = vpop.f32.mrb[0].mxu0
    %v497 = vadd.f32 0.0, %v496
    %v498 = vpop.f32.mrb[0].mxu0
    %499 = vmatprep.mubr.bf16.mxu0 0
    %500 = vmatmul.mubr.bf16.gmra.mrb[0].mxu0 %v292
    %v501 = vpop.f32.mrb[0].mxu0
    %v502 = vadd.f32 0.0, %v501
    %v503 = vpop.f32.mrb[0].mxu0
    %v504 = vpop.f32.mrb[0].mxu0
    %v505 = vadd.f32 0.0, %v504
    %v506 = vpop.f32.mrb[0].mxu0
    %507 = vmatprep.mubr.bf16.mxu0 0
    %508 = vmatmul.mubr.bf16.gmra.mrb[0].mxu0 %v293
    %v509 = vpop.f32.mrb[0].mxu0
    %v510 = vadd.f32 0.0, %v509
    %v511 = vpop.f32.mrb[0].mxu0
    %v512 = vpop.f32.mrb[0].mxu0
    %v513 = vadd.f32 0.0, %v512
    %v514 = vpop.f32.mrb[0].mxu0
    %515 = vmatprep.mubr.bf16.mxu0 0
    %516 = vmatmul.mubr.bf16.gmra.mrb[0].mxu0 %v294
    %v517 = vpop.f32.mrb[0].mxu0
    %v518 = vadd.f32 0.0, %v517
    %v519 = vpop.f32.mrb[0].mxu0
    %v520 = vpop.f32.mrb[0].mxu0
    %v521 = vadd.f32 0.0, %v520
    %v522 = vpop.f32.mrb[0].mxu0
    %523 = vmatprep.mubr.bf16.mxu0 0
    %524 = vmatmul.mubr.bf16.gmra.mrb[0].mxu0 %v295
    %v525 = vpop.f32.mrb[0].mxu0
    %v526 = vadd.f32 0.0, %v525
    %v527 = vpop.f32.mrb[0].mxu0
    %v528 = vpop.f32.mrb[0].mxu0
    %v529 = vadd.f32 0.0, %v528
    %v530 = vpop.f32.mrb[0].mxu0
    %531 = vmatprep.mubr.bf16.mxu0 0
    %532 = vmatmul.mubr.bf16.gmra.mrb[0].mxu0 %v296
    %v533 = vpop.f32.mrb[0].mxu0
    %v534 = vadd.f32 0.0, %v533
    %v535 = vpop.f32.mrb[0].mxu0
    %v536 = vpop.f32.mrb[0].mxu0
    %v537 = vadd.f32 0.0, %v536
    %v538 = vpop.f32.mrb[0].mxu0
    %539 = vmatprep.mubr.bf16.mxu0 0
    %540 = vmatmul.mubr.bf16.gmra.mrb[0].mxu0 %v297
    %v541 = vpop.f32.mrb[0].mxu0
    %v542 = vadd.f32 0.0, %v541
    %v543 = vpop.f32.mrb[0].mxu0
    %v544 = vpop.f32.mrb[0].mxu0
    %v545 = vadd.f32 0.0, %v544
    %v546 = vpop.f32.mrb[0].mxu0
    %547 = vmatprep.mubr.bf16.mxu0 0
    %548 = vmatmul.mubr.bf16.gmra.mrb[0].mxu0 %v298
    %v549 = vpop.f32.mrb[0].mxu0
    %v550 = vadd.f32 0.0, %v549
    %v551 = vpop.f32.mrb[0].mxu0
    %v552 = vpop.f32.mrb[0].mxu0
    %v553 = vadd.f32 0.0, %v552
    %v554 = vpop.f32.mrb[0].mxu0
    %555 = vmatprep.mubr.bf16.mxu0 0
    %556 = vmatmul.mubr.bf16.gmra.mrb[0].mxu0 %v299
    %v557 = vpop.f32.mrb[0].mxu0
    %v558 = vadd.f32 0.0, %v557
    %v559 = vpop.f32.mrb[0].mxu0
    %v560 = vpop.f32.mrb[0].mxu0
    %v561 = vadd.f32 0.0, %v560
    %v562 = vpop.f32.mrb[0].mxu0
    %563 = vmatprep.mubr.bf16.mxu0 0
    %564 = vmatmul.mubr.bf16.gmra.mrb[0].mxu0 %v300
    %v565 = vpop.f32.mrb[0].mxu0
    %v566 = vadd.f32 0.0, %v565
    %v567 = vpop.f32.mrb[0].mxu0
    %v568 = vpop.f32.mrb[0].mxu0
    %v569 = vadd.f32 0.0, %v568
    %v570 = vpop.f32.mrb[0].mxu0
    %571 = vmatprep.mubr.bf16.mxu0 0
    %572 = vmatmul.mubr.bf16.gmra.mrb[0].mxu0 %v301
    %v573 = vpop.f32.mrb[0].mxu0
    %v574 = vadd.f32 0.0, %v573
    %v575 = vpop.f32.mrb[0].mxu0
    %v576 = vpop.f32.mrb[0].mxu0
    %v577 = vadd.f32 0.0, %v576
    %v578 = vpop.f32.mrb[0].mxu0
    %579 = vmatprep.mubr.bf16.mxu0 0
    %580 = vmatmul.mubr.bf16.gmra.mrb[0].mxu0 %v302
    %v581 = vpop.f32.mrb[0].mxu0
    %v582 = vadd.f32 0.0, %v581
    %v583 = vpop.f32.mrb[0].mxu0
    %v584 = vpop.f32.mrb[0].mxu0
    %v585 = vadd.f32 0.0, %v584
    %v586 = vpop.f32.mrb[0].mxu0
    %587 = vmatprep.mubr.bf16.mxu0 0
    %588 = vmatmul.mubr.bf16.gmra.mrb[0].mxu0 %v303
    %v589 = vpop.f32.mrb[0].mxu0
    %v590 = vadd.f32 0.0, %v589
    %v591 = vpop.f32.mrb[0].mxu0
    %v592 = vpop.f32.mrb[0].mxu0
    %v593 = vadd.f32 0.0, %v592
    %v594 = vpop.f32.mrb[0].mxu0
    %595 = vmatprep.mubr.bf16.mxu0 0
    %596 = vmatmul.mubr.bf16.gmra.mrb[0].mxu0 %v304
    %v597 = vpop.f32.mrb[0].mxu0
    %v598 = vadd.f32 0.0, %v597
    %v599 = vpop.f32.mrb[0].mxu0
    %v600 = vpop.f32.mrb[0].mxu0
    %v601 = vadd.f32 0.0, %v600
    %v602 = vpop.f32.mrb[0].mxu0
    %603 = vmatprep.mubr.bf16.mxu0 0
    %604 = vmatmul.mubr.bf16.gmra.mrb[0].mxu0 %v305
    %v605 = vpop.f32.mrb[0].mxu0
    %v606 = vadd.f32 0.0, %v605
    %v607 = vpop.f32.mrb[0].mxu0
    %v608 = vpop.f32.mrb[0].mxu0
    %v609 = vadd.f32 0.0, %v608
    %v610 = vpop.f32.mrb[0].mxu0
    %611 = vmatprep.mubr.bf16.mxu0 0
    %612 = vmatmul.mubr.bf16.gmra.mrb[0].mxu0 %v306
    %v613 = vpop.f32.mrb[0].mxu0
    %v614 = vadd.f32 0.0, %v613
    %v615 = vpop.f32.mrb[0].mxu0
    %v616 = vpop.f32.mrb[0].mxu0
    %v617 = vadd.f32 0.0, %v616
    %v618 = vpop.f32.mrb[0].mxu0
    %619 = vmatprep.mubr.bf16.mxu0 0
    %620 = vmatmul.mubr.bf16.gmra.mrb[0].mxu0 %v307
    %v621 = vpop.f32.mrb[0].mxu0
    %v622 = vadd.f32 0.0, %v621
    %v623 = vpop.f32.mrb[0].mxu0
    %v624 = vpop.f32.mrb[0].mxu0
    %v625 = vadd.f32 0.0, %v624
    %v626 = vpop.f32.mrb[0].mxu0
    %627 = vmatprep.mubr.bf16.mxu0 0
    %628 = vmatmul.mubr.bf16.gmra.mrb[0].mxu0 %v308
    %v629 = vpop.f32.mrb[0].mxu0
    %v630 = vadd.f32 0.0, %v629
    %v631 = vpop.f32.mrb[0].mxu0
    %v632 = vpop.f32.mrb[0].mxu0
    %v633 = vadd.f32 0.0, %v632
    %v634 = vpop.f32.mrb[0].mxu0
    %635 = vmatprep.mubr.bf16.mxu0 0
    %636 = vmatmul.mubr.bf16.gmra.mrb[0].mxu0 %v309
    %v637 = vpop.f32.mrb[0].mxu0
    %v638 = vadd.f32 0.0, %v637
    %v639 = vpop.f32.mrb[0].mxu0
    %v640 = vpop.f32.mrb[0].mxu0
    %v641 = vadd.f32 0.0, %v640
    %v642 = vpop.f32.mrb[0].mxu0
    %643 = vmatprep.mubr.bf16.mxu0 0
    %644 = vmatmul.mubr.bf16.gmra.mrb[0].mxu0 %v310
    %v645 = vpop.f32.mrb[0].mxu0
    %v646 = vadd.f32 0.0, %v645
    %v647 = vpop.f32.mrb[0].mxu0
    %v648 = vpop.f32.mrb[0].mxu0
    %v649 = vadd.f32 0.0, %v648
    %v650 = vpop.f32.mrb[0].mxu0
    %651 = vmatprep.mubr.bf16.mxu0 0
    %652 = vmatmul.mubr.bf16.gmra.mrb[0].mxu0 %v311
    %v653 = vpop.f32.mrb[0].mxu0
    %v654 = vadd.f32 0.0, %v653
    %v655 = vpop.f32.mrb[0].mxu0
    %v656 = vpop.f32.mrb[0].mxu0
    %v657 = vadd.f32 0.0, %v656
    %v658 = vpop.f32.mrb[0].mxu0
    %659 = vmatprep.mubr.bf16.mxu0 0
    %660 = vmatmul.mubr.bf16.gmra.mrb[0].mxu0 %v312
    %v661 = vpop.f32.mrb[0].mxu0
    %v662 = vadd.f32 0.0, %v661
    %v663 = vpop.f32.mrb[0].mxu0
    %v664 = vpop.f32.mrb[0].mxu0
    %v665 = vadd.f32 0.0, %v664
    %v666 = vpop.f32.mrb[0].mxu0
    %667 = vmatprep.mubr.bf16.mxu0 0
    %668 = vmatmul.mubr.bf16.gmra.mrb[0].mxu0 %v313
    %v669 = vpop.f32.mrb[0].mxu0
    %v670 = vadd.f32 0.0, %v669
    %v671 = vpop.f32.mrb[0].mxu0
    %v672 = vpop.f32.mrb[0].mxu0
    %v673 = vadd.f32 0.0, %v672
    %v674 = vpop.f32.mrb[0].mxu0
    %675 = vmatprep.mubr.bf16.mxu0 0
    %676 = vmatmul.mubr.bf16.gmra.mrb[0].mxu0 %v314
    %v677 = vpop.f32.mrb[0].mxu0
    %v678 = vadd.f32 0.0, %v677
    %v679 = vpop.f32.mrb[0].mxu0
    %v680 = vpop.f32.mrb[0].mxu0
    %v681 = vadd.f32 0.0, %v680
    %v682 = vpop.f32.mrb[0].mxu0
    %683 = vdwg.mxu0
    %s684 = smul.u32 0, 512
    %s685 = scalar_lea.vmem [#allocation2], %s684
    %686 = vst [vmem:[%s685] sm:$0xff] %v430
    %687 = vst [vmem:[%s685 + $0x8] sm:$0xff] %v433
    %688 = vst [vmem:[%s685 + $0x10] sm:$0xff] %v438
    %689 = vst [vmem:[%s685 + $0x18] sm:$0xff] %v441
    %690 = vst [vmem:[%s685 + $0x20] sm:$0xff] %v446
    %691 = vst [vmem:[%s685 + $0x28] sm:$0xff] %v449
    %692 = vst [vmem:[%s685 + $0x30] sm:$0xff] %v454
    %693 = vst [vmem:[%s685 + $0x38] sm:$0xff] %v457
    %694 = vst [vmem:[%s685 + $0x40] sm:$0xff] %v462
    %695 = vst [vmem:[%s685 + $0x48] sm:$0xff] %v465
    %696 = vst [vmem:[%s685 + $0x50] sm:$0xff] %v470
    %697 = vst [vmem:[%s685 + $0x58] sm:$0xff] %v473
    %698 = vst [vmem:[%s685 + $0x60] sm:$0xff] %v478
    %699 = vst [vmem:[%s685 + $0x68] sm:$0xff] %v481
    %700 = vst [vmem:[%s685 + $0x70] sm:$0xff] %v486
    %701 = vst [vmem:[%s685 + $0x78] sm:$0xff] %v489
    %702 = vst [vmem:[%s685 + $0x80] sm:$0xff] %v494
    %703 = vst [vmem:[%s685 + $0x88] sm:$0xff] %v497
    %704 = vst [vmem:[%s685 + $0x90] sm:$0xff] %v502
    %705 = vst [vmem:[%s685 + $0x98] sm:$0xff] %v505
    %706 = vst [vmem:[%s685 + $0xa0] sm:$0xff] %v510
    %707 = vst [vmem:[%s685 + $0xa8] sm:$0xff] %v513
    %708 = vst [vmem:[%s685 + $0xb0] sm:$0xff] %v518
    %709 = vst [vmem:[%s685 + $0xb8] sm:$0xff] %v521
    %710 = vst [vmem:[%s685 + $0xc0] sm:$0xff] %v526
    %711 = vst [vmem:[%s685 + $0xc8] sm:$0xff] %v529
    %712 = vst [vmem:[%s685 + $0xd0] sm:$0xff] %v534
    %713 = vst [vmem:[%s685 + $0xd8] sm:$0xff] %v537
    %714 = vst [vmem:[%s685 + $0xe0] sm:$0xff] %v542
    %715 = vst [vmem:[%s685 + $0xe8] sm:$0xff] %v545
    %716 = vst [vmem:[%s685 + $0xf0] sm:$0xff] %v550
    %717 = vst [vmem:[%s685 + $0xf8] sm:$0xff] %v553
    %718 = vst [vmem:[%s685 + $0x100] sm:$0xff] %v558
    %719 = vst [vmem:[%s685 + $0x108] sm:$0xff] %v561
    %720 = vst [vmem:[%s685 + $0x110] sm:$0xff] %v566
    %721 = vst [vmem:[%s685 + $0x118] sm:$0xff] %v569
    %722 = vst [vmem:[%s685 + $0x120] sm:$0xff] %v574
    %723 = vst [vmem:[%s685 + $0x128] sm:$0xff] %v577
    %724 = vst [vmem:[%s685 + $0x130] sm:$0xff] %v582
    %725 = vst [vmem:[%s685 + $0x138] sm:$0xff] %v585
    %726 = vst [vmem:[%s685 + $0x140] sm:$0xff] %v590
    %727 = vst [vmem:[%s685 + $0x148] sm:$0xff] %v593
    %728 = vst [vmem:[%s685 + $0x150] sm:$0xff] %v598
    %729 = vst [vmem:[%s685 + $0x158] sm:$0xff] %v601
    %730 = vst [vmem:[%s685 + $0x160] sm:$0xff] %v606
    %731 = vst [vmem:[%s685 + $0x168] sm:$0xff] %v609
    %732 = vst [vmem:[%s685 + $0x170] sm:$0xff] %v614
    %733 = vst [vmem:[%s685 + $0x178] sm:$0xff] %v617
    %734 = vst [vmem:[%s685 + $0x180] sm:$0xff] %v622
    %735 = vst [vmem:[%s685 + $0x188] sm:$0xff] %v625
    %736 = vst [vmem:[%s685 + $0x190] sm:$0xff] %v630
    %737 = vst [vmem:[%s685 + $0x198] sm:$0xff] %v633
    %738 = vst [vmem:[%s685 + $0x1a0] sm:$0xff] %v638
    %739 = vst [vmem:[%s685 + $0x1a8] sm:$0xff] %v641
    %740 = vst [vmem:[%s685 + $0x1b0] sm:$0xff] %v646
    %741 = vst [vmem:[%s685 + $0x1b8] sm:$0xff] %v649
    %742 = vst [vmem:[%s685 + $0x1c0] sm:$0xff] %v654
    %743 = vst [vmem:[%s685 + $0x1c8] sm:$0xff] %v657
    %744 = vst [vmem:[%s685 + $0x1d0] sm:$0xff] %v662
    %745 = vst [vmem:[%s685 + $0x1d8] sm:$0xff] %v665
    %746 = vst [vmem:[%s685 + $0x1e0] sm:$0xff] %v670
    %747 = vst [vmem:[%s685 + $0x1e8] sm:$0xff] %v673
    %748 = vst [vmem:[%s685 + $0x1f0] sm:$0xff] %v678
    %749 = vst [vmem:[%s685 + $0x1f8] sm:$0xff] %v681
    %v750 = vld [vmem:[#allocation3] sm:$0x1]
    %v751 = vadd.f32 %v430, %v433
    %v752 = vadd.f32 %v751, %v438
    %v753 = vadd.f32 %v752, %v441
    %v754 = vadd.f32 %v753, %v446
    %v755 = vadd.f32 %v754, %v449
    %v756 = vadd.f32 %v755, %v454
    %v757 = vadd.f32 %v756, %v457
    %v758 = vadd.f32 %v757, %v462
    %v759 = vadd.f32 %v758, %v465
    %v760 = vadd.f32 %v759, %v470
    %v761 = vadd.f32 %v760, %v473
    %v762 = vadd.f32 %v761, %v478
    %v763 = vadd.f32 %v762, %v481
    %v764 = vadd.f32 %v763, %v486
    %v765 = vadd.f32 %v764, %v489
    %v766 = vadd.f32 %v765, %v494
    %v767 = vadd.f32 %v766, %v497
    %v768 = vadd.f32 %v767, %v502
    %v769 = vadd.f32 %v768, %v505
    %v770 = vadd.f32 %v769, %v510
    %v771 = vadd.f32 %v770, %v513
    %v772 = vadd.f32 %v771, %v518
    %v773 = vadd.f32 %v772, %v521
    %v774 = vadd.f32 %v773, %v526
    %v775 = vadd.f32 %v774, %v529
    %v776 = vadd.f32 %v775, %v534
    %v777 = vadd.f32 %v776, %v537
    %v778 = vadd.f32 %v777, %v542
    %v779 = vadd.f32 %v778, %v545
    %v780 = vadd.f32 %v779, %v550
    %v781 = vadd.f32 %v780, %v553
    %v782 = vadd.f32 %v781, %v558
    %v783 = vadd.f32 %v782, %v561
    %v784 = vadd.f32 %v783, %v566
    %v785 = vadd.f32 %v784, %v569
    %v786 = vadd.f32 %v785, %v574
    %v787 = vadd.f32 %v786, %v577
    %v788 = vadd.f32 %v787, %v582
    %v789 = vadd.f32 %v788, %v585
    %v790 = vadd.f32 %v789, %v590
    %v791 = vadd.f32 %v790, %v593
    %v792 = vadd.f32 %v791, %v598
    %v793 = vadd.f32 %v792, %v601
    %v794 = vadd.f32 %v793, %v606
    %v795 = vadd.f32 %v794, %v609
    %v796 = vadd.f32 %v795, %v614
    %v797 = vadd.f32 %v796, %v617
    %v798 = vadd.f32 %v797, %v622
    %v799 = vadd.f32 %v798, %v625
    %v800 = vadd.f32 %v799, %v630
    %v801 = vadd.f32 %v800, %v633
    %v802 = vadd.f32 %v801, %v638
    %v803 = vadd.f32 %v802, %v641
    %v804 = vadd.f32 %v803, %v646
    %v805 = vadd.f32 %v804, %v649
    %v806 = vadd.f32 %v805, %v654
    %v807 = vadd.f32 %v806, %v657
    %v808 = vadd.f32 %v807, %v662
    %v809 = vadd.f32 %v808, %v665
    %v810 = vadd.f32 %v809, %v670
    %v811 = vadd.f32 %v810, %v673
    %v812 = vadd.f32 %v811, %v678
    %v813 = vadd.f32 %v812, %v681
    %v814 = vrot.slane %v813, 4
    %v815 = vadd.f32 %v813, %v814
    %v816 = vrot.slane %v815, 2
    %v817 = vadd.f32 %v815, %v816
    %v818 = vrot.slane %v817, 1
    %v819 = vadd.f32 %v817, %v818
    %v820 = vadd.f32 %v750, %v819
    %821 = vst [vmem:[#allocation3] sm:$0x1] %v820
    %v822 = vld [vmem:[#allocation3 + $0x1] sm:$0x1]
    %v823 = vmul.f32 %v430, %v430
    %v824 = vmul.f32 %v433, %v433
    %v825 = vmul.f32 %v438, %v438
    %v826 = vmul.f32 %v441, %v441
    %v827 = vmul.f32 %v446, %v446
    %v828 = vmul.f32 %v449, %v449
    %v829 = vmul.f32 %v454, %v454
    %v830 = vmul.f32 %v457, %v457
    %v831 = vmul.f32 %v462, %v462
    %v832 = vmul.f32 %v465, %v465
    %v833 = vmul.f32 %v470, %v470
    %v834 = vmul.f32 %v473, %v473
    %v835 = vmul.f32 %v478, %v478
    %v836 = vmul.f32 %v481, %v481
    %v837 = vmul.f32 %v486, %v486
    %v838 = vmul.f32 %v489, %v489
    %v839 = vmul.f32 %v494, %v494
    %v840 = vmul.f32 %v497, %v497
    %v841 = vmul.f32 %v502, %v502
    %v842 = vmul.f32 %v505, %v505
    %v843 = vmul.f32 %v510, %v510
    %v844 = vmul.f32 %v513, %v513
    %v845 = vmul.f32 %v518, %v518
    %v846 = vmul.f32 %v521, %v521
    %v847 = vmul.f32 %v526, %v526
    %v848 = vmul.f32 %v529, %v529
    %v849 = vmul.f32 %v534, %v534
    %v850 = vmul.f32 %v537, %v537
    %v851 = vmul.f32 %v542, %v542
    %v852 = vmul.f32 %v545, %v545
    %v853 = vmul.f32 %v550, %v550
    %v854 = vmul.f32 %v553, %v553
    %v855 = vmul.f32 %v558, %v558
    %v856 = vmul.f32 %v561, %v561
    %v857 = vmul.f32 %v566, %v566
    %v858 = vmul.f32 %v569, %v569
    %v859 = vmul.f32 %v574, %v574
    %v860 = vmul.f32 %v577, %v577
    %v861 = vmul.f32 %v582, %v582
    %v862 = vmul.f32 %v585, %v585
    %v863 = vmul.f32 %v590, %v590
    %v864 = vmul.f32 %v593, %v593
    %v865 = vmul.f32 %v598, %v598
    %v866 = vmul.f32 %v601, %v601
    %v867 = vmul.f32 %v606, %v606
    %v868 = vmul.f32 %v609, %v609
    %v869 = vmul.f32 %v614, %v614
    %v870 = vmul.f32 %v617, %v617
    %v871 = vmul.f32 %v622, %v622
    %v872 = vmul.f32 %v625, %v625
    %v873 = vmul.f32 %v630, %v630
    %v874 = vmul.f32 %v633, %v633
    %v875 = vmul.f32 %v638, %v638
    %v876 = vmul.f32 %v641, %v641
    %v877 = vmul.f32 %v646, %v646
    %v878 = vmul.f32 %v649, %v649
    %v879 = vmul.f32 %v654, %v654
    %v880 = vmul.f32 %v657, %v657
    %v881 = vmul.f32 %v662, %v662
    %v882 = vmul.f32 %v665, %v665
    %v883 = vmul.f32 %v670, %v670
    %v884 = vmul.f32 %v673, %v673
    %v885 = vmul.f32 %v678, %v678
    %v886 = vmul.f32 %v681, %v681
    %v887 = vadd.f32 %v823, %v824
    %v888 = vadd.f32 %v887, %v825
    %v889 = vadd.f32 %v888, %v826
    %v890 = vadd.f32 %v889, %v827
    %v891 = vadd.f32 %v890, %v828
    %v892 = vadd.f32 %v891, %v829
    %v893 = vadd.f32 %v892, %v830
    %v894 = vadd.f32 %v893, %v831
    %v895 = vadd.f32 %v894, %v832
    %v896 = vadd.f32 %v895, %v833
    %v897 = vadd.f32 %v896, %v834
    %v898 = vadd.f32 %v897, %v835
    %v899 = vadd.f32 %v898, %v836
    %v900 = vadd.f32 %v899, %v837
    %v901 = vadd.f32 %v900, %v838
    %v902 = vadd.f32 %v901, %v839
    %v903 = vadd.f32 %v902, %v840
    %v904 = vadd.f32 %v903, %v841
    %v905 = vadd.f32 %v904, %v842
    %v906 = vadd.f32 %v905, %v843
    %v907 = vadd.f32 %v906, %v844
    %v908 = vadd.f32 %v907, %v845
    %v909 = vadd.f32 %v908, %v846
    %v910 = vadd.f32 %v909, %v847
    %v911 = vadd.f32 %v910, %v848
    %v912 = vadd.f32 %v911, %v849
    %v913 = vadd.f32 %v912, %v850
    %v914 = vadd.f32 %v913, %v851
    %v915 = vadd.f32 %v914, %v852
    %v916 = vadd.f32 %v915, %v853
    %v917 = vadd.f32 %v916, %v854
    %v918 = vadd.f32 %v917, %v855
    %v919 = vadd.f32 %v918, %v856
    %v920 = vadd.f32 %v919, %v857
    %v921 = vadd.f32 %v920, %v858
    %v922 = vadd.f32 %v921, %v859
    %v923 = vadd.f32 %v922, %v860
    %v924 = vadd.f32 %v923, %v861
    %v925 = vadd.f32 %v924, %v862
    %v926 = vadd.f32 %v925, %v863
    %v927 = vadd.f32 %v926, %v864
    %v928 = vadd.f32 %v927, %v865
    %v929 = vadd.f32 %v928, %v866
    %v930 = vadd.f32 %v929, %v867
    %v931 = vadd.f32 %v930, %v868
    %v932 = vadd.f32 %v931, %v869
    %v933 = vadd.f32 %v932, %v870
    %v934 = vadd.f32 %v933, %v871
    %v935 = vadd.f32 %v934, %v872
    %v936 = vadd.f32 %v935, %v873
    %v937 = vadd.f32 %v936, %v874
    %v938 = vadd.f32 %v937, %v875
    %v939 = vadd.f32 %v938, %v876
    %v940 = vadd.f32 %v939, %v877
    %v941 = vadd.f32 %v940, %v878
    %v942 = vadd.f32 %v941, %v879
    %v943 = vadd.f32 %v942, %v880
    %v944 = vadd.f32 %v943, %v881
    %v945 = vadd.f32 %v944, %v882
    %v946 = vadd.f32 %v945, %v883
    %v947 = vadd.f32 %v946, %v884
    %v948 = vadd.f32 %v947, %v885
    %v949 = vadd.f32 %v948, %v886
    %v950 = vrot.slane %v949, 4
    %v951 = vadd.f32 %v949, %v950
    %v952 = vrot.slane %v951, 2
    %v953 = vadd.f32 %v951, %v952
    %v954 = vrot.slane %v953, 1
    %v955 = vadd.f32 %v953, %v954
    %v956 = vadd.f32 %v822, %v955
    %957 = vst [vmem:[#allocation3 + $0x1] sm:$0x1] %v956
    // Predicated region
    $region38: #{critic_forward.5} parent=1 // pred_check
      %p958 = pneg %p70
    $region39: #{critic_forward.5} parent=1 // pred_check_branch
      %960 = sbr.rel (%p958) target = $region41
    $region40: #{critic_forward.5} parent=1 // pred_region
      %v961 = vld [vmem:[#allocation3] sm:$0x1]
      %v962 = vmul.f32 %v961, 0.001953125
      %v963 = vld [vmem:[#allocation3 + $0x1] sm:$0x1]
      %v964 = vmul.f32 %v963, 0.001953125
      %v965 = vmul.f32 %v962, %v962
      %v966 = vsub.f32 %v964, %v965
      %v967 = vmax.f32 %v966, 0.0
      %v968 = vld [vmem:[#allocation9] sm:$0x1]
      %v969 = vadd.f32 %v967, 1e-05
      %v970 = vrsqrt.pop %v969
      %v971 = vmul.f32 %v968, %v970
      %v972 = vld [vmem:[#allocation10] sm:$0x1]
      %v973 = vmul.f32 %v962, %v971
      %v974 = vsub.f32 %v972, %v973
      %v975 = vld [vmem:[#allocation2] sm:$0xff]
      %v976 = vld [vmem:[#allocation2 + $0x8] sm:$0xff]
      %v977 = vld [vmem:[#allocation2 + $0x10] sm:$0xff]
      %v978 = vld [vmem:[#allocation2 + $0x18] sm:$0xff]
      %v979 = vld [vmem:[#allocation2 + $0x20] sm:$0xff]
      %v980 = vld [vmem:[#allocation2 + $0x28] sm:$0xff]
      %v981 = vld [vmem:[#allocation2 + $0x30] sm:$0xff]
      %v982 = vld [vmem:[#allocation2 + $0x38] sm:$0xff]
      %v983 = vld [vmem:[#allocation2 + $0x40] sm:$0xff]
      %v984 = vld [vmem:[#allocation2 + $0x48] sm:$0xff]
      %v985 = vld [vmem:[#allocation2 + $0x50] sm:$0xff]
      %v986 = vld [vmem:[#allocation2 + $0x58] sm:$0xff]
      %v987 = vld [vmem:[#allocation2 + $0x60] sm:$0xff]
      %v988 = vld [vmem:[#allocation2 + $0x68] sm:$0xff]
      %v989 = vld [vmem:[#allocation2 + $0x70] sm:$0xff]
      %v990 = vld [vmem:[#allocation2 + $0x78] sm:$0xff]
      %v991 = vld [vmem:[#allocation2 + $0x80] sm:$0xff]
      %v992 = vld [vmem:[#allocation2 + $0x88] sm:$0xff]
      %v993 = vld [vmem:[#allocation2 + $0x90] sm:$0xff]
      %v994 = vld [vmem:[#allocation2 + $0x98] sm:$0xff]
      %v995 = vld [vmem:[#allocation2 + $0xa0] sm:$0xff]
      %v996 = vld [vmem:[#allocation2 + $0xa8] sm:$0xff]
      %v997 = vld [vmem:[#allocation2 + $0xb0] sm:$0xff]
      %v998 = vld [vmem:[#allocation2 + $0xb8] sm:$0xff]
      %v999 = vld [vmem:[#allocation2 + $0xc0] sm:$0xff]
      %v1000 = vld [vmem:[#allocation2 + $0xc8] sm:$0xff]
      %v1001 = vld [vmem:[#allocation2 + $0xd0] sm:$0xff]
      %v1002 = vld [vmem:[#allocation2 + $0xd8] sm:$0xff]
      %v1003 = vld [vmem:[#allocation2 + $0xe0] sm:$0xff]
      %v1004 = vld [vmem:[#allocation2 + $0xe8] sm:$0xff]
      %v1005 = vld [vmem:[#allocation2 + $0xf0] sm:$0xff]
      %v1006 = vld [vmem:[#allocation2 + $0xf8] sm:$0xff]
      %v1007 = vld [vmem:[#allocation2 + $0x100] sm:$0xff]
      %v1008 = vld [vmem:[#allocation2 + $0x108] sm:$0xff]
      %v1009 = vld [vmem:[#allocation2 + $0x110] sm:$0xff]
      %v1010 = vld [vmem:[#allocation2 + $0x118] sm:$0xff]
      %v1011 = vld [vmem:[#allocation2 + $0x120] sm:$0xff]
      %v1012 = vld [vmem:[#allocation2 + $0x128] sm:$0xff]
      %v1013 = vld [vmem:[#allocation2 + $0x130] sm:$0xff]
      %v1014 = vld [vmem:[#allocation2 + $0x138] sm:$0xff]
      %v1015 = vld [vmem:[#allocation2 + $0x140] sm:$0xff]
      %v1016 = vld [vmem:[#allocation2 + $0x148] sm:$0xff]
      %v1017 = vld [vmem:[#allocation2 + $0x150] sm:$0xff]
      %v1018 = vld [vmem:[#allocation2 + $0x158] sm:$0xff]
      %v1019 = vld [vmem:[#allocation2 + $0x160] sm:$0xff]
      %v1020 = vld [vmem:[#allocation2 + $0x168] sm:$0xff]
      %v1021 = vld [vmem:[#allocation2 + $0x170] sm:$0xff]
      %v1022 = vld [vmem:[#allocation2 + $0x178] sm:$0xff]
      %v1023 = vld [vmem:[#allocation2 + $0x180] sm:$0xff]
      %v1024 = vld [vmem:[#allocation2 + $0x188] sm:$0xff]
      %v1025 = vld [vmem:[#allocation2 + $0x190] sm:$0xff]
      %v1026 = vld [vmem:[#allocation2 + $0x198] sm:$0xff]
      %v1027 = vld [vmem:[#allocation2 + $0x1a0] sm:$0xff]
      %v1028 = vld [vmem:[#allocation2 + $0x1a8] sm:$0xff]
      %v1029 = vld [vmem:[#allocation2 + $0x1b0] sm:$0xff]
      %v1030 = vld [vmem:[#allocation2 + $0x1b8] sm:$0xff]
      %v1031 = vld [vmem:[#allocation2 + $0x1c0] sm:$0xff]
      %v1032 = vld [vmem:[#allocation2 + $0x1c8] sm:$0xff]
      %v1033 = vld [vmem:[#allocation2 + $0x1d0] sm:$0xff]
      %v1034 = vld [vmem:[#allocation2 + $0x1d8] sm:$0xff]
      %v1035 = vld [vmem:[#allocation2 + $0x1e0] sm:$0xff]
      %v1036 = vld [vmem:[#allocation2 + $0x1e8] sm:$0xff]
      %v1037 = vld [vmem:[#allocation2 + $0x1f0] sm:$0xff]
      %v1038 = vld [vmem:[#allocation2 + $0x1f8] sm:$0xff]
      %v1040 = vlaneseq
      %v1041 = vshrl.u32 %v1040, 7
      %v1042 = vsub.s32 0, %v1041
      %v1043 = vrot.slane %v971, %v1042
      %v1045 = vmul.f32 %v975, %v1043
      %v1046 = vmul.f32 %v976, %v1043
      %v1047 = vmul.f32 %v977, %v1043
      %v1048 = vmul.f32 %v978, %v1043
      %v1049 = vmul.f32 %v979, %v1043
      %v1050 = vmul.f32 %v980, %v1043
      %v1051 = vmul.f32 %v981, %v1043
      %v1052 = vmul.f32 %v982, %v1043
      %v1053 = vmul.f32 %v983, %v1043
      %v1054 = vmul.f32 %v984, %v1043
      %v1055 = vmul.f32 %v985, %v1043
      %v1056 = vmul.f32 %v986, %v1043
      %v1057 = vmul.f32 %v987, %v1043
      %v1058 = vmul.f32 %v988, %v1043
      %v1059 = vmul.f32 %v989, %v1043
      %v1060 = vmul.f32 %v990, %v1043
      %v1061 = vmul.f32 %v991, %v1043
      %v1062 = vmul.f32 %v992, %v1043
      %v1063 = vmul.f32 %v993, %v1043
      %v1064 = vmul.f32 %v994, %v1043
      %v1065 = vmul.f32 %v995, %v1043
      %v1066 = vmul.f32 %v996, %v1043
      %v1067 = vmul.f32 %v997, %v1043
      %v1068 = vmul.f32 %v998, %v1043
      %v1069 = vmul.f32 %v999, %v1043
      %v1070 = vmul.f32 %v1000, %v1043
      %v1071 = vmul.f32 %v1001, %v1043
      %v1072 = vmul.f32 %v1002, %v1043
      %v1073 = vmul.f32 %v1003, %v1043
      %v1074 = vmul.f32 %v1004, %v1043
      %v1075 = vmul.f32 %v1005, %v1043
      %v1076 = vmul.f32 %v1006, %v1043
      %v1077 = vmul.f32 %v1007, %v1043
      %v1078 = vmul.f32 %v1008, %v1043
      %v1079 = vmul.f32 %v1009, %v1043
      %v1080 = vmul.f32 %v1010, %v1043
      %v1081 = vmul.f32 %v1011, %v1043
      %v1082 = vmul.f32 %v1012, %v1043
      %v1083 = vmul.f32 %v1013, %v1043
      %v1084 = vmul.f32 %v1014, %v1043
      %v1085 = vmul.f32 %v1015, %v1043
      %v1086 = vmul.f32 %v1016, %v1043
      %v1087 = vmul.f32 %v1017, %v1043
      %v1088 = vmul.f32 %v1018, %v1043
      %v1089 = vmul.f32 %v1019, %v1043
      %v1090 = vmul.f32 %v1020, %v1043
      %v1091 = vmul.f32 %v1021, %v1043
      %v1092 = vmul.f32 %v1022, %v1043
      %v1093 = vmul.f32 %v1023, %v1043
      %v1094 = vmul.f32 %v1024, %v1043
      %v1095 = vmul.f32 %v1025, %v1043
      %v1096 = vmul.f32 %v1026, %v1043
      %v1097 = vmul.f32 %v1027, %v1043
      %v1098 = vmul.f32 %v1028, %v1043
      %v1099 = vmul.f32 %v1029, %v1043
      %v1100 = vmul.f32 %v1030, %v1043
      %v1101 = vmul.f32 %v1031, %v1043
      %v1102 = vmul.f32 %v1032, %v1043
      %v1103 = vmul.f32 %v1033, %v1043
      %v1104 = vmul.f32 %v1034, %v1043
      %v1105 = vmul.f32 %v1035, %v1043
      %v1106 = vmul.f32 %v1036, %v1043
      %v1107 = vmul.f32 %v1037, %v1043
      %v1108 = vmul.f32 %v1038, %v1043
      %v1110 = vlaneseq
      %v1111 = vshrl.u32 %v1110, 7
      %v1112 = vsub.s32 0, %v1111
      %v1113 = vrot.slane %v974, %v1112
      %v1115 = vadd.f32 %v1045, %v1113
      %v1116 = vadd.f32 %v1046, %v1113
      %v1117 = vadd.f32 %v1047, %v1113
      %v1118 = vadd.f32 %v1048, %v1113
      %v1119 = vadd.f32 %v1049, %v1113
      %v1120 = vadd.f32 %v1050, %v1113
      %v1121 = vadd.f32 %v1051, %v1113
      %v1122 = vadd.f32 %v1052, %v1113
      %v1123 = vadd.f32 %v1053, %v1113
      %v1124 = vadd.f32 %v1054, %v1113
      %v1125 = vadd.f32 %v1055, %v1113
      %v1126 = vadd.f32 %v1056, %v1113
      %v1127 = vadd.f32 %v1057, %v1113
      %v1128 = vadd.f32 %v1058, %v1113
      %v1129 = vadd.f32 %v1059, %v1113
      %v1130 = vadd.f32 %v1060, %v1113
      %v1131 = vadd.f32 %v1061, %v1113
      %v1132 = vadd.f32 %v1062, %v1113
      %v1133 = vadd.f32 %v1063, %v1113
      %v1134 = vadd.f32 %v1064, %v1113
      %v1135 = vadd.f32 %v1065, %v1113
      %v1136 = vadd.f32 %v1066, %v1113
      %v1137 = vadd.f32 %v1067, %v1113
      %v1138 = vadd.f32 %v1068, %v1113
      %v1139 = vadd.f32 %v1069, %v1113
      %v1140 = vadd.f32 %v1070, %v1113
      %v1141 = vadd.f32 %v1071, %v1113
      %v1142 = vadd.f32 %v1072, %v1113
      %v1143 = vadd.f32 %v1073, %v1113
      %v1144 = vadd.f32 %v1074, %v1113
      %v1145 = vadd.f32 %v1075, %v1113
      %v1146 = vadd.f32 %v1076, %v1113
      %v1147 = vadd.f32 %v1077, %v1113
      %v1148 = vadd.f32 %v1078, %v1113
      %v1149 = vadd.f32 %v1079, %v1113
      %v1150 = vadd.f32 %v1080, %v1113
      %v1151 = vadd.f32 %v1081, %v1113
      %v1152 = vadd.f32 %v1082, %v1113
      %v1153 = vadd.f32 %v1083, %v1113
      %v1154 = vadd.f32 %v1084, %v1113
      %v1155 = vadd.f32 %v1085, %v1113
      %v1156 = vadd.f32 %v1086, %v1113
      %v1157 = vadd.f32 %v1087, %v1113
      %v1158 = vadd.f32 %v1088, %v1113
      %v1159 = vadd.f32 %v1089, %v1113
      %v1160 = vadd.f32 %v1090, %v1113
      %v1161 = vadd.f32 %v1091, %v1113
      %v1162 = vadd.f32 %v1092, %v1113
      %v1163 = vadd.f32 %v1093, %v1113
      %v1164 = vadd.f32 %v1094, %v1113
      %v1165 = vadd.f32 %v1095, %v1113
      %v1166 = vadd.f32 %v1096, %v1113
      %v1167 = vadd.f32 %v1097, %v1113
      %v1168 = vadd.f32 %v1098, %v1113
      %v1169 = vadd.f32 %v1099, %v1113
      %v1170 = vadd.f32 %v1100, %v1113
      %v1171 = vadd.f32 %v1101, %v1113
      %v1172 = vadd.f32 %v1102, %v1113
      %v1173 = vadd.f32 %v1103, %v1113
      %v1174 = vadd.f32 %v1104, %v1113
      %v1175 = vadd.f32 %v1105, %v1113
      %v1176 = vadd.f32 %v1106, %v1113
      %v1177 = vadd.f32 %v1107, %v1113
      %v1178 = vadd.f32 %v1108, %v1113
      %v1179 = vmul.f32 %v1115, 0.2
      %v1180 = vmul.f32 %v1116, 0.2
      %v1181 = vmul.f32 %v1117, 0.2
      %v1182 = vmul.f32 %v1118, 0.2
      %v1183 = vmul.f32 %v1119, 0.2
      %v1184 = vmul.f32 %v1120, 0.2
      %v1185 = vmul.f32 %v1121, 0.2
      %v1186 = vmul.f32 %v1122, 0.2
      %v1187 = vmul.f32 %v1123, 0.2
      %v1188 = vmul.f32 %v1124, 0.2
      %v1189 = vmul.f32 %v1125, 0.2
      %v1190 = vmul.f32 %v1126, 0.2
      %v1191 = vmul.f32 %v1127, 0.2
      %v1192 = vmul.f32 %v1128, 0.2
      %v1193 = vmul.f32 %v1129, 0.2
      %v1194 = vmul.f32 %v1130, 0.2
      %v1195 = vmul.f32 %v1131, 0.2
      %v1196 = vmul.f32 %v1132, 0.2
      %v1197 = vmul.f32 %v1133, 0.2
      %v1198 = vmul.f32 %v1134, 0.2
      %v1199 = vmul.f32 %v1135, 0.2
      %v1200 = vmul.f32 %v1136, 0.2
      %v1201 = vmul.f32 %v1137, 0.2
      %v1202 = vmul.f32 %v1138, 0.2
      %v1203 = vmul.f32 %v1139, 0.2
      %v1204 = vmul.f32 %v1140, 0.2
      %v1205 = vmul.f32 %v1141, 0.2
      %v1206 = vmul.f32 %v1142, 0.2
      %v1207 = vmul.f32 %v1143, 0.2
      %v1208 = vmul.f32 %v1144, 0.2
      %v1209 = vmul.f32 %v1145, 0.2
      %v1210 = vmul.f32 %v1146, 0.2
      %v1211 = vmul.f32 %v1147, 0.2
      %v1212 = vmul.f32 %v1148, 0.2
      %v1213 = vmul.f32 %v1149, 0.2
      %v1214 = vmul.f32 %v1150, 0.2
      %v1215 = vmul.f32 %v1151, 0.2
      %v1216 = vmul.f32 %v1152, 0.2
      %v1217 = vmul.f32 %v1153, 0.2
      %v1218 = vmul.f32 %v1154, 0.2
      %v1219 = vmul.f32 %v1155, 0.2
      %v1220 = vmul.f32 %v1156, 0.2
      %v1221 = vmul.f32 %v1157, 0.2
      %v1222 = vmul.f32 %v1158, 0.2
      %v1223 = vmul.f32 %v1159, 0.2
      %v1224 = vmul.f32 %v1160, 0.2
      %v1225 = vmul.f32 %v1161, 0.2
      %v1226 = vmul.f32 %v1162, 0.2
      %v1227 = vmul.f32 %v1163, 0.2
      %v1228 = vmul.f32 %v1164, 0.2
      %v1229 = vmul.f32 %v1165, 0.2
      %v1230 = vmul.f32 %v1166, 0.2
      %v1231 = vmul.f32 %v1167, 0.2
      %v1232 = vmul.f32 %v1168, 0.2
      %v1233 = vmul.f32 %v1169, 0.2
      %v1234 = vmul.f32 %v1170, 0.2
      %v1235 = vmul.f32 %v1171, 0.2
      %v1236 = vmul.f32 %v1172, 0.2
      %v1237 = vmul.f32 %v1173, 0.2
      %v1238 = vmul.f32 %v1174, 0.2
      %v1239 = vmul.f32 %v1175, 0.2
      %v1240 = vmul.f32 %v1176, 0.2
      %v1241 = vmul.f32 %v1177, 0.2
      %v1242 = vmul.f32 %v1178, 0.2
      %v1243 = vmax.f32 %v1115, %v1179
      %v1244 = vmax.f32 %v1116, %v1180
      %v1245 = vmax.f32 %v1117, %v1181
      %v1246 = vmax.f32 %v1118, %v1182
      %v1247 = vmax.f32 %v1119, %v1183
      %v1248 = vmax.f32 %v1120, %v1184
      %v1249 = vmax.f32 %v1121, %v1185
      %v1250 = vmax.f32 %v1122, %v1186
      %v1251 = vmax.f32 %v1123, %v1187
      %v1252 = vmax.f32 %v1124, %v1188
      %v1253 = vmax.f32 %v1125, %v1189
      %v1254 = vmax.f32 %v1126, %v1190
      %v1255 = vmax.f32 %v1127, %v1191
      %v1256 = vmax.f32 %v1128, %v1192
      %v1257 = vmax.f32 %v1129, %v1193
      %v1258 = vmax.f32 %v1130, %v1194
      %v1259 = vmax.f32 %v1131, %v1195
      %v1260 = vmax.f32 %v1132, %v1196
      %v1261 = vmax.f32 %v1133, %v1197
      %v1262 = vmax.f32 %v1134, %v1198
      %v1263 = vmax.f32 %v1135, %v1199
      %v1264 = vmax.f32 %v1136, %v1200
      %v1265 = vmax.f32 %v1137, %v1201
      %v1266 = vmax.f32 %v1138, %v1202
      %v1267 = vmax.f32 %v1139, %v1203
      %v1268 = vmax.f32 %v1140, %v1204
      %v1269 = vmax.f32 %v1141, %v1205
      %v1270 = vmax.f32 %v1142, %v1206
      %v1271 = vmax.f32 %v1143, %v1207
      %v1272 = vmax.f32 %v1144, %v1208
      %v1273 = vmax.f32 %v1145, %v1209
      %v1274 = vmax.f32 %v1146, %v1210
      %v1275 = vmax.f32 %v1147, %v1211
      %v1276 = vmax.f32 %v1148, %v1212
      %v1277 = vmax.f32 %v1149, %v1213
      %v1278 = vmax.f32 %v1150, %v1214
      %v1279 = vmax.f32 %v1151, %v1215
      %v1280 = vmax.f32 %v1152, %v1216
      %v1281 = vmax.f32 %v1153, %v1217
      %v1282 = vmax.f32 %v1154, %v1218
      %v1283 = vmax.f32 %v1155, %v1219
      %v1284 = vmax.f32 %v1156, %v1220
      %v1285 = vmax.f32 %v1157, %v1221
      %v1286 = vmax.f32 %v1158, %v1222
      %v1287 = vmax.f32 %v1159, %v1223
      %v1288 = vmax.f32 %v1160, %v1224
      %v1289 = vmax.f32 %v1161, %v1225
      %v1290 = vmax.f32 %v1162, %v1226
      %v1291 = vmax.f32 %v1163, %v1227
      %v1292 = vmax.f32 %v1164, %v1228
      %v1293 = vmax.f32 %v1165, %v1229
      %v1294 = vmax.f32 %v1166, %v1230
      %v1295 = vmax.f32 %v1167, %v1231
      %v1296 = vmax.f32 %v1168, %v1232
      %v1297 = vmax.f32 %v1169, %v1233
      %v1298 = vmax.f32 %v1170, %v1234
      %v1299 = vmax.f32 %v1171, %v1235
      %v1300 = vmax.f32 %v1172, %v1236
      %v1301 = vmax.f32 %v1173, %v1237
      %v1302 = vmax.f32 %v1174, %v1238
      %v1303 = vmax.f32 %v1175, %v1239
      %v1304 = vmax.f32 %v1176, %v1240
      %v1305 = vmax.f32 %v1177, %v1241
      %v1306 = vmax.f32 %v1178, %v1242
      %v1307 = vpack.c.bf16 %v1244, %v1243
      %v1308 = vpack.c.bf16 %v1246, %v1245
      %v1309 = vpack.c.bf16 %v1248, %v1247
      %v1310 = vpack.c.bf16 %v1250, %v1249
      %v1311 = vpack.c.bf16 %v1252, %v1251
      %v1312 = vpack.c.bf16 %v1254, %v1253
      %v1313 = vpack.c.bf16 %v1256, %v1255
      %v1314 = vpack.c.bf16 %v1258, %v1257
      %v1315 = vpack.c.bf16 %v1260, %v1259
      %v1316 = vpack.c.bf16 %v1262, %v1261
      %v1317 = vpack.c.bf16 %v1264, %v1263
      %v1318 = vpack.c.bf16 %v1266, %v1265
      %v1319 = vpack.c.bf16 %v1268, %v1267
      %v1320 = vpack.c.bf16 %v1270, %v1269
      %v1321 = vpack.c.bf16 %v1272, %v1271
      %v1322 = vpack.c.bf16 %v1274, %v1273
      %v1323 = vpack.c.bf16 %v1276, %v1275
      %v1324 = vpack.c.bf16 %v1278, %v1277
      %v1325 = vpack.c.bf16 %v1280, %v1279
      %v1326 = vpack.c.bf16 %v1282, %v1281
      %v1327 = vpack.c.bf16 %v1284, %v1283
      %v1328 = vpack.c.bf16 %v1286, %v1285
      %v1329 = vpack.c.bf16 %v1288, %v1287
      %v1330 = vpack.c.bf16 %v1290, %v1289
      %v1331 = vpack.c.bf16 %v1292, %v1291
      %v1332 = vpack.c.bf16 %v1294, %v1293
      %v1333 = vpack.c.bf16 %v1296, %v1295
      %v1334 = vpack.c.bf16 %v1298, %v1297
      %v1335 = vpack.c.bf16 %v1300, %v1299
      %v1336 = vpack.c.bf16 %v1302, %v1301
      %v1337 = vpack.c.bf16 %v1304, %v1303
      %v1338 = vpack.c.bf16 %v1306, %v1305
      %v1371 = vunpack.c.l.b16 %v1307
      %v1372 = vunpack.c.h.b16 %v1307
      %v1373 = vunpack.c.l.b16 %v1308
      %v1374 = vunpack.c.h.b16 %v1308
      %v1375 = vunpack.c.l.b16 %v1309
      %v1376 = vunpack.c.h.b16 %v1309
      %v1377 = vunpack.c.l.b16 %v1310
      %v1378 = vunpack.c.h.b16 %v1310
      %v1379 = vunpack.c.l.b16 %v1311
      %v1380 = vunpack.c.h.b16 %v1311
      %v1381 = vunpack.c.l.b16 %v1312
      %v1382 = vunpack.c.h.b16 %v1312
      %v1383 = vunpack.c.l.b16 %v1313
      %v1384 = vunpack.c.h.b16 %v1313
      %v1385 = vunpack.c.l.b16 %v1314
      %v1386 = vunpack.c.h.b16 %v1314
      %v1387 = vunpack.c.l.b16 %v1315
      %v1388 = vunpack.c.h.b16 %v1315
      %v1389 = vunpack.c.l.b16 %v1316
      %v1390 = vunpack.c.h.b16 %v1316
      %v1391 = vunpack.c.l.b16 %v1317
      %v1392 = vunpack.c.h.b16 %v1317
      %v1393 = vunpack.c.l.b16 %v1318
      %v1394 = vunpack.c.h.b16 %v1318
      %v1395 = vunpack.c.l.b16 %v1319
      %v1396 = vunpack.c.h.b16 %v1319
      %v1397 = vunpack.c.l.b16 %v1320
      %v1398 = vunpack.c.h.b16 %v1320
      %v1399 = vunpack.c.l.b16 %v1321
      %v1400 = vunpack.c.h.b16 %v1321
      %v1401 = vunpack.c.l.b16 %v1322
      %v1402 = vunpack.c.h.b16 %v1322
      %v1403 = vunpack.c.l.b16 %v1323
      %v1404 = vunpack.c.h.b16 %v1323
      %v1405 = vunpack.c.l.b16 %v1324
      %v1406 = vunpack.c.h.b16 %v1324
      %v1407 = vunpack.c.l.b16 %v1325
      %v1408 = vunpack.c.h.b16 %v1325
      %v1409 = vunpack.c.l.b16 %v1326
      %v1410 = vunpack.c.h.b16 %v1326
      %v1411 = vunpack.c.l.b16 %v1327
      %v1412 = vunpack.c.h.b16 %v1327
      %v1413 = vunpack.c.l.b16 %v1328
      %v1414 = vunpack.c.h.b16 %v1328
      %v1415 = vunpack.c.l.b16 %v1329
      %v1416 = vunpack.c.h.b16 %v1329
      %v1417 = vunpack.c.l.b16 %v1330
      %v1418 = vunpack.c.h.b16 %v1330
      %v1419 = vunpack.c.l.b16 %v1331
      %v1420 = vunpack.c.h.b16 %v1331
      %v1421 = vunpack.c.l.b16 %v1332
      %v1422 = vunpack.c.h.b16 %v1332
      %v1423 = vunpack.c.l.b16 %v1333
      %v1424 = vunpack.c.h.b16 %v1333
      %v1425 = vunpack.c.l.b16 %v1334
      %v1426 = vunpack.c.h.b16 %v1334
      %v1427 = vunpack.c.l.b16 %v1335
      %v1428 = vunpack.c.h.b16 %v1335
      %v1429 = vunpack.c.l.b16 %v1336
      %v1430 = vunpack.c.h.b16 %v1336
      %v1431 = vunpack.c.l.b16 %v1337
      %v1432 = vunpack.c.h.b16 %v1337
      %v1433 = vunpack.c.l.b16 %v1338
      %v1434 = vunpack.c.h.b16 %v1338
      %v1435 = vpack.c.b16 %v1371, %v1371
      %v1436 = vpack.c.b16 %v1372, %v1372
      %v1437 = vpack.c.b16 %v1373, %v1373
      %v1438 = vpack.c.b16 %v1374, %v1374
      %v1439 = vpack.c.b16 %v1375, %v1375
      %v1440 = vpack.c.b16 %v1376, %v1376
      %v1441 = vpack.c.b16 %v1377, %v1377
      %v1442 = vpack.c.b16 %v1378, %v1378
      %v1443 = vpack.c.b16 %v1379, %v1379
      %v1444 = vpack.c.b16 %v1380, %v1380
      %v1445 = vpack.c.b16 %v1381, %v1381
      %v1446 = vpack.c.b16 %v1382, %v1382
      %v1447 = vpack.c.b16 %v1383, %v1383
      %v1448 = vpack.c.b16 %v1384, %v1384
      %v1449 = vpack.c.b16 %v1385, %v1385
      %v1450 = vpack.c.b16 %v1386, %v1386
      %v1451 = vpack.c.b16 %v1387, %v1387
      %v1452 = vpack.c.b16 %v1388, %v1388
      %v1453 = vpack.c.b16 %v1389, %v1389
      %v1454 = vpack.c.b16 %v1390, %v1390
      %v1455 = vpack.c.b16 %v1391, %v1391
      %v1456 = vpack.c.b16 %v1392, %v1392
      %v1457 = vpack.c.b16 %v1393, %v1393
      %v1458 = vpack.c.b16 %v1394, %v1394
      %v1459 = vpack.c.b16 %v1395, %v1395
      %v1460 = vpack.c.b16 %v1396, %v1396
      %v1461 = vpack.c.b16 %v1397, %v1397
      %v1462 = vpack.c.b16 %v1398, %v1398
      %v1463 = vpack.c.b16 %v1399, %v1399
      %v1464 = vpack.c.b16 %v1400, %v1400
      %v1465 = vpack.c.b16 %v1401, %v1401
      %v1466 = vpack.c.b16 %v1402, %v1402
      %v1467 = vpack.c.b16 %v1403, %v1403
      %v1468 = vpack.c.b16 %v1404, %v1404
      %v1469 = vpack.c.b16 %v1405, %v1405
      %v1470 = vpack.c.b16 %v1406, %v1406
      %v1471 = vpack.c.b16 %v1407, %v1407
      %v1472 = vpack.c.b16 %v1408, %v1408
      %v1473 = vpack.c.b16 %v1409, %v1409
      %v1474 = vpack.c.b16 %v1410, %v1410
      %v1475 = vpack.c.b16 %v1411, %v1411
      %v1476 = vpack.c.b16 %v1412, %v1412
      %v1477 = vpack.c.b16 %v1413, %v1413
      %v1478 = vpack.c.b16 %v1414, %v1414
      %v1479 = vpack.c.b16 %v1415, %v1415
      %v1480 = vpack.c.b16 %v1416, %v1416
      %v1481 = vpack.c.b16 %v1417, %v1417
      %v1482 = vpack.c.b16 %v1418, %v1418
      %v1483 = vpack.c.b16 %v1419, %v1419
      %v1484 = vpack.c.b16 %v1420, %v1420
      %v1485 = vpack.c.b16 %v1421, %v1421
      %v1486 = vpack.c.b16 %v1422, %v1422
      %v1487 = vpack.c.b16 %v1423, %v1423
      %v1488 = vpack.c.b16 %v1424, %v1424
      %v1489 = vpack.c.b16 %v1425, %v1425
      %v1490 = vpack.c.b16 %v1426, %v1426
      %v1491 = vpack.c.b16 %v1427, %v1427
      %v1492 = vpack.c.b16 %v1428, %v1428
      %v1493 = vpack.c.b16 %v1429, %v1429
      %v1494 = vpack.c.b16 %v1430, %v1430
      %v1495 = vpack.c.b16 %v1431, %v1431
      %v1496 = vpack.c.b16 %v1432, %v1432
      %v1497 = vpack.c.b16 %v1433, %v1433
      %v1498 = vpack.c.b16 %v1434, %v1434
      %1563 = vst [vmem:[#allocation12] sm:$0xf] %v1435
      %1564 = vst [vmem:[#allocation12 + $0x4] sm:$0xf] %v1436
      %1565 = vst [vmem:[#allocation12 + $0x8] sm:$0xf] %v1437
      %1566 = vst [vmem:[#allocation12 + $0xc] sm:$0xf] %v1438
      %1567 = vst [vmem:[#allocation12 + $0x10] sm:$0xf] %v1439
      %1568 = vst [vmem:[#allocation12 + $0x14] sm:$0xf] %v1440
      %1569 = vst [vmem:[#allocation12 + $0x18] sm:$0xf] %v1441
      %1570 = vst [vmem:[#allocation12 + $0x1c] sm:$0xf] %v1442
      %1571 = vst [vmem:[#allocation12 + $0x20] sm:$0xf] %v1443
      %1572 = vst [vmem:[#allocation12 + $0x24] sm:$0xf] %v1444
      %1573 = vst [vmem:[#allocation12 + $0x28] sm:$0xf] %v1445
      %1574 = vst [vmem:[#allocation12 + $0x2c] sm:$0xf] %v1446
      %1575 = vst [vmem:[#allocation12 + $0x30] sm:$0xf] %v1447
      %1576 = vst [vmem:[#allocation12 + $0x34] sm:$0xf] %v1448
      %1577 = vst [vmem:[#allocation12 + $0x38] sm:$0xf] %v1449
      %1578 = vst [vmem:[#allocation12 + $0x3c] sm:$0xf] %v1450
      %1579 = vst [vmem:[#allocation12 + $0x40] sm:$0xf] %v1451
      %1580 = vst [vmem:[#allocation12 + $0x44] sm:$0xf] %v1452
      %1581 = vst [vmem:[#allocation12 + $0x48] sm:$0xf] %v1453
      %1582 = vst [vmem:[#allocation12 + $0x4c] sm:$0xf] %v1454
      %1583 = vst [vmem:[#allocation12 + $0x50] sm:$0xf] %v1455
      %1584 = vst [vmem:[#allocation12 + $0x54] sm:$0xf] %v1456
      %1585 = vst [vmem:[#allocation12 + $0x58] sm:$0xf] %v1457
      %1586 = vst [vmem:[#allocation12 + $0x5c] sm:$0xf] %v1458
      %1587 = vst [vmem:[#allocation12 + $0x60] sm:$0xf] %v1459
      %1588 = vst [vmem:[#allocation12 + $0x64] sm:$0xf] %v1460
      %1589 = vst [vmem:[#allocation12 + $0x68] sm:$0xf] %v1461
      %1590 = vst [vmem:[#allocation12 + $0x6c] sm:$0xf] %v1462
      %1591 = vst [vmem:[#allocation12 + $0x70] sm:$0xf] %v1463
      %1592 = vst [vmem:[#allocation12 + $0x74] sm:$0xf] %v1464
      %1593 = vst [vmem:[#allocation12 + $0x78] sm:$0xf] %v1465
      %1594 = vst [vmem:[#allocation12 + $0x7c] sm:$0xf] %v1466
      %1595 = vst [vmem:[#allocation12 + $0x80] sm:$0xf] %v1467
      %1596 = vst [vmem:[#allocation12 + $0x84] sm:$0xf] %v1468
      %1597 = vst [vmem:[#allocation12 + $0x88] sm:$0xf] %v1469
      %1598 = vst [vmem:[#allocation12 + $0x8c] sm:$0xf] %v1470
      %1599 = vst [vmem:[#allocation12 + $0x90] sm:$0xf] %v1471
      %1600 = vst [vmem:[#allocation12 + $0x94] sm:$0xf] %v1472
      %1601 = vst [vmem:[#allocation12 + $0x98] sm:$0xf] %v1473
      %1602 = vst [vmem:[#allocation12 + $0x9c] sm:$0xf] %v1474
      %1603 = vst [vmem:[#allocation12 + $0xa0] sm:$0xf] %v1475
      %1604 = vst [vmem:[#allocation12 + $0xa4] sm:$0xf] %v1476
      %1605 = vst [vmem:[#allocation12 + $0xa8] sm:$0xf] %v1477
      %1606 = vst [vmem:[#allocation12 + $0xac] sm:$0xf] %v1478
      %1607 = vst [vmem:[#allocation12 + $0xb0] sm:$0xf] %v1479
      %1608 = vst [vmem:[#allocation12 + $0xb4] sm:$0xf] %v1480
      %1609 = vst [vmem:[#allocation12 + $0xb8] sm:$0xf] %v1481
      %1610 = vst [vmem:[#allocation12 + $0xbc] sm:$0xf] %v1482
      %1611 = vst [vmem:[#allocation12 + $0xc0] sm:$0xf] %v1483
      %1612 = vst [vmem:[#allocation12 + $0xc4] sm:$0xf] %v1484
      %1613 = vst [vmem:[#allocation12 + $0xc8] sm:$0xf] %v1485
      %1614 = vst [vmem:[#allocation12 + $0xcc] sm:$0xf] %v1486
      %1615 = vst [vmem:[#allocation12 + $0xd0] sm:$0xf] %v1487
      %1616 = vst [vmem:[#allocation12 + $0xd4] sm:$0xf] %v1488
      %1617 = vst [vmem:[#allocation12 + $0xd8] sm:$0xf] %v1489
      %1618 = vst [vmem:[#allocation12 + $0xdc] sm:$0xf] %v1490
      %1619 = vst [vmem:[#allocation12 + $0xe0] sm:$0xf] %v1491
      %1620 = vst [vmem:[#allocation12 + $0xe4] sm:$0xf] %v1492
      %1621 = vst [vmem:[#allocation12 + $0xe8] sm:$0xf] %v1493
      %1622 = vst [vmem:[#allocation12 + $0xec] sm:$0xf] %v1494
      %1623 = vst [vmem:[#allocation12 + $0xf0] sm:$0xf] %v1495
      %1624 = vst [vmem:[#allocation12 + $0xf4] sm:$0xf] %v1496
      %1625 = vst [vmem:[#allocation12 + $0xf8] sm:$0xf] %v1497
      %1626 = vst [vmem:[#allocation12 + $0xfc] sm:$0xf] %v1498
    $region41: #{critic_forward.5} parent=1 // pred_fallthru
      _
    // Predicated region
    $region42: #{critic_forward.5} parent=1 // pred_check
      _
    $region43: #{critic_forward.5} parent=1 // pred_check_branch
      %1628 = sbr.rel (0) target = $region45
    $region44: #{critic_forward.5} parent=1 // pred_region
      %s1630 = ssub.s32 4096, 4096
      %1631 = vsyncadd [#allocation6], %s1630
      %s1632 = sshll.u32 [#allocation12], 4
      %s1633 = int_to_ptr.vmem [resolvable:$true] %s1632
      %1638 = dma.vmem_to_hbm [thread:$0]  %s1633, 4096, %s4, [#allocation6], 64, 64, 4
    $region45: #{critic_forward.5} parent=1 // pred_fallthru
      _
    // Predicated region
    $region46: #{critic_forward.5} parent=1 // pred_check
      _
    $region47: #{critic_forward.5} parent=1 // pred_check_branch
      %1640 = sbr.rel (0) target = $region49
    $region48: #{critic_forward.5} parent=1 // pred_region
      %1641 = dma.done [#allocation6], 4096
    $region49: #{critic_forward.5} parent=1 // pred_fallthru
      _
    %1642 = vsyncpa [#allocation5], 1
    %1643 = vsyncpa [#allocation8], 1
    %1644 = vsyncpa [#allocation11], 1
    %1645 = vsyncpa [#allocation6], 1

// kernel: critic_forward.6
$region0: #{critic_forward.6}
  #allocation0 [shape = 'u32[]', space=smem, size = 0x4, offset = 0x4, fixed_abs, tag = 'smem constant byte address 0x4 - core index']
  #allocation1 [shape = 'u32[144,128]{1,0:T(1,128)}', space=vmem, size = 0x12000, scoped, tag = 'internal scratch']
  #allocation2 [shape = 'f32[128,128]{1,0:T(8,128)}', space=vmem, size = 0x10000, scoped, tag = 'scratch operand']
  #allocation3 [shape = 'f32[8,128]{1,0:T(8,128)}', space=vmem, size = 0x1000, scoped, tag = 'scratch operand']
  %s0 = inlined_call_operand.hbm [shape: bf16[128,128], index: 0, kind: input, shape index: {}]
  %s1 = inlined_call_operand.hbm [shape: bf16[128,128], index: 1, kind: input, shape index: {}]
  %s2 = inlined_call_operand.hbm [shape: f32[1,128], index: 2, kind: input, shape index: {}]
  %s3 = inlined_call_operand.hbm [shape: f32[1,128], index: 3, kind: input, shape index: {}]
  %s4 = inlined_call_operand.hbm [shape: bf16[128,128], index: 4, kind: output, shape index: {}]
  %s5 = sld [smem:[#allocation0]]
  $region50: #{critic_forward.6} parent=0
    _
  %s7 = ssub.s32 1, %s5
  %s8 = scalar_select 0, %s7, %s5
  $region1: #{critic_forward.6} parent=0
    #allocation4 [shape = 'u8[32768]{0}', space=vmem, size = 0x8000, scoped, tag = 'input window, operand 0, single buffered']
    #allocation5 [shape = 's32[1]{0}', space=sflag, size = 0x4, scoped, tag = 'scoped memory for critic_forward.6']
    #allocation6 [shape = 's32[1]{0}', space=sflag, size = 0x4, scoped, tag = 'scoped memory for critic_forward.6']
    #allocation7 [shape = 'u8[32768]{0}', space=vmem, size = 0x8000, scoped, tag = 'input window, operand 1, single buffered']
    #allocation8 [shape = 's32[1]{0}', space=sflag, size = 0x4, scoped, tag = 'scoped memory for critic_forward.6']
    #allocation9 [shape = 'u8[512]{0}', space=vmem, size = 0x400, scoped, tag = 'input window, operand 2, single buffered']
    #allocation10 [shape = 'u8[512]{0}', space=vmem, size = 0x400, scoped, tag = 'input window, operand 3, single buffered']
    #allocation11 [shape = 's32[1]{0}', space=sflag, size = 0x4, scoped, tag = 'scoped memory for critic_forward.6']
    #allocation12 [shape = 'u8[32768]{0}', space=vmem, size = 0x8000, scoped, tag = 'output window, operand 0, single buffered']
    %9 = vsyncpa [#allocation5], 0
    %10 = vsyncpa [#allocation8], 0
    %11 = vsyncpa [#allocation11], 0
    %12 = vsyncpa [#allocation6], 0
    // Predicated region
    $region2: #{critic_forward.6} parent=1 // pred_check
      _
    $region3: #{critic_forward.6} parent=1 // pred_check_branch
      %14 = sbr.rel (0) target = $region5
    $region4: #{critic_forward.6} parent=1 // pred_region
      %s16 = ssub.s32 1024, 1024
      %17 = vsyncadd [#allocation5], %s16
      %s18 = sshll.u32 [#allocation4], 4
      %s19 = int_to_ptr.vmem [resolvable:$true] %s18
      %24 = dma.hbm_to_vmem [thread:$0]  %s0, 1024, %s19, [#allocation5], 64, 64, 4
    $region5: #{critic_forward.6} parent=1 // pred_fallthru
      _
    // Predicated region
    $region6: #{critic_forward.6} parent=1 // pred_check
      _
    $region7: #{critic_forward.6} parent=1 // pred_check_branch
      %26 = sbr.rel (0) target = $region9
    $region8: #{critic_forward.6} parent=1 // pred_region
      %s28 = ssub.s32 1024, 1024
      %29 = vsyncadd [#allocation8], %s28
      %s30 = sshll.u32 [#allocation7], 4
      %s31 = int_to_ptr.vmem [resolvable:$true] %s30
      %36 = dma.hbm_to_vmem [thread:$0]  %s1, 1024, %s31, [#allocation8], 64, 64, 4
    $region9: #{critic_forward.6} parent=1 // pred_fallthru
      _
    // Predicated region
    $region10: #{critic_forward.6} parent=1 // pred_check
      _
    $region11: #{critic_forward.6} parent=1 // pred_check_branch
      %38 = sbr.rel (0) target = $region13
    $region12: #{critic_forward.6} parent=1 // pred_region
      %s40 = ssub.s32 16, 16
      %41 = vsyncadd [#allocation8], %s40
      %s43 = sshll.u32 [#allocation9], 4
      %s44 = int_to_ptr.vmem [resolvable:$true] %s43
      %46 = dma.hbm_to_vmem [thread:$0]  %s2, 16, %s44, [#allocation8]
    $region13: #{critic_forward.6} parent=1 // pred_fallthru
      _
    // Predicated region
    $region14: #{critic_forward.6} parent=1 // pred_check
      _
    $region15: #{critic_forward.6} parent=1 // pred_check_branch
      %48 = sbr.rel (0) target = $region17
    $region16: #{critic_forward.6} parent=1 // pred_region
      %s50 = ssub.s32 16, 16
      %51 = vsyncadd [#allocation11], %s50
      %s53 = sshll.u32 [#allocation10], 4
      %s54 = int_to_ptr.vmem [resolvable:$true] %s53
      %56 = dma.hbm_to_vmem [thread:$0]  %s3, 16, %s54, [#allocation11]
    $region17: #{critic_forward.6} parent=1 // pred_fallthru
      _
    // Predicated region
    $region18: #{critic_forward.6} parent=1 // pred_check
      _
    $region19: #{critic_forward.6} parent=1 // pred_check_branch
      %58 = sbr.rel (0) target = $region21
    $region20: #{critic_forward.6} parent=1 // pred_region
      %59 = dma.done [#allocation5], 1024
    $region21: #{critic_forward.6} parent=1 // pred_fallthru
      _
    // Predicated region
    $region22: #{critic_forward.6} parent=1 // pred_check
      _
    $region23: #{critic_forward.6} parent=1 // pred_check_branch
      %61 = sbr.rel (0) target = $region25
    $region24: #{critic_forward.6} parent=1 // pred_region
      %62 = dma.done [#allocation8], 1024
    $region25: #{critic_forward.6} parent=1 // pred_fallthru
      _
    // Predicated region
    $region26: #{critic_forward.6} parent=1 // pred_check
      _
    $region27: #{critic_forward.6} parent=1 // pred_check_branch
      %64 = sbr.rel (0) target = $region29
    $region28: #{critic_forward.6} parent=1 // pred_region
      %65 = dma.done [#allocation8], 16
    $region29: #{critic_forward.6} parent=1 // pred_fallthru
      _
    // Predicated region
    $region30: #{critic_forward.6} parent=1 // pred_check
      _
    $region31: #{critic_forward.6} parent=1 // pred_check_branch
      %67 = sbr.rel (0) target = $region33
    $region32: #{critic_forward.6} parent=1 // pred_region
      %68 = dma.done [#allocation11], 16
    $region33: #{critic_forward.6} parent=1 // pred_fallthru
      _
    %p70 = scmp.eq.s32.totalorder 0, 0
    // Predicated region
    $region34: #{critic_forward.6} parent=1 // pred_check
      %p71 = pneg %p70
    $region35: #{critic_forward.6} parent=1 // pred_check_branch
      %73 = sbr.rel (%p71) target = $region37
    $region36: #{critic_forward.6} parent=1 // pred_region
      %74 = vst [vmem:[#allocation3] sm:$0xff] 0.0
    $region37: #{critic_forward.6} parent=1 // pred_fallthru
      _
    %v75 = vld [vmem:[#allocation4] sm:$0xf]
    %v76 = vld [vmem:[#allocation4 + $0x4] sm:$0xf]
    %v77 = vld [vmem:[#allocation4 + $0x8] sm:$0xf]
    %v78 = vld [vmem:[#allocation4 + $0xc] sm:$0xf]
    %v79 = vld [vmem:[#allocation4 + $0x10] sm:$0xf]
    %v80 = vld [vmem:[#allocation4 + $0x14] sm:$0xf]
    %v81 = vld [vmem:[#allocation4 + $0x18] sm:$0xf]
    %v82 = vld [vmem:[#allocation4 + $0x1c] sm:$0xf]
    %v83 = vld [vmem:[#allocation4 + $0x20] sm:$0xf]
    %v84 = vld [vmem:[#allocation4 + $0x24] sm:$0xf]
    %v85 = vld [vmem:[#allocation4 + $0x28] sm:$0xf]
    %v86 = vld [vmem:[#allocation4 + $0x2c] sm:$0xf]
    %v87 = vld [vmem:[#allocation4 + $0x30] sm:$0xf]
    %v88 = vld [vmem:[#allocation4 + $0x34] sm:$0xf]
    %v89 = vld [vmem:[#allocation4 + $0x38] sm:$0xf]
    %v90 = vld [vmem:[#allocation4 + $0x3c] sm:$0xf]
    %v91 = vld [vmem:[#allocation7] sm:$0xf]
    %v92 = vld [vmem:[#allocation7 + $0x4] sm:$0xf]
    %v93 = vld [vmem:[#allocation7 + $0x8] sm:$0xf]
    %v94 = vld [vmem:[#allocation7 + $0xc] sm:$0xf]
    %v95 = vld [vmem:[#allocation7 + $0x10] sm:$0xf]
    %v96 = vld [vmem:[#allocation7 + $0x14] sm:$0xf]
    %v97 = vld [vmem:[#allocation7 + $0x18] sm:$0xf]
    %v98 = vld [vmem:[#allocation7 + $0x1c] sm:$0xf]
    %v99 = vld [vmem:[#allocation7 + $0x20] sm:$0xf]
    %v100 = vld [vmem:[#allocation7 + $0x24] sm:$0xf]
    %v101 = vld [vmem:[#allocation7 + $0x28] sm:$0xf]
    %v102 = vld [vmem:[#allocation7 + $0x2c] sm:$0xf]
    %v103 = vld [vmem:[#allocation7 + $0x30] sm:$0xf]
    %v104 = vld [vmem:[#allocation7 + $0x34] sm:$0xf]
    %v105 = vld [vmem:[#allocation7 + $0x38] sm:$0xf]
    %v106 = vld [vmem:[#allocation7 + $0x3c] sm:$0xf]
    %v123 = vunpack.c.l.b16 %v75
    %v124 = vunpack.c.l.b16 %v76
    %v125 = vunpack.c.l.b16 %v77
    %v126 = vunpack.c.l.b16 %v78
    %v127 = vunpack.c.l.b16 %v79
    %v128 = vunpack.c.l.b16 %v80
    %v129 = vunpack.c.l.b16 %v81
    %v130 = vunpack.c.l.b16 %v82
    %v131 = vunpack.c.l.b16 %v83
    %v132 = vunpack.c.l.b16 %v84
    %v133 = vunpack.c.l.b16 %v85
    %v134 = vunpack.c.l.b16 %v86
    %v135 = vunpack.c.l.b16 %v87
    %v136 = vunpack.c.l.b16 %v88
    %v137 = vunpack.c.l.b16 %v89
    %v138 = vunpack.c.l.b16 %v90
    %v139 = vpack.c.b16 %v124, %v123
    %v140 = vpack.c.b16 %v126, %v125
    %v141 = vpack.c.b16 %v128, %v127
    %v142 = vpack.c.b16 %v130, %v129
    %v143 = vpack.c.b16 %v132, %v131
    %v144 = vpack.c.b16 %v134, %v133
    %v145 = vpack.c.b16 %v136, %v135
    %v146 = vpack.c.b16 %v138, %v137
    %v171 = vunpack.c.l.b16 %v91
    %v172 = vunpack.c.l.b16 %v92
    %v173 = vunpack.c.l.b16 %v93
    %v174 = vunpack.c.l.b16 %v94
    %v175 = vunpack.c.l.b16 %v95
    %v176 = vunpack.c.l.b16 %v96
    %v177 = vunpack.c.l.b16 %v97
    %v178 = vunpack.c.l.b16 %v98
    %v179 = vunpack.c.l.b16 %v99
    %v180 = vunpack.c.l.b16 %v100
    %v181 = vunpack.c.l.b16 %v101
    %v182 = vunpack.c.l.b16 %v102
    %v183 = vunpack.c.l.b16 %v103
    %v184 = vunpack.c.l.b16 %v104
    %v185 = vunpack.c.l.b16 %v105
    %v186 = vunpack.c.l.b16 %v106
    %v187 = vpack.c.b16 %v172, %v171
    %v188 = vpack.c.b16 %v174, %v173
    %v189 = vpack.c.b16 %v176, %v175
    %v190 = vpack.c.b16 %v178, %v177
    %v191 = vpack.c.b16 %v180, %v179
    %v192 = vpack.c.b16 %v182, %v181
    %v193 = vpack.c.b16 %v184, %v183
    %v194 = vpack.c.b16 %v186, %v185
    %203 = vmatprep.subr.bf16.mxu0 0
    %204 = vmatpush1.bf16.msra.mxu0 %v187
    %205 = vmatprep.subr.bf16.mxu0 0
    %206 = vmatpush1.bf16.msra.mxu0 %v188
    %207 = vmatprep.subr.bf16.mxu0 0
    %208 = vmatpush1.bf16.msra.mxu0 %v189
    %209 = vmatprep.subr.bf16.mxu0 0
    %210 = vmatpush1.bf16.msra.mxu0 %v190
    %211 = vmatprep.subr.bf16.mxu0 0
    %212 = vmatpush1.bf16.msra.mxu0 %v191
    %213 = vmatprep.subr.bf16.mxu0 0
    %214 = vmatpush1.bf16.msra.mxu0 %v192
    %215 = vmatprep.subr.bf16.mxu0 0
    %216 = vmatpush1.bf16.msra.mxu0 %v193
    %217 = vmatprep.subr.bf16.mxu0 0
    %218 = vmatpush1.bf16.msra.mxu0 %v194
    %219 = vmatprep.subr.bf16.mxu0 0
    %220 = vmatpush1.bf16.msra.mxu0 0
    %221 = vmatprep.subr.bf16.mxu0 0
    %222 = vmatpush1.bf16.msra.mxu0 0
    %223 = vmatprep.subr.bf16.mxu0 0
    %224 = vmatpush1.bf16.msra.mxu0 0
    %225 = vmatprep.subr.bf16.mxu0 0
    %226 = vmatpush1.bf16.msra.mxu0 0
    %227 = vmatprep.subr.bf16.mxu0 0
    %228 = vmatpush1.bf16.msra.mxu0 0
    %229 = vmatprep.subr.bf16.mxu0 0
    %230 = vmatpush1.bf16.msra.mxu0 0
    %231 = vmatprep.subr.bf16.mxu0 0
    %232 = vmatpush1.bf16.msra.mxu0 0
    %233 = vmatprep.subr.bf16.mxu0 0
    %234 = vmatpush1.bf16.msra.mxu0 0
    %235 = vmatprep.mubr.bf16.mxu0 0
    %236 = vmatmul.mubr.bf16.gmra.mrb[0].mxu0 %v139
    %v237 = vpop.f32.mrb[0].mxu0
    %v238 = vadd.f32 0.0, %v237
    %v239 = vpop.f32.mrb[0].mxu0
    %v240 = vpop.f32.mrb[0].mxu0
    %v241 = vadd.f32 0.0, %v240
    %v242 = vpop.f32.mrb[0].mxu0
    %243 = vmatprep.mubr.bf16.mxu0 0
    %244 = vmatmul.mubr.bf16.gmra.mrb[0].mxu0 %v140
    %v245 = vpop.f32.mrb[0].mxu0
    %v246 = vadd.f32 0.0, %v245
    %v247 = vpop.f32.mrb[0].mxu0
    %v248 = vpop.f32.mrb[0].mxu0
    %v249 = vadd.f32 0.0, %v248
    %v250 = vpop.f32.mrb[0].mxu0
    %251 = vmatprep.mubr.bf16.mxu0 0
    %252 = vmatmul.mubr.bf16.gmra.mrb[0].mxu0 %v141
    %v253 = vpop.f32.mrb[0].mxu0
    %v254 = vadd.f32 0.0, %v253
    %v255 = vpop.f32.mrb[0].mxu0
    %v256 = vpop.f32.mrb[0].mxu0
    %v257 = vadd.f32 0.0, %v256
    %v258 = vpop.f32.mrb[0].mxu0
    %259 = vmatprep.mubr.bf16.mxu0 0
    %260 = vmatmul.mubr.bf16.gmra.mrb[0].mxu0 %v142
    %v261 = vpop.f32.mrb[0].mxu0
    %v262 = vadd.f32 0.0, %v261
    %v263 = vpop.f32.mrb[0].mxu0
    %v264 = vpop.f32.mrb[0].mxu0
    %v265 = vadd.f32 0.0, %v264
    %v266 = vpop.f32.mrb[0].mxu0
    %267 = vmatprep.mubr.bf16.mxu0 0
    %268 = vmatmul.mubr.bf16.gmra.mrb[0].mxu0 %v143
    %v269 = vpop.f32.mrb[0].mxu0
    %v270 = vadd.f32 0.0, %v269
    %v271 = vpop.f32.mrb[0].mxu0
    %v272 = vpop.f32.mrb[0].mxu0
    %v273 = vadd.f32 0.0, %v272
    %v274 = vpop.f32.mrb[0].mxu0
    %275 = vmatprep.mubr.bf16.mxu0 0
    %276 = vmatmul.mubr.bf16.gmra.mrb[0].mxu0 %v144
    %v277 = vpop.f32.mrb[0].mxu0
    %v278 = vadd.f32 0.0, %v277
    %v279 = vpop.f32.mrb[0].mxu0
    %v280 = vpop.f32.mrb[0].mxu0
    %v281 = vadd.f32 0.0, %v280
    %v282 = vpop.f32.mrb[0].mxu0
    %283 = vmatprep.mubr.bf16.mxu0 0
    %284 = vmatmul.mubr.bf16.gmra.mrb[0].mxu0 %v145
    %v285 = vpop.f32.mrb[0].mxu0
    %v286 = vadd.f32 0.0, %v285
    %v287 = vpop.f32.mrb[0].mxu0
    %v288 = vpop.f32.mrb[0].mxu0
    %v289 = vadd.f32 0.0, %v288
    %v290 = vpop.f32.mrb[0].mxu0
    %291 = vmatprep.mubr.bf16.mxu0 0
    %292 = vmatmul.mubr.bf16.gmra.mrb[0].mxu0 %v146
    %v293 = vpop.f32.mrb[0].mxu0
    %v294 = vadd.f32 0.0, %v293
    %v295 = vpop.f32.mrb[0].mxu0
    %v296 = vpop.f32.mrb[0].mxu0
    %v297 = vadd.f32 0.0, %v296
    %v298 = vpop.f32.mrb[0].mxu0
    %299 = vdwg.mxu0
    %s300 = smul.u32 0, 128
    %s301 = scalar_lea.vmem [#allocation2], %s300
    %302 = vst [vmem:[%s301] sm:$0xff] %v238
    %303 = vst [vmem:[%s301 + $0x8] sm:$0xff] %v241
    %304 = vst [vmem:[%s301 + $0x10] sm:$0xff] %v246
    %305 = vst [vmem:[%s301 + $0x18] sm:$0xff] %v249
    %306 = vst [vmem:[%s301 + $0x20] sm:$0xff] %v254
    %307 = vst [vmem:[%s301 + $0x28] sm:$0xff] %v257
    %308 = vst [vmem:[%s301 + $0x30] sm:$0xff] %v262
    %309 = vst [vmem:[%s301 + $0x38] sm:$0xff] %v265
    %310 = vst [vmem:[%s301 + $0x40] sm:$0xff] %v270
    %311 = vst [vmem:[%s301 + $0x48] sm:$0xff] %v273
    %312 = vst [vmem:[%s301 + $0x50] sm:$0xff] %v278
    %313 = vst [vmem:[%s301 + $0x58] sm:$0xff] %v281
    %314 = vst [vmem:[%s301 + $0x60] sm:$0xff] %v286
    %315 = vst [vmem:[%s301 + $0x68] sm:$0xff] %v289
    %316 = vst [vmem:[%s301 + $0x70] sm:$0xff] %v294
    %317 = vst [vmem:[%s301 + $0x78] sm:$0xff] %v297
    %v318 = vld [vmem:[#allocation3] sm:$0x1]
    %v319 = vadd.f32 %v238, %v241
    %v320 = vadd.f32 %v319, %v246
    %v321 = vadd.f32 %v320, %v249
    %v322 = vadd.f32 %v321, %v254
    %v323 = vadd.f32 %v322, %v257
    %v324 = vadd.f32 %v323, %v262
    %v325 = vadd.f32 %v324, %v265
    %v326 = vadd.f32 %v325, %v270
    %v327 = vadd.f32 %v326, %v273
    %v328 = vadd.f32 %v327, %v278
    %v329 = vadd.f32 %v328, %v281
    %v330 = vadd.f32 %v329, %v286
    %v331 = vadd.f32 %v330, %v289
    %v332 = vadd.f32 %v331, %v294
    %v333 = vadd.f32 %v332, %v297
    %v334 = vrot.slane %v333, 4
    %v335 = vadd.f32 %v333, %v334
    %v336 = vrot.slane %v335, 2
    %v337 = vadd.f32 %v335, %v336
    %v338 = vrot.slane %v337, 1
    %v339 = vadd.f32 %v337, %v338
    %v340 = vadd.f32 %v318, %v339
    %341 = vst [vmem:[#allocation3] sm:$0x1] %v340
    %v342 = vld [vmem:[#allocation3 + $0x1] sm:$0x1]
    %v343 = vmul.f32 %v238, %v238
    %v344 = vmul.f32 %v241, %v241
    %v345 = vmul.f32 %v246, %v246
    %v346 = vmul.f32 %v249, %v249
    %v347 = vmul.f32 %v254, %v254
    %v348 = vmul.f32 %v257, %v257
    %v349 = vmul.f32 %v262, %v262
    %v350 = vmul.f32 %v265, %v265
    %v351 = vmul.f32 %v270, %v270
    %v352 = vmul.f32 %v273, %v273
    %v353 = vmul.f32 %v278, %v278
    %v354 = vmul.f32 %v281, %v281
    %v355 = vmul.f32 %v286, %v286
    %v356 = vmul.f32 %v289, %v289
    %v357 = vmul.f32 %v294, %v294
    %v358 = vmul.f32 %v297, %v297
    %v359 = vadd.f32 %v343, %v344
    %v360 = vadd.f32 %v359, %v345
    %v361 = vadd.f32 %v360, %v346
    %v362 = vadd.f32 %v361, %v347
    %v363 = vadd.f32 %v362, %v348
    %v364 = vadd.f32 %v363, %v349
    %v365 = vadd.f32 %v364, %v350
    %v366 = vadd.f32 %v365, %v351
    %v367 = vadd.f32 %v366, %v352
    %v368 = vadd.f32 %v367, %v353
    %v369 = vadd.f32 %v368, %v354
    %v370 = vadd.f32 %v369, %v355
    %v371 = vadd.f32 %v370, %v356
    %v372 = vadd.f32 %v371, %v357
    %v373 = vadd.f32 %v372, %v358
    %v374 = vrot.slane %v373, 4
    %v375 = vadd.f32 %v373, %v374
    %v376 = vrot.slane %v375, 2
    %v377 = vadd.f32 %v375, %v376
    %v378 = vrot.slane %v377, 1
    %v379 = vadd.f32 %v377, %v378
    %v380 = vadd.f32 %v342, %v379
    %381 = vst [vmem:[#allocation3 + $0x1] sm:$0x1] %v380
    // Predicated region
    $region38: #{critic_forward.6} parent=1 // pred_check
      %p382 = pneg %p70
    $region39: #{critic_forward.6} parent=1 // pred_check_branch
      %384 = sbr.rel (%p382) target = $region41
    $region40: #{critic_forward.6} parent=1 // pred_region
      %v385 = vld [vmem:[#allocation3] sm:$0x1]
      %v386 = vmul.f32 %v385, 0.0078125
      %v387 = vld [vmem:[#allocation3 + $0x1] sm:$0x1]
      %v388 = vmul.f32 %v387, 0.0078125
      %v389 = vmul.f32 %v386, %v386
      %v390 = vsub.f32 %v388, %v389
      %v391 = vmax.f32 %v390, 0.0
      %v392 = vld [vmem:[#allocation9] sm:$0x1]
      %v393 = vadd.f32 %v391, 1e-05
      %v394 = vrsqrt.pop %v393
      %v395 = vmul.f32 %v392, %v394
      %v396 = vld [vmem:[#allocation10] sm:$0x1]
      %v397 = vmul.f32 %v386, %v395
      %v398 = vsub.f32 %v396, %v397
      %v399 = vld [vmem:[#allocation2] sm:$0xff]
      %v400 = vld [vmem:[#allocation2 + $0x8] sm:$0xff]
      %v401 = vld [vmem:[#allocation2 + $0x10] sm:$0xff]
      %v402 = vld [vmem:[#allocation2 + $0x18] sm:$0xff]
      %v403 = vld [vmem:[#allocation2 + $0x20] sm:$0xff]
      %v404 = vld [vmem:[#allocation2 + $0x28] sm:$0xff]
      %v405 = vld [vmem:[#allocation2 + $0x30] sm:$0xff]
      %v406 = vld [vmem:[#allocation2 + $0x38] sm:$0xff]
      %v407 = vld [vmem:[#allocation2 + $0x40] sm:$0xff]
      %v408 = vld [vmem:[#allocation2 + $0x48] sm:$0xff]
      %v409 = vld [vmem:[#allocation2 + $0x50] sm:$0xff]
      %v410 = vld [vmem:[#allocation2 + $0x58] sm:$0xff]
      %v411 = vld [vmem:[#allocation2 + $0x60] sm:$0xff]
      %v412 = vld [vmem:[#allocation2 + $0x68] sm:$0xff]
      %v413 = vld [vmem:[#allocation2 + $0x70] sm:$0xff]
      %v414 = vld [vmem:[#allocation2 + $0x78] sm:$0xff]
      %v416 = vlaneseq
      %v417 = vshrl.u32 %v416, 7
      %v418 = vsub.s32 0, %v417
      %v419 = vrot.slane %v395, %v418
      %v421 = vmul.f32 %v399, %v419
      %v422 = vmul.f32 %v400, %v419
      %v423 = vmul.f32 %v401, %v419
      %v424 = vmul.f32 %v402, %v419
      %v425 = vmul.f32 %v403, %v419
      %v426 = vmul.f32 %v404, %v419
      %v427 = vmul.f32 %v405, %v419
      %v428 = vmul.f32 %v406, %v419
      %v429 = vmul.f32 %v407, %v419
      %v430 = vmul.f32 %v408, %v419
      %v431 = vmul.f32 %v409, %v419
      %v432 = vmul.f32 %v410, %v419
      %v433 = vmul.f32 %v411, %v419
      %v434 = vmul.f32 %v412, %v419
      %v435 = vmul.f32 %v413, %v419
      %v436 = vmul.f32 %v414, %v419
      %v438 = vlaneseq
      %v439 = vshrl.u32 %v438, 7
      %v440 = vsub.s32 0, %v439
      %v441 = vrot.slane %v398, %v440
      %v443 = vadd.f32 %v421, %v441
      %v444 = vadd.f32 %v422, %v441
      %v445 = vadd.f32 %v423, %v441
      %v446 = vadd.f32 %v424, %v441
      %v447 = vadd.f32 %v425, %v441
      %v448 = vadd.f32 %v426, %v441
      %v449 = vadd.f32 %v427, %v441
      %v450 = vadd.f32 %v428, %v441
      %v451 = vadd.f32 %v429, %v441
      %v452 = vadd.f32 %v430, %v441
      %v453 = vadd.f32 %v431, %v441
      %v454 = vadd.f32 %v432, %v441
      %v455 = vadd.f32 %v433, %v441
      %v456 = vadd.f32 %v434, %v441
      %v457 = vadd.f32 %v435, %v441
      %v458 = vadd.f32 %v436, %v441
      %v459 = vmul.f32 %v443, 0.2
      %v460 = vmul.f32 %v444, 0.2
      %v461 = vmul.f32 %v445, 0.2
      %v462 = vmul.f32 %v446, 0.2
      %v463 = vmul.f32 %v447, 0.2
      %v464 = vmul.f32 %v448, 0.2
      %v465 = vmul.f32 %v449, 0.2
      %v466 = vmul.f32 %v450, 0.2
      %v467 = vmul.f32 %v451, 0.2
      %v468 = vmul.f32 %v452, 0.2
      %v469 = vmul.f32 %v453, 0.2
      %v470 = vmul.f32 %v454, 0.2
      %v471 = vmul.f32 %v455, 0.2
      %v472 = vmul.f32 %v456, 0.2
      %v473 = vmul.f32 %v457, 0.2
      %v474 = vmul.f32 %v458, 0.2
      %v475 = vmax.f32 %v443, %v459
      %v476 = vmax.f32 %v444, %v460
      %v477 = vmax.f32 %v445, %v461
      %v478 = vmax.f32 %v446, %v462
      %v479 = vmax.f32 %v447, %v463
      %v480 = vmax.f32 %v448, %v464
      %v481 = vmax.f32 %v449, %v465
      %v482 = vmax.f32 %v450, %v466
      %v483 = vmax.f32 %v451, %v467
      %v484 = vmax.f32 %v452, %v468
      %v485 = vmax.f32 %v453, %v469
      %v486 = vmax.f32 %v454, %v470
      %v487 = vmax.f32 %v455, %v471
      %v488 = vmax.f32 %v456, %v472
      %v489 = vmax.f32 %v457, %v473
      %v490 = vmax.f32 %v458, %v474
      %v491 = vpack.c.bf16 %v476, %v475
      %v492 = vpack.c.bf16 %v478, %v477
      %v493 = vpack.c.bf16 %v480, %v479
      %v494 = vpack.c.bf16 %v482, %v481
      %v495 = vpack.c.bf16 %v484, %v483
      %v496 = vpack.c.bf16 %v486, %v485
      %v497 = vpack.c.bf16 %v488, %v487
      %v498 = vpack.c.bf16 %v490, %v489
      %v507 = vunpack.c.l.b16 %v491
      %v508 = vunpack.c.h.b16 %v491
      %v509 = vunpack.c.l.b16 %v492
      %v510 = vunpack.c.h.b16 %v492
      %v511 = vunpack.c.l.b16 %v493
      %v512 = vunpack.c.h.b16 %v493
      %v513 = vunpack.c.l.b16 %v494
      %v514 = vunpack.c.h.b16 %v494
      %v515 = vunpack.c.l.b16 %v495
      %v516 = vunpack.c.h.b16 %v495
      %v517 = vunpack.c.l.b16 %v496
      %v518 = vunpack.c.h.b16 %v496
      %v519 = vunpack.c.l.b16 %v497
      %v520 = vunpack.c.h.b16 %v497
      %v521 = vunpack.c.l.b16 %v498
      %v522 = vunpack.c.h.b16 %v498
      %v523 = vpack.c.b16 %v507, %v507
      %v524 = vpack.c.b16 %v508, %v508
      %v525 = vpack.c.b16 %v509, %v509
      %v526 = vpack.c.b16 %v510, %v510
      %v527 = vpack.c.b16 %v511, %v511
      %v528 = vpack.c.b16 %v512, %v512
      %v529 = vpack.c.b16 %v513, %v513
      %v530 = vpack.c.b16 %v514, %v514
      %v531 = vpack.c.b16 %v515, %v515
      %v532 = vpack.c.b16 %v516, %v516
      %v533 = vpack.c.b16 %v517, %v517
      %v534 = vpack.c.b16 %v518, %v518
      %v535 = vpack.c.b16 %v519, %v519
      %v536 = vpack.c.b16 %v520, %v520
      %v537 = vpack.c.b16 %v521, %v521
      %v538 = vpack.c.b16 %v522, %v522
      %555 = vst [vmem:[#allocation12] sm:$0xf] %v523
      %556 = vst [vmem:[#allocation12 + $0x4] sm:$0xf] %v524
      %557 = vst [vmem:[#allocation12 + $0x8] sm:$0xf] %v525
      %558 = vst [vmem:[#allocation12 + $0xc] sm:$0xf] %v526
      %559 = vst [vmem:[#allocation12 + $0x10] sm:$0xf] %v527
      %560 = vst [vmem:[#allocation12 + $0x14] sm:$0xf] %v528
      %561 = vst [vmem:[#allocation12 + $0x18] sm:$0xf] %v529
      %562 = vst [vmem:[#allocation12 + $0x1c] sm:$0xf] %v530
      %563 = vst [vmem:[#allocation12 + $0x20] sm:$0xf] %v531
      %564 = vst [vmem:[#allocation12 + $0x24] sm:$0xf] %v532
      %565 = vst [vmem:[#allocation12 + $0x28] sm:$0xf] %v533
      %566 = vst [vmem:[#allocation12 + $0x2c] sm:$0xf] %v534
      %567 = vst [vmem:[#allocation12 + $0x30] sm:$0xf] %v535
      %568 = vst [vmem:[#allocation12 + $0x34] sm:$0xf] %v536
      %569 = vst [vmem:[#allocation12 + $0x38] sm:$0xf] %v537
      %570 = vst [vmem:[#allocation12 + $0x3c] sm:$0xf] %v538
    $region41: #{critic_forward.6} parent=1 // pred_fallthru
      _
    // Predicated region
    $region42: #{critic_forward.6} parent=1 // pred_check
      _
    $region43: #{critic_forward.6} parent=1 // pred_check_branch
      %572 = sbr.rel (0) target = $region45
    $region44: #{critic_forward.6} parent=1 // pred_region
      %s574 = ssub.s32 1024, 1024
      %575 = vsyncadd [#allocation6], %s574
      %s576 = sshll.u32 [#allocation12], 4
      %s577 = int_to_ptr.vmem [resolvable:$true] %s576
      %582 = dma.vmem_to_hbm [thread:$0]  %s577, 1024, %s4, [#allocation6], 64, 64, 4
    $region45: #{critic_forward.6} parent=1 // pred_fallthru
      _
    // Predicated region
    $region46: #{critic_forward.6} parent=1 // pred_check
      _
    $region47: #{critic_forward.6} parent=1 // pred_check_branch
      %584 = sbr.rel (0) target = $region49
    $region48: #{critic_forward.6} parent=1 // pred_region
      %585 = dma.done [#allocation6], 1024
    $region49: #{critic_forward.6} parent=1 // pred_fallthru
      _
    %586 = vsyncpa [#allocation5], 1
    %587 = vsyncpa [#allocation8], 1
    %588 = vsyncpa [#allocation11], 1
    %589 = vsyncpa [#allocation6], 1

// kernel: critic_forward.7
$region0: #{critic_forward.7}
  #allocation0 [shape = 'u32[]', space=smem, size = 0x4, offset = 0x4, fixed_abs, tag = 'smem constant byte address 0x4 - core index']
  #allocation1 [shape = 'u32[144,128]{1,0:T(1,128)}', space=vmem, size = 0x12000, scoped, tag = 'internal scratch']
  #allocation2 [shape = 'f32[32,128]{1,0:T(8,128)}', space=vmem, size = 0x4000, scoped, tag = 'scratch operand']
  #allocation3 [shape = 'f32[8,128]{1,0:T(8,128)}', space=vmem, size = 0x1000, scoped, tag = 'scratch operand']
  %s0 = inlined_call_operand.hbm [shape: bf16[32,256], index: 0, kind: input, shape index: {}]
  %s1 = inlined_call_operand.hbm [shape: bf16[256,128], index: 1, kind: input, shape index: {}]
  %s2 = inlined_call_operand.hbm [shape: f32[1,128], index: 2, kind: input, shape index: {}]
  %s3 = inlined_call_operand.hbm [shape: f32[1,128], index: 3, kind: input, shape index: {}]
  %s4 = inlined_call_operand.hbm [shape: bf16[32,128], index: 4, kind: output, shape index: {}]
  %s5 = sld [smem:[#allocation0]]
  $region50: #{critic_forward.7} parent=0
    _
  %s7 = ssub.s32 1, %s5
  %s8 = scalar_select 0, %s7, %s5
  $region1: #{critic_forward.7} parent=0
    #allocation4 [shape = 'u8[16384]{0}', space=vmem, size = 0x4000, scoped, tag = 'input window, operand 0, single buffered']
    #allocation5 [shape = 's32[1]{0}', space=sflag, size = 0x4, scoped, tag = 'scoped memory for critic_forward.7']
    #allocation6 [shape = 's32[1]{0}', space=sflag, size = 0x4, scoped, tag = 'scoped memory for critic_forward.7']
    #allocation7 [shape = 'u8[65536]{0}', space=vmem, size = 0x10000, scoped, tag = 'input window, operand 1, single buffered']
    #allocation8 [shape = 's32[1]{0}', space=sflag, size = 0x4, scoped, tag = 'scoped memory for critic_forward.7']
    #allocation9 [shape = 'u8[512]{0}', space=vmem, size = 0x400, scoped, tag = 'input window, operand 2, single buffered']
    #allocation10 [shape = 'u8[512]{0}', space=vmem, size = 0x400, scoped, tag = 'input window, operand 3, single buffered']
    #allocation11 [shape = 's32[1]{0}', space=sflag, size = 0x4, scoped, tag = 'scoped memory for critic_forward.7']
    #allocation12 [shape = 'u8[8192]{0}', space=vmem, size = 0x2000, scoped, tag = 'output window, operand 0, single buffered']
    %9 = vsyncpa [#allocation5], 0
    %10 = vsyncpa [#allocation8], 0
    %11 = vsyncpa [#allocation11], 0
    %12 = vsyncpa [#allocation6], 0
    // Predicated region
    $region2: #{critic_forward.7} parent=1 // pred_check
      _
    $region3: #{critic_forward.7} parent=1 // pred_check_branch
      %14 = sbr.rel (0) target = $region5
    $region4: #{critic_forward.7} parent=1 // pred_region
      %s16 = ssub.s32 512, 512
      %17 = vsyncadd [#allocation5], %s16
      %s18 = sshll.u32 [#allocation4], 4
      %s19 = int_to_ptr.vmem [resolvable:$true] %s18
      %24 = dma.hbm_to_vmem [thread:$0]  %s0, 512, %s19, [#allocation5], 128, 128, 8
    $region5: #{critic_forward.7} parent=1 // pred_fallthru
      _
    // Predicated region
    $region6: #{critic_forward.7} parent=1 // pred_check
      _
    $region7: #{critic_forward.7} parent=1 // pred_check_branch
      %26 = sbr.rel (0) target = $region9
    $region8: #{critic_forward.7} parent=1 // pred_region
      %s28 = ssub.s32 2048, 2048
      %29 = vsyncadd [#allocation8], %s28
      %s30 = sshll.u32 [#allocation7], 4
      %s31 = int_to_ptr.vmem [resolvable:$true] %s30
      %36 = dma.hbm_to_vmem [thread:$0]  %s1, 2048, %s31, [#allocation8], 64, 64, 4
    $region9: #{critic_forward.7} parent=1 // pred_fallthru
      _
    // Predicated region
    $region10: #{critic_forward.7} parent=1 // pred_check
      _
    $region11: #{critic_forward.7} parent=1 // pred_check_branch
      %38 = sbr.rel (0) target = $region13
    $region12: #{critic_forward.7} parent=1 // pred_region
      %s40 = ssub.s32 16, 16
      %41 = vsyncadd [#allocation8], %s40
      %s43 = sshll.u32 [#allocation9], 4
      %s44 = int_to_ptr.vmem [resolvable:$true] %s43
      %46 = dma.hbm_to_vmem [thread:$0]  %s2, 16, %s44, [#allocation8]
    $region13: #{critic_forward.7} parent=1 // pred_fallthru
      _
    // Predicated region
    $region14: #{critic_forward.7} parent=1 // pred_check
      _
    $region15: #{critic_forward.7} parent=1 // pred_check_branch
      %48 = sbr.rel (0) target = $region17
    $region16: #{critic_forward.7} parent=1 // pred_region
      %s50 = ssub.s32 16, 16
      %51 = vsyncadd [#allocation11], %s50
      %s53 = sshll.u32 [#allocation10], 4
      %s54 = int_to_ptr.vmem [resolvable:$true] %s53
      %56 = dma.hbm_to_vmem [thread:$0]  %s3, 16, %s54, [#allocation11]
    $region17: #{critic_forward.7} parent=1 // pred_fallthru
      _
    // Predicated region
    $region18: #{critic_forward.7} parent=1 // pred_check
      _
    $region19: #{critic_forward.7} parent=1 // pred_check_branch
      %58 = sbr.rel (0) target = $region21
    $region20: #{critic_forward.7} parent=1 // pred_region
      %59 = dma.done [#allocation5], 512
    $region21: #{critic_forward.7} parent=1 // pred_fallthru
      _
    // Predicated region
    $region22: #{critic_forward.7} parent=1 // pred_check
      _
    $region23: #{critic_forward.7} parent=1 // pred_check_branch
      %61 = sbr.rel (0) target = $region25
    $region24: #{critic_forward.7} parent=1 // pred_region
      %62 = dma.done [#allocation8], 2048
    $region25: #{critic_forward.7} parent=1 // pred_fallthru
      _
    // Predicated region
    $region26: #{critic_forward.7} parent=1 // pred_check
      _
    $region27: #{critic_forward.7} parent=1 // pred_check_branch
      %64 = sbr.rel (0) target = $region29
    $region28: #{critic_forward.7} parent=1 // pred_region
      %65 = dma.done [#allocation8], 16
    $region29: #{critic_forward.7} parent=1 // pred_fallthru
      _
    // Predicated region
    $region30: #{critic_forward.7} parent=1 // pred_check
      _
    $region31: #{critic_forward.7} parent=1 // pred_check_branch
      %67 = sbr.rel (0) target = $region33
    $region32: #{critic_forward.7} parent=1 // pred_region
      %68 = dma.done [#allocation11], 16
    $region33: #{critic_forward.7} parent=1 // pred_fallthru
      _
    %p70 = scmp.eq.s32.totalorder 0, 0
    // Predicated region
    $region34: #{critic_forward.7} parent=1 // pred_check
      %p71 = pneg %p70
    $region35: #{critic_forward.7} parent=1 // pred_check_branch
      %73 = sbr.rel (%p71) target = $region37
    $region36: #{critic_forward.7} parent=1 // pred_region
      %74 = vst [vmem:[#allocation3] sm:$0xff] 0.0
    $region37: #{critic_forward.7} parent=1 // pred_fallthru
      _
    %v75 = vld [vmem:[#allocation4] sm:$0xff]
    %v76 = vld [vmem:[#allocation4 + $0x8] sm:$0xff]
    %v77 = vld [vmem:[#allocation4 + $0x10] sm:$0xff]
    %v78 = vld [vmem:[#allocation4 + $0x18] sm:$0xff]
    %v79 = vld [vmem:[#allocation7] sm:$0xf]
    %v80 = vld [vmem:[#allocation7 + $0x4] sm:$0xf]
    %v81 = vld [vmem:[#allocation7 + $0x8] sm:$0xf]
    %v82 = vld [vmem:[#allocation7 + $0xc] sm:$0xf]
    %v83 = vld [vmem:[#allocation7 + $0x10] sm:$0xf]
    %v84 = vld [vmem:[#allocation7 + $0x14] sm:$0xf]
    %v85 = vld [vmem:[#allocation7 + $0x18] sm:$0xf]
    %v86 = vld [vmem:[#allocation7 + $0x1c] sm:$0xf]
    %v87 = vld [vmem:[#allocation7 + $0x20] sm:$0xf]
    %v88 = vld [vmem:[#allocation7 + $0x24] sm:$0xf]
    %v89 = vld [vmem:[#allocation7 + $0x28] sm:$0xf]
    %v90 = vld [vmem:[#allocation7 + $0x2c] sm:$0xf]
    %v91 = vld [vmem:[#allocation7 + $0x30] sm:$0xf]
    %v92 = vld [vmem:[#allocation7 + $0x34] sm:$0xf]
    %v93 = vld [vmem:[#allocation7 + $0x38] sm:$0xf]
    %v94 = vld [vmem:[#allocation7 + $0x3c] sm:$0xf]
    %v95 = vld [vmem:[#allocation7 + $0x40] sm:$0xf]
    %v96 = vld [vmem:[#allocation7 + $0x44] sm:$0xf]
    %v97 = vld [vmem:[#allocation7 + $0x48] sm:$0xf]
    %v98 = vld [vmem:[#allocation7 + $0x4c] sm:$0xf]
    %v99 = vld [vmem:[#allocation7 + $0x50] sm:$0xf]
    %v100 = vld [vmem:[#allocation7 + $0x54] sm:$0xf]
    %v101 = vld [vmem:[#allocation7 + $0x58] sm:$0xf]
    %v102 = vld [vmem:[#allocation7 + $0x5c] sm:$0xf]
    %v103 = vld [vmem:[#allocation7 + $0x60] sm:$0xf]
    %v104 = vld [vmem:[#allocation7 + $0x64] sm:$0xf]
    %v105 = vld [vmem:[#allocation7 + $0x68] sm:$0xf]
    %v106 = vld [vmem:[#allocation7 + $0x6c] sm:$0xf]
    %v107 = vld [vmem:[#allocation7 + $0x70] sm:$0xf]
    %v108 = vld [vmem:[#allocation7 + $0x74] sm:$0xf]
    %v109 = vld [vmem:[#allocation7 + $0x78] sm:$0xf]
    %v110 = vld [vmem:[#allocation7 + $0x7c] sm:$0xf]
    %v115 = vunpack.c.l.b16 %v75
    %v116 = vunpack.c.h.b16 %v75
    %v117 = vunpack.c.l.b16 %v76
    %v118 = vunpack.c.h.b16 %v76
    %v119 = vunpack.c.l.b16 %v77
    %v120 = vunpack.c.h.b16 %v77
    %v121 = vunpack.c.l.b16 %v78
    %v122 = vunpack.c.h.b16 %v78
    %v123 = vpack.c.b16 %v117, %v115
    %v124 = vpack.c.b16 %v118, %v116
    %v125 = vpack.c.b16 %v121, %v119
    %v126 = vpack.c.b16 %v122, %v120
    %v163 = vunpack.c.l.b16 %v79
    %v164 = vunpack.c.l.b16 %v80
    %v165 = vunpack.c.l.b16 %v81
    %v166 = vunpack.c.l.b16 %v82
    %v167 = vunpack.c.l.b16 %v83
    %v168 = vunpack.c.l.b16 %v84
    %v169 = vunpack.c.l.b16 %v85
    %v170 = vunpack.c.l.b16 %v86
    %v171 = vunpack.c.l.b16 %v87
    %v172 = vunpack.c.l.b16 %v88
    %v173 = vunpack.c.l.b16 %v89
    %v174 = vunpack.c.l.b16 %v90
    %v175 = vunpack.c.l.b16 %v91
    %v176 = vunpack.c.l.b16 %v92
    %v177 = vunpack.c.l.b16 %v93
    %v178 = vunpack.c.l.b16 %v94
    %v179 = vunpack.c.l.b16 %v95
    %v180 = vunpack.c.l.b16 %v96
    %v181 = vunpack.c.l.b16 %v97
    %v182 = vunpack.c.l.b16 %v98
    %v183 = vunpack.c.l.b16 %v99
    %v184 = vunpack.c.l.b16 %v100
    %v185 = vunpack.c.l.b16 %v101
    %v186 = vunpack.c.l.b16 %v102
    %v187 = vunpack.c.l.b16 %v103
    %v188 = vunpack.c.l.b16 %v104
    %v189 = vunpack.c.l.b16 %v105
    %v190 = vunpack.c.l.b16 %v106
    %v191 = vunpack.c.l.b16 %v107
    %v192 = vunpack.c.l.b16 %v108
    %v193 = vunpack.c.l.b16 %v109
    %v194 = vunpack.c.l.b16 %v110
    %v195 = vpack.c.b16 %v164, %v163
    %v196 = vpack.c.b16 %v166, %v165
    %v197 = vpack.c.b16 %v168, %v167
    %v198 = vpack.c.b16 %v170, %v169
    %v199 = vpack.c.b16 %v172, %v171
    %v200 = vpack.c.b16 %v174, %v173
    %v201 = vpack.c.b16 %v176, %v175
    %v202 = vpack.c.b16 %v178, %v177
    %v203 = vpack.c.b16 %v180, %v179
    %v204 = vpack.c.b16 %v182, %v181
    %v205 = vpack.c.b16 %v184, %v183
    %v206 = vpack.c.b16 %v186, %v185
    %v207 = vpack.c.b16 %v188, %v187
    %v208 = vpack.c.b16 %v190, %v189
    %v209 = vpack.c.b16 %v192, %v191
    %v210 = vpack.c.b16 %v194, %v193
    %227 = vmatprep.subr.bf16.mxu0 0
    %228 = vmatpush1.bf16.msra.mxu0 %v195
    %229 = vmatprep.subr.bf16.mxu0 0
    %230 = vmatpush1.bf16.msra.mxu0 %v196
    %231 = vmatprep.subr.bf16.mxu0 0
    %232 = vmatpush1.bf16.msra.mxu0 %v197
    %233 = vmatprep.subr.bf16.mxu0 0
    %234 = vmatpush1.bf16.msra.mxu0 %v198
    %235 = vmatprep.subr.bf16.mxu0 0
    %236 = vmatpush1.bf16.msra.mxu0 %v199
    %237 = vmatprep.subr.bf16.mxu0 0
    %238 = vmatpush1.bf16.msra.mxu0 %v200
    %239 = vmatprep.subr.bf16.mxu0 0
    %240 = vmatpush1.bf16.msra.mxu0 %v201
    %241 = vmatprep.subr.bf16.mxu0 0
    %242 = vmatpush1.bf16.msra.mxu0 %v202
    %243 = vmatprep.subr.bf16.mxu0 0
    %244 = vmatpush1.bf16.msra.mxu0 %v203
    %245 = vmatprep.subr.bf16.mxu0 0
    %246 = vmatpush1.bf16.msra.mxu0 %v204
    %247 = vmatprep.subr.bf16.mxu0 0
    %248 = vmatpush1.bf16.msra.mxu0 %v205
    %249 = vmatprep.subr.bf16.mxu0 0
    %250 = vmatpush1.bf16.msra.mxu0 %v206
    %251 = vmatprep.subr.bf16.mxu0 0
    %252 = vmatpush1.bf16.msra.mxu0 %v207
    %253 = vmatprep.subr.bf16.mxu0 0
    %254 = vmatpush1.bf16.msra.mxu0 %v208
    %255 = vmatprep.subr.bf16.mxu0 0
    %256 = vmatpush1.bf16.msra.mxu0 %v209
    %257 = vmatprep.subr.bf16.mxu0 0
    %258 = vmatpush1.bf16.msra.mxu0 %v210
    %259 = vmatprep.mubr.bf16.mxu0 %v124
    %260 = vmatmul.mubr.bf16.gmra.mrb[0].mxu0 %v123
    %v261 = vpop.f32.mrb[0].mxu0
    %v262 = vadd.f32 0.0, %v261
    %v263 = vpop.f32.mrb[0].mxu0
    %v264 = vpop.f32.mrb[0].mxu0
    %v265 = vadd.f32 0.0, %v264
    %v266 = vpop.f32.mrb[0].mxu0
    %267 = vmatprep.mubr.bf16.mxu0 %v126
    %268 = vmatmul.mubr.bf16.gmra.mrb[0].mxu0 %v125
    %v269 = vpop.f32.mrb[0].mxu0
    %v270 = vadd.f32 0.0, %v269
    %v271 = vpop.f32.mrb[0].mxu0
    %v272 = vpop.f32.mrb[0].mxu0
    %v273 = vadd.f32 0.0, %v272
    %v274 = vpop.f32.mrb[0].mxu0
    %275 = vdwg.mxu0
    %s276 = smul.u32 0, 32
    %s277 = scalar_lea.vmem [#allocation2], %s276
    %278 = vst [vmem:[%s277] sm:$0xff] %v262
    %279 = vst [vmem:[%s277 + $0x8] sm:$0xff] %v265
    %280 = vst [vmem:[%s277 + $0x10] sm:$0xff] %v270
    %281 = vst [vmem:[%s277 + $0x18] sm:$0xff] %v273
    %v282 = vld [vmem:[#allocation3] sm:$0x1]
    %v283 = vadd.f32 %v262, %v265
    %v284 = vadd.f32 %v283, %v270
    %v285 = vadd.f32 %v284, %v273
    %v286 = vrot.slane %v285, 4
    %v287 = vadd.f32 %v285, %v286
    %v288 = vrot.slane %v287, 2
    %v289 = vadd.f32 %v287, %v288
    %v290 = vrot.slane %v289, 1
    %v291 = vadd.f32 %v289, %v290
    %v292 = vadd.f32 %v282, %v291
    %293 = vst [vmem:[#allocation3] sm:$0x1] %v292
    %v294 = vld [vmem:[#allocation3 + $0x1] sm:$0x1]
    %v295 = vmul.f32 %v262, %v262
    %v296 = vmul.f32 %v265, %v265
    %v297 = vmul.f32 %v270, %v270
    %v298 = vmul.f32 %v273, %v273
    %v299 = vadd.f32 %v295, %v296
    %v300 = vadd.f32 %v299, %v297
    %v301 = vadd.f32 %v300, %v298
    %v302 = vrot.slane %v301, 4
    %v303 = vadd.f32 %v301, %v302
    %v304 = vrot.slane %v303, 2
    %v305 = vadd.f32 %v303, %v304
    %v306 = vrot.slane %v305, 1
    %v307 = vadd.f32 %v305, %v306
    %v308 = vadd.f32 %v294, %v307
    %309 = vst [vmem:[#allocation3 + $0x1] sm:$0x1] %v308
    // Predicated region
    $region38: #{critic_forward.7} parent=1 // pred_check
      %p310 = pneg %p70
    $region39: #{critic_forward.7} parent=1 // pred_check_branch
      %312 = sbr.rel (%p310) target = $region41
    $region40: #{critic_forward.7} parent=1 // pred_region
      %v313 = vld [vmem:[#allocation3] sm:$0x1]
      %v314 = vmul.f32 %v313, 0.03125
      %v315 = vld [vmem:[#allocation3 + $0x1] sm:$0x1]
      %v316 = vmul.f32 %v315, 0.03125
      %v317 = vmul.f32 %v314, %v314
      %v318 = vsub.f32 %v316, %v317
      %v319 = vmax.f32 %v318, 0.0
      %v320 = vld [vmem:[#allocation9] sm:$0x1]
      %v321 = vadd.f32 %v319, 1e-05
      %v322 = vrsqrt.pop %v321
      %v323 = vmul.f32 %v320, %v322
      %v324 = vld [vmem:[#allocation10] sm:$0x1]
      %v325 = vmul.f32 %v314, %v323
      %v326 = vsub.f32 %v324, %v325
      %v327 = vld [vmem:[#allocation2] sm:$0xff]
      %v328 = vld [vmem:[#allocation2 + $0x8] sm:$0xff]
      %v329 = vld [vmem:[#allocation2 + $0x10] sm:$0xff]
      %v330 = vld [vmem:[#allocation2 + $0x18] sm:$0xff]
      %v332 = vlaneseq
      %v333 = vshrl.u32 %v332, 7
      %v334 = vsub.s32 0, %v333
      %v335 = vrot.slane %v323, %v334
      %v337 = vmul.f32 %v327, %v335
      %v338 = vmul.f32 %v328, %v335
      %v339 = vmul.f32 %v329, %v335
      %v340 = vmul.f32 %v330, %v335
      %v342 = vlaneseq
      %v343 = vshrl.u32 %v342, 7
      %v344 = vsub.s32 0, %v343
      %v345 = vrot.slane %v326, %v344
      %v347 = vadd.f32 %v337, %v345
      %v348 = vadd.f32 %v338, %v345
      %v349 = vadd.f32 %v339, %v345
      %v350 = vadd.f32 %v340, %v345
      %v351 = vmul.f32 %v347, 0.2
      %v352 = vmul.f32 %v348, 0.2
      %v353 = vmul.f32 %v349, 0.2
      %v354 = vmul.f32 %v350, 0.2
      %v355 = vmax.f32 %v347, %v351
      %v356 = vmax.f32 %v348, %v352
      %v357 = vmax.f32 %v349, %v353
      %v358 = vmax.f32 %v350, %v354
      %v359 = vpack.c.bf16 %v356, %v355
      %v360 = vpack.c.bf16 %v358, %v357
      %v363 = vunpack.c.l.b16 %v359
      %v364 = vunpack.c.h.b16 %v359
      %v365 = vunpack.c.l.b16 %v360
      %v366 = vunpack.c.h.b16 %v360
      %v367 = vpack.c.b16 %v363, %v363
      %v368 = vpack.c.b16 %v364, %v364
      %v369 = vpack.c.b16 %v365, %v365
      %v370 = vpack.c.b16 %v366, %v366
      %375 = vst [vmem:[#allocation12] sm:$0xf] %v367
      %376 = vst [vmem:[#allocation12 + $0x4] sm:$0xf] %v368
      %377 = vst [vmem:[#allocation12 + $0x8] sm:$0xf] %v369
      %378 = vst [vmem:[#allocation12 + $0xc] sm:$0xf] %v370
    $region41: #{critic_forward.7} parent=1 // pred_fallthru
      _
    // Predicated region
    $region42: #{critic_forward.7} parent=1 // pred_check
      _
    $region43: #{critic_forward.7} parent=1 // pred_check_branch
      %380 = sbr.rel (0) target = $region45
    $region44: #{critic_forward.7} parent=1 // pred_region
      %s382 = ssub.s32 256, 256
      %383 = vsyncadd [#allocation6], %s382
      %s384 = sshll.u32 [#allocation12], 4
      %s385 = int_to_ptr.vmem [resolvable:$true] %s384
      %390 = dma.vmem_to_hbm [thread:$0]  %s385, 256, %s4, [#allocation6], 64, 64, 4
    $region45: #{critic_forward.7} parent=1 // pred_fallthru
      _
    // Predicated region
    $region46: #{critic_forward.7} parent=1 // pred_check
      _
    $region47: #{critic_forward.7} parent=1 // pred_check_branch
      %392 = sbr.rel (0) target = $region49
    $region48: #{critic_forward.7} parent=1 // pred_region
      %393 = dma.done [#allocation6], 256
    $region49: #{critic_forward.7} parent=1 // pred_fallthru
      _
    %394 = vsyncpa [#allocation5], 1
    %395 = vsyncpa [#allocation8], 1
    %396 = vsyncpa [#allocation11], 1
    %397 = vsyncpa [#allocation6], 1

</llo_original>
